<compile_context>
chip_gen: v6e
topology: v6e:2x2x1
jax: 0.10.0
libtpu: 0.0.40
codegen_flags: <defaults>
</compile_context>

<pallas_src>
import functools

import jax
import jax.numpy as jnp
from jax import lax
from jax.experimental import pallas as pl
from jax.experimental.pallas import tpu as pltpu

REFS_PER_LAYER = 3  # W_ih_fused (D,4H), W_hh_fused (H,4H), bias_fused (1,4H)
SUBLANE = 8


# ------------------------------ Fused kernel ----------------------------------
def fused_lstm_fc_kernel(*refs, num_layers, hidden_size, seq_len, batch_pad):
    """All LSTM layers + FC + sigmoid in one kernel.

    refs layout (inputs, then outputs, then scratch):
      x          : (T*Bp, D0)         time-major flattened padded input (row = t*Bp + b)
      per layer  : W_ih (D_l, 4H), W_hh (H, 4H), bias (1, 4H)   gate order [i,f,g,o]
      fc_w       : (H, OUT_PAD)       zero-padded to lane-dense width
      fc_b       : (1, OUT_PAD)
      out        : (T*Bp, OUT_PAD)
      h_n, c_n   : (L, Bp, H)
      gx_sc      : (T*Bp, 4H)         scratch: hoisted gate-fused input projection
      y_sc       : (T*Bp, H)          scratch: per-step hidden (inter-layer activation)
    """
    H, T, Bp = hidden_size, seq_len, batch_pad

    x_ref = refs[0]
    pos = 1 + num_layers * REFS_PER_LAYER
    fc_w_ref = refs[pos]
    fc_b_ref = refs[pos + 1]
    out_ref = refs[pos + 2]
    hn_ref = refs[pos + 3]
    cn_ref = refs[pos + 4]
    gx_sc = refs[pos + 5]
    y_sc = refs[pos + 6]

    for l in range(num_layers):
        base = 1 + l * REFS_PER_LAYER
        w_ih_ref = refs[base]
        w_hh_ref = refs[base + 1]
        b_ref = refs[base + 2]

        # Hoisted, gate-fused input projection over the whole sequence:
        # one (T*Bp, D) @ (D, 4H) matmul, one lane-dense (4H = 128) store.
        src = x_ref if l == 0 else y_sc
        gx_sc[...] = (jnp.dot(src[...], w_ih_ref[...],
                              preferred_element_type=jnp.float32) + b_ref[...])

        def step(t, carry):
            h, c = carry
            row0 = pl.multiple_of(t * Bp, Bp)          # sublane-aligned row offset
            gx = gx_sc[pl.ds(row0, Bp), :]             # (Bp, 4H) aligned vreg load
            # Single fused recurrent matmul per step; RHS read from VMEM (loop-invariant).
            pre = gx + jnp.dot(h, w_hh_ref[...],
                               preferred_element_type=jnp.float32)   # (Bp, 4H)
            i_g = jax.nn.sigmoid(pre[:, 0 * H:1 * H])
            f_g = jax.nn.sigmoid(pre[:, 1 * H:2 * H])
            g_g = jnp.tanh(pre[:, 2 * H:3 * H])
            o_g = jax.nn.sigmoid(pre[:, 3 * H:4 * H])
            c = f_g * c + i_g * g_g
            h = o_g * jnp.tanh(c)
            y_sc[pl.ds(row0, Bp), :] = h               # aligned per-step store
            return h, c

        h0 = jnp.zeros((Bp, H), jnp.float32)
        c0 = jnp.zeros((Bp, H), jnp.float32)
        h, c = lax.fori_loop(0, T, step, (h0, c0), unroll=True)

        hn_ref[l] = h                                   # final states written once
        cn_ref[l] = c

    # Fused FC + sigmoid, lane-dense (zero-padded) output.
    z = jnp.dot(y_sc[...], fc_w_ref[...], preferred_element_type=jnp.float32) + fc_b_ref[...]
    out_ref[...] = jax.nn.sigmoid(z)


# ------------------------------ Full forward ----------------------------------
def simple_lstm_forward(x, params, num_layers, hidden_size):
    """x: (B, T, input_size). Returns (out, (h_n, c_n)) matching the PyTorch module."""
    B, T, D_in = x.shape
    H = hidden_size
    Bp = max(SUBLANE, ((B + SUBLANE - 1) // SUBLANE) * SUBLANE)   # sublane-padded batch
    out_pad = max(128, ((D_in + 127) // 128) * 128)               # lane-dense FC output width

    # Pad batch to Bp, go time-major, flatten rows: row index = t*Bp + b.
    x_pad = jnp.zeros((Bp, T, D_in), jnp.float32).at[:B].set(x.astype(jnp.float32))
    x_flat = jnp.transpose(x_pad, (1, 0, 2)).reshape(T * Bp, D_in)

    inputs = [x_flat]
    for l in range(num_layers):
        w_ih = params[f"wih_{l}"]                                  # (4H, D_l) [i,f,g,o] stacked
        w_hh = params[f"whh_{l}"]                                  # (4H, H)
        b = params[f"bih_{l}"] + params[f"bhh_{l}"]                # (4H,)
        inputs += [w_ih.T.astype(jnp.float32),                     # (D_l, 4H) gate-fused
                   w_hh.T.astype(jnp.float32),                     # (H, 4H)   gate-fused
                   b.reshape(1, 4 * H).astype(jnp.float32)]        # (1, 4H)

    fc_w_pad = jnp.zeros((H, out_pad), jnp.float32).at[:, :D_in].set(params["fc_w"].T)
    fc_b_pad = jnp.zeros((1, out_pad), jnp.float32).at[:, :D_in].set(params["fc_b"])
    inputs += [fc_w_pad, fc_b_pad]

    kernel = functools.partial(fused_lstm_fc_kernel, num_layers=num_layers,
                               hidden_size=H, seq_len=T, batch_pad=Bp)
    vmem = pl.BlockSpec(memory_space=pltpu.MemorySpace.VMEM)
    out_flat, h_n, c_n = pl.pallas_call(
        kernel,
        out_shape=(jax.ShapeDtypeStruct((T * Bp, out_pad), jnp.float32),
                   jax.ShapeDtypeStruct((num_layers, Bp, H), jnp.float32),
                   jax.ShapeDtypeStruct((num_layers, Bp, H), jnp.float32)),
        in_specs=[vmem] * len(inputs),
        out_specs=(vmem, vmem, vmem),
        scratch_shapes=[pltpu.VMEM((T * Bp, 4 * H), jnp.float32),
                        pltpu.VMEM((T * Bp, H), jnp.float32)],
        compiler_params=pltpu.CompilerParams(vmem_limit_bytes=64 << 20),
    )(*inputs)

    # Slice off batch / lane padding.
    out = out_flat.reshape(T, Bp, out_pad)[:, :B, :D_in].transpose(1, 0, 2)   # (B, T, D_in)
    return out, (h_n[:, :B, :], c_n[:, :B, :])


# ------------------------------ Pure-JAX reference ----------------------------
def reference_forward(x, params, num_layers, hidden_size):
    B, T, D_in = x.shape
    layer_in = x
    h_list, c_list = [], []
    for l in range(num_layers):
        wih = params[f"wih_{l}"]
        whh = params[f"whh_{l}"]
        b = params[f"bih_{l}"] + params[f"bhh_{l}"]
        h = jnp.zeros((B, hidden_size), jnp.float32)
        c = jnp.zeros((B, hidden_size), jnp.float32)
        ys = []
        for t in range(T):
            g = layer_in[:, t, :] @ wih.T + h @ whh.T + b
            H = hidden_size
            i_g = jax.nn.sigmoid(g[:, :H])
            f_g = jax.nn.sigmoid(g[:, H:2 * H])
            g_g = jnp.tanh(g[:, 2 * H:3 * H])
            o_g = jax.nn.sigmoid(g[:, 3 * H:])
            c = f_g * c + i_g * g_g
            h = o_g * jnp.tanh(c)
            ys.append(h)
        layer_in = jnp.stack(ys, axis=1)
        h_list.append(h)
        c_list.append(c)
    out = jax.nn.sigmoid(layer_in @ params["fc_w"].T + params["fc_b"])
    return out, (jnp.stack(h_list), jnp.stack(c_list))


# ----------------------------------- Main --------------------------------------
if __name__ == "__main__":
    input_size, hidden_size, num_layers = 8, 32, 2
    B, T = 2, 8

    key = jax.random.PRNGKey(0)
    keys = jax.random.split(key, 4 * num_layers + 3)

    params = {}
    k_idx = 0
    scale = 1.0 / jnp.sqrt(hidden_size)
    for l in range(num_layers):
        d_in = input_size if l == 0 else hidden_size
        params[f"wih_{l}"] = scale * jax.random.normal(keys[k_idx], (4 * hidden_size, d_in), jnp.float32); k_idx += 1
        params[f"whh_{l}"] = scale * jax.random.normal(keys[k_idx], (4 * hidden_size, hidden_size), jnp.float32); k_idx += 1
        params[f"bih_{l}"] = scale * jax.random.normal(keys[k_idx], (4 * hidden_size,), jnp.float32); k_idx += 1
        params[f"bhh_{l}"] = scale * jax.random.normal(keys[k_idx], (4 * hidden_size,), jnp.float32); k_idx += 1
    params["fc_w"] = scale * jax.random.normal(keys[k_idx], (input_size, hidden_size), jnp.float32); k_idx += 1
    params["fc_b"] = scale * jax.random.normal(keys[k_idx], (input_size,), jnp.float32); k_idx += 1

    x = jax.random.normal(keys[k_idx], (B, T, input_size), jnp.float32)

    out, (h_n, c_n) = simple_lstm_forward(x, params, num_layers, hidden_size)
    jax.block_until_ready((out, h_n, c_n))

    ref_out, (ref_h, ref_c) = reference_forward(x, params, num_layers, hidden_size)
    assert out.shape == (B, T, input_size)
    assert h_n.shape == (num_layers, B, hidden_size)
    assert c_n.shape == (num_layers, B, hidden_size)
    assert jnp.allclose(out, ref_out, atol=1e-5), "output mismatch"
    assert jnp.allclose(h_n, ref_h, atol=1e-5), "h_n mismatch"
    assert jnp.allclose(c_n, ref_c, atol=1e-5), "c_n mismatch"

    print("KERNEL_OK")
</pallas_src>

<mosaic_0001>
module attributes {stable_mosaic.version = 11 : i64} {
  func.func @fused_lstm_fc_kernel(%arg0: memref<64x8xf32, #tpu.memory_space<vmem>>, %arg1: memref<8x128xf32, #tpu.memory_space<vmem>>, %arg2: memref<32x128xf32, #tpu.memory_space<vmem>>, %arg3: memref<1x128xf32, #tpu.memory_space<vmem>>, %arg4: memref<32x128xf32, #tpu.memory_space<vmem>>, %arg5: memref<32x128xf32, #tpu.memory_space<vmem>>, %arg6: memref<1x128xf32, #tpu.memory_space<vmem>>, %arg7: memref<32x128xf32, #tpu.memory_space<vmem>>, %arg8: memref<1x128xf32, #tpu.memory_space<vmem>>, %arg9: memref<64x128xf32, #tpu.memory_space<vmem>>, %arg10: memref<2x8x32xf32, #tpu.memory_space<vmem>>, %arg11: memref<2x8x32xf32, #tpu.memory_space<vmem>>, %arg12: memref<64x128xf32, #tpu.memory_space<vmem>>, %arg13: memref<64x32xf32, #tpu.memory_space<vmem>>) attributes {dimension_semantics = [], scalar_prefetch = 0 : i64, scratch_operands = 2 : i64, tpu.core_type = #tpu.core_type<tc>} {
    %c0 = arith.constant 0 : index
    %c0_0 = arith.constant 0 : index
    %0 = vector.load %arg0[%c0, %c0_0] : memref<64x8xf32, #tpu.memory_space<vmem>>, vector<64x8xf32>
    %c0_1 = arith.constant 0 : index
    %c0_2 = arith.constant 0 : index
    %1 = vector.load %arg1[%c0_1, %c0_2] : memref<8x128xf32, #tpu.memory_space<vmem>>, vector<8x128xf32>
    %cst = arith.constant dense<0.000000e+00> : vector<64x128xf32>
    %2 = tpu.matmul %0, %1, %cst {dimension_numbers = #tpu.dot_dimension_numbers<[1], [0], [0], [1], [0, 0, 1, 1], [], []>} : vector<64x8xf32>, vector<8x128xf32>, vector<64x128xf32> -> vector<64x128xf32>
    %c0_3 = arith.constant 0 : index
    %c0_4 = arith.constant 0 : index
    %3 = vector.load %arg3[%c0_3, %c0_4] : memref<1x128xf32, #tpu.memory_space<vmem>>, vector<1x128xf32>
    %4 = vector.broadcast %3 : vector<1x128xf32> to vector<64x128xf32>
    %5 = arith.addf %2, %4 : vector<64x128xf32>
    %c0_5 = arith.constant 0 : index
    %c0_6 = arith.constant 0 : index
    %6 = vector.load %arg12[%c0_5, %c0_6] : memref<64x128xf32, #tpu.memory_space<vmem>>, vector<64x128xf32>
    tpu.vector_store %arg12[%c0_5, %c0_6], %5 {strides = array<i32>} : memref<64x128xf32, #tpu.memory_space<vmem>>, vector<64x128xf32>,
    %cst_7 = arith.constant 0.000000e+00 : f32
    %7 = vector.broadcast %cst_7 : f32 to vector<8x32xf32>
    %cst_8 = arith.constant 0.000000e+00 : f32
    %8 = vector.broadcast %cst_8 : f32 to vector<8x32xf32>
    %c0_i32 = arith.constant 0 : i32
    %c8_i32 = arith.constant 8 : i32
    %9 = arith.muli %c0_i32, %c8_i32 : i32
    %10 = tpu.assume_multiple %9, 8 : i32
    %11 = arith.index_cast %10 : i32 to index
    %c0_9 = arith.constant 0 : index
    %12 = vector.load %arg12[%11, %c0_9] : memref<64x128xf32, #tpu.memory_space<vmem>>, vector<8x128xf32>
    %c0_10 = arith.constant 0 : index
    %c0_11 = arith.constant 0 : index
    %13 = vector.load %arg2[%c0_10, %c0_11] : memref<32x128xf32, #tpu.memory_space<vmem>>, vector<32x128xf32>
    %cst_12 = arith.constant dense<0.000000e+00> : vector<8x128xf32>
    %14 = tpu.matmul %7, %13, %cst_12 {dimension_numbers = #tpu.dot_dimension_numbers<[1], [0], [0], [1], [0, 0, 1, 1], [], []>} : vector<8x32xf32>, vector<32x128xf32>, vector<8x128xf32> -> vector<8x128xf32>
    %15 = arith.addf %12, %14 : vector<8x128xf32>
    %16 = vector.extract_strided_slice %15 {offsets = [0, 0], sizes = [8, 32], strides = [1, 1]} : vector<8x128xf32> to vector<8x32xf32>
    %17 = arith.negf %16 : vector<8x32xf32>
    %18 = math.exp %17 : vector<8x32xf32>
    %cst_13 = arith.constant 1.000000e+00 : f32
    %19 = vector.broadcast %cst_13 : f32 to vector<8x32xf32>
    %20 = arith.addf %19, %18 : vector<8x32xf32>
    %21 = arith.divf %19, %20 : vector<8x32xf32>
    %22 = vector.extract_strided_slice %15 {offsets = [0, 32], sizes = [8, 32], strides = [1, 1]} : vector<8x128xf32> to vector<8x32xf32>
    %23 = arith.negf %22 : vector<8x32xf32>
    %24 = math.exp %23 : vector<8x32xf32>
    %cst_14 = arith.constant 1.000000e+00 : f32
    %25 = vector.broadcast %cst_14 : f32 to vector<8x32xf32>
    %26 = arith.addf %25, %24 : vector<8x32xf32>
    %27 = arith.divf %25, %26 : vector<8x32xf32>
    %28 = vector.extract_strided_slice %15 {offsets = [0, 64], sizes = [8, 32], strides = [1, 1]} : vector<8x128xf32> to vector<8x32xf32>
    %29 = math.tanh %28 : vector<8x32xf32>
    %30 = vector.extract_strided_slice %15 {offsets = [0, 96], sizes = [8, 32], strides = [1, 1]} : vector<8x128xf32> to vector<8x32xf32>
    %31 = arith.negf %30 : vector<8x32xf32>
    %32 = math.exp %31 : vector<8x32xf32>
    %cst_15 = arith.constant 1.000000e+00 : f32
    %33 = vector.broadcast %cst_15 : f32 to vector<8x32xf32>
    %34 = arith.addf %33, %32 : vector<8x32xf32>
    %35 = arith.divf %33, %34 : vector<8x32xf32>
    %36 = arith.mulf %27, %8 : vector<8x32xf32>
    %37 = arith.mulf %21, %29 : vector<8x32xf32>
    %38 = arith.addf %36, %37 : vector<8x32xf32>
    %39 = math.tanh %38 : vector<8x32xf32>
    %40 = arith.mulf %35, %39 : vector<8x32xf32>
    %41 = arith.index_cast %10 : i32 to index
    %c0_16 = arith.constant 0 : index
    %42 = vector.load %arg13[%41, %c0_16] : memref<64x32xf32, #tpu.memory_space<vmem>>, vector<8x32xf32>
    tpu.vector_store %arg13[%41, %c0_16], %40 {strides = array<i32>} : memref<64x32xf32, #tpu.memory_space<vmem>>, vector<8x32xf32>,
    %c1_i32 = arith.constant 1 : i32
    %c8_i32_17 = arith.constant 8 : i32
    %43 = arith.muli %c1_i32, %c8_i32_17 : i32
    %44 = tpu.assume_multiple %43, 8 : i32
    %45 = arith.index_cast %44 : i32 to index
    %c0_18 = arith.constant 0 : index
    %46 = vector.load %arg12[%45, %c0_18] : memref<64x128xf32, #tpu.memory_space<vmem>>, vector<8x128xf32>
    %c0_19 = arith.constant 0 : index
    %c0_20 = arith.constant 0 : index
    %47 = vector.load %arg2[%c0_19, %c0_20] : memref<32x128xf32, #tpu.memory_space<vmem>>, vector<32x128xf32>
    %cst_21 = arith.constant dense<0.000000e+00> : vector<8x128xf32>
    %48 = tpu.matmul %40, %47, %cst_21 {dimension_numbers = #tpu.dot_dimension_numbers<[1], [0], [0], [1], [0, 0, 1, 1], [], []>} : vector<8x32xf32>, vector<32x128xf32>, vector<8x128xf32> -> vector<8x128xf32>
    %49 = arith.addf %46, %48 : vector<8x128xf32>
    %50 = vector.extract_strided_slice %49 {offsets = [0, 0], sizes = [8, 32], strides = [1, 1]} : vector<8x128xf32> to vector<8x32xf32>
    %51 = arith.negf %50 : vector<8x32xf32>
    %52 = math.exp %51 : vector<8x32xf32>
    %cst_22 = arith.constant 1.000000e+00 : f32
    %53 = vector.broadcast %cst_22 : f32 to vector<8x32xf32>
    %54 = arith.addf %53, %52 : vector<8x32xf32>
    %55 = arith.divf %53, %54 : vector<8x32xf32>
    %56 = vector.extract_strided_slice %49 {offsets = [0, 32], sizes = [8, 32], strides = [1, 1]} : vector<8x128xf32> to vector<8x32xf32>
    %57 = arith.negf %56 : vector<8x32xf32>
    %58 = math.exp %57 : vector<8x32xf32>
    %cst_23 = arith.constant 1.000000e+00 : f32
    %59 = vector.broadcast %cst_23 : f32 to vector<8x32xf32>
    %60 = arith.addf %59, %58 : vector<8x32xf32>
    %61 = arith.divf %59, %60 : vector<8x32xf32>
    %62 = vector.extract_strided_slice %49 {offsets = [0, 64], sizes = [8, 32], strides = [1, 1]} : vector<8x128xf32> to vector<8x32xf32>
    %63 = math.tanh %62 : vector<8x32xf32>
    %64 = vector.extract_strided_slice %49 {offsets = [0, 96], sizes = [8, 32], strides = [1, 1]} : vector<8x128xf32> to vector<8x32xf32>
    %65 = arith.negf %64 : vector<8x32xf32>
    %66 = math.exp %65 : vector<8x32xf32>
    %cst_24 = arith.constant 1.000000e+00 : f32
    %67 = vector.broadcast %cst_24 : f32 to vector<8x32xf32>
    %68 = arith.addf %67, %66 : vector<8x32xf32>
    %69 = arith.divf %67, %68 : vector<8x32xf32>
    %70 = arith.mulf %61, %38 : vector<8x32xf32>
    %71 = arith.mulf %55, %63 : vector<8x32xf32>
    %72 = arith.addf %70, %71 : vector<8x32xf32>
    %73 = math.tanh %72 : vector<8x32xf32>
    %74 = arith.mulf %69, %73 : vector<8x32xf32>
    %75 = arith.index_cast %44 : i32 to index
    %c0_25 = arith.constant 0 : index
    %76 = vector.load %arg13[%75, %c0_25] : memref<64x32xf32, #tpu.memory_space<vmem>>, vector<8x32xf32>
    tpu.vector_store %arg13[%75, %c0_25], %74 {strides = array<i32>} : memref<64x32xf32, #tpu.memory_space<vmem>>, vector<8x32xf32>,
    %c2_i32 = arith.constant 2 : i32
    %c8_i32_26 = arith.constant 8 : i32
    %77 = arith.muli %c2_i32, %c8_i32_26 : i32
    %78 = tpu.assume_multiple %77, 8 : i32
    %79 = arith.index_cast %78 : i32 to index
    %c0_27 = arith.constant 0 : index
    %80 = vector.load %arg12[%79, %c0_27] : memref<64x128xf32, #tpu.memory_space<vmem>>, vector<8x128xf32>
    %c0_28 = arith.constant 0 : index
    %c0_29 = arith.constant 0 : index
    %81 = vector.load %arg2[%c0_28, %c0_29] : memref<32x128xf32, #tpu.memory_space<vmem>>, vector<32x128xf32>
    %cst_30 = arith.constant dense<0.000000e+00> : vector<8x128xf32>
    %82 = tpu.matmul %74, %81, %cst_30 {dimension_numbers = #tpu.dot_dimension_numbers<[1], [0], [0], [1], [0, 0, 1, 1], [], []>} : vector<8x32xf32>, vector<32x128xf32>, vector<8x128xf32> -> vector<8x128xf32>
    %83 = arith.addf %80, %82 : vector<8x128xf32>
    %84 = vector.extract_strided_slice %83 {offsets = [0, 0], sizes = [8, 32], strides = [1, 1]} : vector<8x128xf32> to vector<8x32xf32>
    %85 = arith.negf %84 : vector<8x32xf32>
    %86 = math.exp %85 : vector<8x32xf32>
    %cst_31 = arith.constant 1.000000e+00 : f32
    %87 = vector.broadcast %cst_31 : f32 to vector<8x32xf32>
    %88 = arith.addf %87, %86 : vector<8x32xf32>
    %89 = arith.divf %87, %88 : vector<8x32xf32>
    %90 = vector.extract_strided_slice %83 {offsets = [0, 32], sizes = [8, 32], strides = [1, 1]} : vector<8x128xf32> to vector<8x32xf32>
    %91 = arith.negf %90 : vector<8x32xf32>
    %92 = math.exp %91 : vector<8x32xf32>
    %cst_32 = arith.constant 1.000000e+00 : f32
    %93 = vector.broadcast %cst_32 : f32 to vector<8x32xf32>
    %94 = arith.addf %93, %92 : vector<8x32xf32>
    %95 = arith.divf %93, %94 : vector<8x32xf32>
    %96 = vector.extract_strided_slice %83 {offsets = [0, 64], sizes = [8, 32], strides = [1, 1]} : vector<8x128xf32> to vector<8x32xf32>
    %97 = math.tanh %96 : vector<8x32xf32>
    %98 = vector.extract_strided_slice %83 {offsets = [0, 96], sizes = [8, 32], strides = [1, 1]} : vector<8x128xf32> to vector<8x32xf32>
    %99 = arith.negf %98 : vector<8x32xf32>
    %100 = math.exp %99 : vector<8x32xf32>
    %cst_33 = arith.constant 1.000000e+00 : f32
    %101 = vector.broadcast %cst_33 : f32 to vector<8x32xf32>
    %102 = arith.addf %101, %100 : vector<8x32xf32>
    %103 = arith.divf %101, %102 : vector<8x32xf32>
    %104 = arith.mulf %95, %72 : vector<8x32xf32>
    %105 = arith.mulf %89, %97 : vector<8x32xf32>
    %106 = arith.addf %104, %105 : vector<8x32xf32>
    %107 = math.tanh %106 : vector<8x32xf32>
    %108 = arith.mulf %103, %107 : vector<8x32xf32>
    %109 = arith.index_cast %78 : i32 to index
    %c0_34 = arith.constant 0 : index
    %110 = vector.load %arg13[%109, %c0_34] : memref<64x32xf32, #tpu.memory_space<vmem>>, vector<8x32xf32>
    tpu.vector_store %arg13[%109, %c0_34], %108 {strides = array<i32>} : memref<64x32xf32, #tpu.memory_space<vmem>>, vector<8x32xf32>,
    %c3_i32 = arith.constant 3 : i32
    %c8_i32_35 = arith.constant 8 : i32
    %111 = arith.muli %c3_i32, %c8_i32_35 : i32
    %112 = tpu.assume_multiple %111, 8 : i32
    %113 = arith.index_cast %112 : i32 to index
    %c0_36 = arith.constant 0 : index
    %114 = vector.load %arg12[%113, %c0_36] : memref<64x128xf32, #tpu.memory_space<vmem>>, vector<8x128xf32>
    %c0_37 = arith.constant 0 : index
    %c0_38 = arith.constant 0 : index
    %115 = vector.load %arg2[%c0_37, %c0_38] : memref<32x128xf32, #tpu.memory_space<vmem>>, vector<32x128xf32>
    %cst_39 = arith.constant dense<0.000000e+00> : vector<8x128xf32>
    %116 = tpu.matmul %108, %115, %cst_39 {dimension_numbers = #tpu.dot_dimension_numbers<[1], [0], [0], [1], [0, 0, 1, 1], [], []>} : vector<8x32xf32>, vector<32x128xf32>, vector<8x128xf32> -> vector<8x128xf32>
    %117 = arith.addf %114, %116 : vector<8x128xf32>
    %118 = vector.extract_strided_slice %117 {offsets = [0, 0], sizes = [8, 32], strides = [1, 1]} : vector<8x128xf32> to vector<8x32xf32>
    %119 = arith.negf %118 : vector<8x32xf32>
    %120 = math.exp %119 : vector<8x32xf32>
    %cst_40 = arith.constant 1.000000e+00 : f32
    %121 = vector.broadcast %cst_40 : f32 to vector<8x32xf32>
    %122 = arith.addf %121, %120 : vector<8x32xf32>
    %123 = arith.divf %121, %122 : vector<8x32xf32>
    %124 = vector.extract_strided_slice %117 {offsets = [0, 32], sizes = [8, 32], strides = [1, 1]} : vector<8x128xf32> to vector<8x32xf32>
    %125 = arith.negf %124 : vector<8x32xf32>
    %126 = math.exp %125 : vector<8x32xf32>
    %cst_41 = arith.constant 1.000000e+00 : f32
    %127 = vector.broadcast %cst_41 : f32 to vector<8x32xf32>
    %128 = arith.addf %127, %126 : vector<8x32xf32>
    %129 = arith.divf %127, %128 : vector<8x32xf32>
    %130 = vector.extract_strided_slice %117 {offsets = [0, 64], sizes = [8, 32], strides = [1, 1]} : vector<8x128xf32> to vector<8x32xf32>
    %131 = math.tanh %130 : vector<8x32xf32>
    %132 = vector.extract_strided_slice %117 {offsets = [0, 96], sizes = [8, 32], strides = [1, 1]} : vector<8x128xf32> to vector<8x32xf32>
    %133 = arith.negf %132 : vector<8x32xf32>
    %134 = math.exp %133 : vector<8x32xf32>
    %cst_42 = arith.constant 1.000000e+00 : f32
    %135 = vector.broadcast %cst_42 : f32 to vector<8x32xf32>
    %136 = arith.addf %135, %134 : vector<8x32xf32>
    %137 = arith.divf %135, %136 : vector<8x32xf32>
    %138 = arith.mulf %129, %106 : vector<8x32xf32>
    %139 = arith.mulf %123, %131 : vector<8x32xf32>
    %140 = arith.addf %138, %139 : vector<8x32xf32>
    %141 = math.tanh %140 : vector<8x32xf32>
    %142 = arith.mulf %137, %141 : vector<8x32xf32>
    %143 = arith.index_cast %112 : i32 to index
    %c0_43 = arith.constant 0 : index
    %144 = vector.load %arg13[%143, %c0_43] : memref<64x32xf32, #tpu.memory_space<vmem>>, vector<8x32xf32>
    tpu.vector_store %arg13[%143, %c0_43], %142 {strides = array<i32>} : memref<64x32xf32, #tpu.memory_space<vmem>>, vector<8x32xf32>,
    %c4_i32 = arith.constant 4 : i32
    %c8_i32_44 = arith.constant 8 : i32
    %145 = arith.muli %c4_i32, %c8_i32_44 : i32
    %146 = tpu.assume_multiple %145, 8 : i32
    %147 = arith.index_cast %146 : i32 to index
    %c0_45 = arith.constant 0 : index
    %148 = vector.load %arg12[%147, %c0_45] : memref<64x128xf32, #tpu.memory_space<vmem>>, vector<8x128xf32>
    %c0_46 = arith.constant 0 : index
    %c0_47 = arith.constant 0 : index
    %149 = vector.load %arg2[%c0_46, %c0_47] : memref<32x128xf32, #tpu.memory_space<vmem>>, vector<32x128xf32>
    %cst_48 = arith.constant dense<0.000000e+00> : vector<8x128xf32>
    %150 = tpu.matmul %142, %149, %cst_48 {dimension_numbers = #tpu.dot_dimension_numbers<[1], [0], [0], [1], [0, 0, 1, 1], [], []>} : vector<8x32xf32>, vector<32x128xf32>, vector<8x128xf32> -> vector<8x128xf32>
    %151 = arith.addf %148, %150 : vector<8x128xf32>
    %152 = vector.extract_strided_slice %151 {offsets = [0, 0], sizes = [8, 32], strides = [1, 1]} : vector<8x128xf32> to vector<8x32xf32>
    %153 = arith.negf %152 : vector<8x32xf32>
    %154 = math.exp %153 : vector<8x32xf32>
    %cst_49 = arith.constant 1.000000e+00 : f32
    %155 = vector.broadcast %cst_49 : f32 to vector<8x32xf32>
    %156 = arith.addf %155, %154 : vector<8x32xf32>
    %157 = arith.divf %155, %156 : vector<8x32xf32>
    %158 = vector.extract_strided_slice %151 {offsets = [0, 32], sizes = [8, 32], strides = [1, 1]} : vector<8x128xf32> to vector<8x32xf32>
    %159 = arith.negf %158 : vector<8x32xf32>
    %160 = math.exp %159 : vector<8x32xf32>
    %cst_50 = arith.constant 1.000000e+00 : f32
    %161 = vector.broadcast %cst_50 : f32 to vector<8x32xf32>
    %162 = arith.addf %161, %160 : vector<8x32xf32>
    %163 = arith.divf %161, %162 : vector<8x32xf32>
    %164 = vector.extract_strided_slice %151 {offsets = [0, 64], sizes = [8, 32], strides = [1, 1]} : vector<8x128xf32> to vector<8x32xf32>
    %165 = math.tanh %164 : vector<8x32xf32>
    %166 = vector.extract_strided_slice %151 {offsets = [0, 96], sizes = [8, 32], strides = [1, 1]} : vector<8x128xf32> to vector<8x32xf32>
    %167 = arith.negf %166 : vector<8x32xf32>
    %168 = math.exp %167 : vector<8x32xf32>
    %cst_51 = arith.constant 1.000000e+00 : f32
    %169 = vector.broadcast %cst_51 : f32 to vector<8x32xf32>
    %170 = arith.addf %169, %168 : vector<8x32xf32>
    %171 = arith.divf %169, %170 : vector<8x32xf32>
    %172 = arith.mulf %163, %140 : vector<8x32xf32>
    %173 = arith.mulf %157, %165 : vector<8x32xf32>
    %174 = arith.addf %172, %173 : vector<8x32xf32>
    %175 = math.tanh %174 : vector<8x32xf32>
    %176 = arith.mulf %171, %175 : vector<8x32xf32>
    %177 = arith.index_cast %146 : i32 to index
    %c0_52 = arith.constant 0 : index
    %178 = vector.load %arg13[%177, %c0_52] : memref<64x32xf32, #tpu.memory_space<vmem>>, vector<8x32xf32>
    tpu.vector_store %arg13[%177, %c0_52], %176 {strides = array<i32>} : memref<64x32xf32, #tpu.memory_space<vmem>>, vector<8x32xf32>,
    %c5_i32 = arith.constant 5 : i32
    %c8_i32_53 = arith.constant 8 : i32
    %179 = arith.muli %c5_i32, %c8_i32_53 : i32
    %180 = tpu.assume_multiple %179, 8 : i32
    %181 = arith.index_cast %180 : i32 to index
    %c0_54 = arith.constant 0 : index
    %182 = vector.load %arg12[%181, %c0_54] : memref<64x128xf32, #tpu.memory_space<vmem>>, vector<8x128xf32>
    %c0_55 = arith.constant 0 : index
    %c0_56 = arith.constant 0 : index
    %183 = vector.load %arg2[%c0_55, %c0_56] : memref<32x128xf32, #tpu.memory_space<vmem>>, vector<32x128xf32>
    %cst_57 = arith.constant dense<0.000000e+00> : vector<8x128xf32>
    %184 = tpu.matmul %176, %183, %cst_57 {dimension_numbers = #tpu.dot_dimension_numbers<[1], [0], [0], [1], [0, 0, 1, 1], [], []>} : vector<8x32xf32>, vector<32x128xf32>, vector<8x128xf32> -> vector<8x128xf32>
    %185 = arith.addf %182, %184 : vector<8x128xf32>
    %186 = vector.extract_strided_slice %185 {offsets = [0, 0], sizes = [8, 32], strides = [1, 1]} : vector<8x128xf32> to vector<8x32xf32>
    %187 = arith.negf %186 : vector<8x32xf32>
    %188 = math.exp %187 : vector<8x32xf32>
    %cst_58 = arith.constant 1.000000e+00 : f32
    %189 = vector.broadcast %cst_58 : f32 to vector<8x32xf32>
    %190 = arith.addf %189, %188 : vector<8x32xf32>
    %191 = arith.divf %189, %190 : vector<8x32xf32>
    %192 = vector.extract_strided_slice %185 {offsets = [0, 32], sizes = [8, 32], strides = [1, 1]} : vector<8x128xf32> to vector<8x32xf32>
    %193 = arith.negf %192 : vector<8x32xf32>
    %194 = math.exp %193 : vector<8x32xf32>
    %cst_59 = arith.constant 1.000000e+00 : f32
    %195 = vector.broadcast %cst_59 : f32 to vector<8x32xf32>
    %196 = arith.addf %195, %194 : vector<8x32xf32>
    %197 = arith.divf %195, %196 : vector<8x32xf32>
    %198 = vector.extract_strided_slice %185 {offsets = [0, 64], sizes = [8, 32], strides = [1, 1]} : vector<8x128xf32> to vector<8x32xf32>
    %199 = math.tanh %198 : vector<8x32xf32>
    %200 = vector.extract_strided_slice %185 {offsets = [0, 96], sizes = [8, 32], strides = [1, 1]} : vector<8x128xf32> to vector<8x32xf32>
    %201 = arith.negf %200 : vector<8x32xf32>
    %202 = math.exp %201 : vector<8x32xf32>
    %cst_60 = arith.constant 1.000000e+00 : f32
    %203 = vector.broadcast %cst_60 : f32 to vector<8x32xf32>
    %204 = arith.addf %203, %202 : vector<8x32xf32>
    %205 = arith.divf %203, %204 : vector<8x32xf32>
    %206 = arith.mulf %197, %174 : vector<8x32xf32>
    %207 = arith.mulf %191, %199 : vector<8x32xf32>
    %208 = arith.addf %206, %207 : vector<8x32xf32>
    %209 = math.tanh %208 : vector<8x32xf32>
    %210 = arith.mulf %205, %209 : vector<8x32xf32>
    %211 = arith.index_cast %180 : i32 to index
    %c0_61 = arith.constant 0 : index
    %212 = vector.load %arg13[%211, %c0_61] : memref<64x32xf32, #tpu.memory_space<vmem>>, vector<8x32xf32>
    tpu.vector_store %arg13[%211, %c0_61], %210 {strides = array<i32>} : memref<64x32xf32, #tpu.memory_space<vmem>>, vector<8x32xf32>,
    %c6_i32 = arith.constant 6 : i32
    %c8_i32_62 = arith.constant 8 : i32
    %213 = arith.muli %c6_i32, %c8_i32_62 : i32
    %214 = tpu.assume_multiple %213, 8 : i32
    %215 = arith.index_cast %214 : i32 to index
    %c0_63 = arith.constant 0 : index
    %216 = vector.load %arg12[%215, %c0_63] : memref<64x128xf32, #tpu.memory_space<vmem>>, vector<8x128xf32>
    %c0_64 = arith.constant 0 : index
    %c0_65 = arith.constant 0 : index
    %217 = vector.load %arg2[%c0_64, %c0_65] : memref<32x128xf32, #tpu.memory_space<vmem>>, vector<32x128xf32>
    %cst_66 = arith.constant dense<0.000000e+00> : vector<8x128xf32>
    %218 = tpu.matmul %210, %217, %cst_66 {dimension_numbers = #tpu.dot_dimension_numbers<[1], [0], [0], [1], [0, 0, 1, 1], [], []>} : vector<8x32xf32>, vector<32x128xf32>, vector<8x128xf32> -> vector<8x128xf32>
    %219 = arith.addf %216, %218 : vector<8x128xf32>
    %220 = vector.extract_strided_slice %219 {offsets = [0, 0], sizes = [8, 32], strides = [1, 1]} : vector<8x128xf32> to vector<8x32xf32>
    %221 = arith.negf %220 : vector<8x32xf32>
    %222 = math.exp %221 : vector<8x32xf32>
    %cst_67 = arith.constant 1.000000e+00 : f32
    %223 = vector.broadcast %cst_67 : f32 to vector<8x32xf32>
    %224 = arith.addf %223, %222 : vector<8x32xf32>
    %225 = arith.divf %223, %224 : vector<8x32xf32>
    %226 = vector.extract_strided_slice %219 {offsets = [0, 32], sizes = [8, 32], strides = [1, 1]} : vector<8x128xf32> to vector<8x32xf32>
    %227 = arith.negf %226 : vector<8x32xf32>
    %228 = math.exp %227 : vector<8x32xf32>
    %cst_68 = arith.constant 1.000000e+00 : f32
    %229 = vector.broadcast %cst_68 : f32 to vector<8x32xf32>
    %230 = arith.addf %229, %228 : vector<8x32xf32>
    %231 = arith.divf %229, %230 : vector<8x32xf32>
    %232 = vector.extract_strided_slice %219 {offsets = [0, 64], sizes = [8, 32], strides = [1, 1]} : vector<8x128xf32> to vector<8x32xf32>
    %233 = math.tanh %232 : vector<8x32xf32>
    %234 = vector.extract_strided_slice %219 {offsets = [0, 96], sizes = [8, 32], strides = [1, 1]} : vector<8x128xf32> to vector<8x32xf32>
    %235 = arith.negf %234 : vector<8x32xf32>
    %236 = math.exp %235 : vector<8x32xf32>
    %cst_69 = arith.constant 1.000000e+00 : f32
    %237 = vector.broadcast %cst_69 : f32 to vector<8x32xf32>
    %238 = arith.addf %237, %236 : vector<8x32xf32>
    %239 = arith.divf %237, %238 : vector<8x32xf32>
    %240 = arith.mulf %231, %208 : vector<8x32xf32>
    %241 = arith.mulf %225, %233 : vector<8x32xf32>
    %242 = arith.addf %240, %241 : vector<8x32xf32>
    %243 = math.tanh %242 : vector<8x32xf32>
    %244 = arith.mulf %239, %243 : vector<8x32xf32>
    %245 = arith.index_cast %214 : i32 to index
    %c0_70 = arith.constant 0 : index
    %246 = vector.load %arg13[%245, %c0_70] : memref<64x32xf32, #tpu.memory_space<vmem>>, vector<8x32xf32>
    tpu.vector_store %arg13[%245, %c0_70], %244 {strides = array<i32>} : memref<64x32xf32, #tpu.memory_space<vmem>>, vector<8x32xf32>,
    %c7_i32 = arith.constant 7 : i32
    %c8_i32_71 = arith.constant 8 : i32
    %247 = arith.muli %c7_i32, %c8_i32_71 : i32
    %248 = tpu.assume_multiple %247, 8 : i32
    %249 = arith.index_cast %248 : i32 to index
    %c0_72 = arith.constant 0 : index
    %250 = vector.load %arg12[%249, %c0_72] : memref<64x128xf32, #tpu.memory_space<vmem>>, vector<8x128xf32>
    %c0_73 = arith.constant 0 : index
    %c0_74 = arith.constant 0 : index
    %251 = vector.load %arg2[%c0_73, %c0_74] : memref<32x128xf32, #tpu.memory_space<vmem>>, vector<32x128xf32>
    %cst_75 = arith.constant dense<0.000000e+00> : vector<8x128xf32>
    %252 = tpu.matmul %244, %251, %cst_75 {dimension_numbers = #tpu.dot_dimension_numbers<[1], [0], [0], [1], [0, 0, 1, 1], [], []>} : vector<8x32xf32>, vector<32x128xf32>, vector<8x128xf32> -> vector<8x128xf32>
    %253 = arith.addf %250, %252 : vector<8x128xf32>
    %254 = vector.extract_strided_slice %253 {offsets = [0, 0], sizes = [8, 32], strides = [1, 1]} : vector<8x128xf32> to vector<8x32xf32>
    %255 = arith.negf %254 : vector<8x32xf32>
    %256 = math.exp %255 : vector<8x32xf32>
    %cst_76 = arith.constant 1.000000e+00 : f32
    %257 = vector.broadcast %cst_76 : f32 to vector<8x32xf32>
    %258 = arith.addf %257, %256 : vector<8x32xf32>
    %259 = arith.divf %257, %258 : vector<8x32xf32>
    %260 = vector.extract_strided_slice %253 {offsets = [0, 32], sizes = [8, 32], strides = [1, 1]} : vector<8x128xf32> to vector<8x32xf32>
    %261 = arith.negf %260 : vector<8x32xf32>
    %262 = math.exp %261 : vector<8x32xf32>
    %cst_77 = arith.constant 1.000000e+00 : f32
    %263 = vector.broadcast %cst_77 : f32 to vector<8x32xf32>
    %264 = arith.addf %263, %262 : vector<8x32xf32>
    %265 = arith.divf %263, %264 : vector<8x32xf32>
    %266 = vector.extract_strided_slice %253 {offsets = [0, 64], sizes = [8, 32], strides = [1, 1]} : vector<8x128xf32> to vector<8x32xf32>
    %267 = math.tanh %266 : vector<8x32xf32>
    %268 = vector.extract_strided_slice %253 {offsets = [0, 96], sizes = [8, 32], strides = [1, 1]} : vector<8x128xf32> to vector<8x32xf32>
    %269 = arith.negf %268 : vector<8x32xf32>
    %270 = math.exp %269 : vector<8x32xf32>
    %cst_78 = arith.constant 1.000000e+00 : f32
    %271 = vector.broadcast %cst_78 : f32 to vector<8x32xf32>
    %272 = arith.addf %271, %270 : vector<8x32xf32>
    %273 = arith.divf %271, %272 : vector<8x32xf32>
    %274 = arith.mulf %265, %242 : vector<8x32xf32>
    %275 = arith.mulf %259, %267 : vector<8x32xf32>
    %276 = arith.addf %274, %275 : vector<8x32xf32>
    %277 = math.tanh %276 : vector<8x32xf32>
    %278 = arith.mulf %273, %277 : vector<8x32xf32>
    %279 = arith.index_cast %248 : i32 to index
    %c0_79 = arith.constant 0 : index
    %280 = vector.load %arg13[%279, %c0_79] : memref<64x32xf32, #tpu.memory_space<vmem>>, vector<8x32xf32>
    tpu.vector_store %arg13[%279, %c0_79], %278 {strides = array<i32>} : memref<64x32xf32, #tpu.memory_space<vmem>>, vector<8x32xf32>,
    %c8_i32_80 = arith.constant 8 : i32
    %c0_81 = arith.constant 0 : index
    %c0_82 = arith.constant 0 : index
    %c0_83 = arith.constant 0 : index
    %281 = vector.load %arg10[%c0_81, %c0_82, %c0_83] : memref<2x8x32xf32, #tpu.memory_space<vmem>>, vector<1x8x32xf32>
    %282 = vector.shape_cast %281 : vector<1x8x32xf32> to vector<8x32xf32>
    %283 = vector.shape_cast %278 : vector<8x32xf32> to vector<1x8x32xf32>
    tpu.vector_store %arg10[%c0_81, %c0_82, %c0_83], %283 {strides = array<i32>} : memref<2x8x32xf32, #tpu.memory_space<vmem>>, vector<1x8x32xf32>,
    %c0_84 = arith.constant 0 : index
    %c0_85 = arith.constant 0 : index
    %c0_86 = arith.constant 0 : index
    %284 = vector.load %arg11[%c0_84, %c0_85, %c0_86] : memref<2x8x32xf32, #tpu.memory_space<vmem>>, vector<1x8x32xf32>
    %285 = vector.shape_cast %284 : vector<1x8x32xf32> to vector<8x32xf32>
    %286 = vector.shape_cast %276 : vector<8x32xf32> to vector<1x8x32xf32>
    tpu.vector_store %arg11[%c0_84, %c0_85, %c0_86], %286 {strides = array<i32>} : memref<2x8x32xf32, #tpu.memory_space<vmem>>, vector<1x8x32xf32>,
    %c0_87 = arith.constant 0 : index
    %c0_88 = arith.constant 0 : index
    %287 = vector.load %arg13[%c0_87, %c0_88] : memref<64x32xf32, #tpu.memory_space<vmem>>, vector<64x32xf32>
    %c0_89 = arith.constant 0 : index
    %c0_90 = arith.constant 0 : index
    %288 = vector.load %arg4[%c0_89, %c0_90] : memref<32x128xf32, #tpu.memory_space<vmem>>, vector<32x128xf32>
    %cst_91 = arith.constant dense<0.000000e+00> : vector<64x128xf32>
    %289 = tpu.matmul %287, %288, %cst_91 {dimension_numbers = #tpu.dot_dimension_numbers<[1], [0], [0], [1], [0, 0, 1, 1], [], []>} : vector<64x32xf32>, vector<32x128xf32>, vector<64x128xf32> -> vector<64x128xf32>
    %c0_92 = arith.constant 0 : index
    %c0_93 = arith.constant 0 : index
    %290 = vector.load %arg6[%c0_92, %c0_93] : memref<1x128xf32, #tpu.memory_space<vmem>>, vector<1x128xf32>
    %291 = vector.broadcast %290 : vector<1x128xf32> to vector<64x128xf32>
    %292 = arith.addf %289, %291 : vector<64x128xf32>
    %c0_94 = arith.constant 0 : index
    %c0_95 = arith.constant 0 : index
    %293 = vector.load %arg12[%c0_94, %c0_95] : memref<64x128xf32, #tpu.memory_space<vmem>>, vector<64x128xf32>
    tpu.vector_store %arg12[%c0_94, %c0_95], %292 {strides = array<i32>} : memref<64x128xf32, #tpu.memory_space<vmem>>, vector<64x128xf32>,
    %cst_96 = arith.constant 0.000000e+00 : f32
    %294 = vector.broadcast %cst_96 : f32 to vector<8x32xf32>
    %cst_97 = arith.constant 0.000000e+00 : f32
    %295 = vector.broadcast %cst_97 : f32 to vector<8x32xf32>
    %c0_i32_98 = arith.constant 0 : i32
    %c8_i32_99 = arith.constant 8 : i32
    %296 = arith.muli %c0_i32_98, %c8_i32_99 : i32
    %297 = tpu.assume_multiple %296, 8 : i32
    %298 = arith.index_cast %297 : i32 to index
    %c0_100 = arith.constant 0 : index
    %299 = vector.load %arg12[%298, %c0_100] : memref<64x128xf32, #tpu.memory_space<vmem>>, vector<8x128xf32>
    %c0_101 = arith.constant 0 : index
    %c0_102 = arith.constant 0 : index
    %300 = vector.load %arg5[%c0_101, %c0_102] : memref<32x128xf32, #tpu.memory_space<vmem>>, vector<32x128xf32>
    %cst_103 = arith.constant dense<0.000000e+00> : vector<8x128xf32>
    %301 = tpu.matmul %294, %300, %cst_103 {dimension_numbers = #tpu.dot_dimension_numbers<[1], [0], [0], [1], [0, 0, 1, 1], [], []>} : vector<8x32xf32>, vector<32x128xf32>, vector<8x128xf32> -> vector<8x128xf32>
    %302 = arith.addf %299, %301 : vector<8x128xf32>
    %303 = vector.extract_strided_slice %302 {offsets = [0, 0], sizes = [8, 32], strides = [1, 1]} : vector<8x128xf32> to vector<8x32xf32>
    %304 = arith.negf %303 : vector<8x32xf32>
    %305 = math.exp %304 : vector<8x32xf32>
    %cst_104 = arith.constant 1.000000e+00 : f32
    %306 = vector.broadcast %cst_104 : f32 to vector<8x32xf32>
    %307 = arith.addf %306, %305 : vector<8x32xf32>
    %308 = arith.divf %306, %307 : vector<8x32xf32>
    %309 = vector.extract_strided_slice %302 {offsets = [0, 32], sizes = [8, 32], strides = [1, 1]} : vector<8x128xf32> to vector<8x32xf32>
    %310 = arith.negf %309 : vector<8x32xf32>
    %311 = math.exp %310 : vector<8x32xf32>
    %cst_105 = arith.constant 1.000000e+00 : f32
    %312 = vector.broadcast %cst_105 : f32 to vector<8x32xf32>
    %313 = arith.addf %312, %311 : vector<8x32xf32>
    %314 = arith.divf %312, %313 : vector<8x32xf32>
    %315 = vector.extract_strided_slice %302 {offsets = [0, 64], sizes = [8, 32], strides = [1, 1]} : vector<8x128xf32> to vector<8x32xf32>
    %316 = math.tanh %315 : vector<8x32xf32>
    %317 = vector.extract_strided_slice %302 {offsets = [0, 96], sizes = [8, 32], strides = [1, 1]} : vector<8x128xf32> to vector<8x32xf32>
    %318 = arith.negf %317 : vector<8x32xf32>
    %319 = math.exp %318 : vector<8x32xf32>
    %cst_106 = arith.constant 1.000000e+00 : f32
    %320 = vector.broadcast %cst_106 : f32 to vector<8x32xf32>
    %321 = arith.addf %320, %319 : vector<8x32xf32>
    %322 = arith.divf %320, %321 : vector<8x32xf32>
    %323 = arith.mulf %314, %295 : vector<8x32xf32>
    %324 = arith.mulf %308, %316 : vector<8x32xf32>
    %325 = arith.addf %323, %324 : vector<8x32xf32>
    %326 = math.tanh %325 : vector<8x32xf32>
    %327 = arith.mulf %322, %326 : vector<8x32xf32>
    %328 = arith.index_cast %297 : i32 to index
    %c0_107 = arith.constant 0 : index
    %329 = vector.load %arg13[%328, %c0_107] : memref<64x32xf32, #tpu.memory_space<vmem>>, vector<8x32xf32>
    tpu.vector_store %arg13[%328, %c0_107], %327 {strides = array<i32>} : memref<64x32xf32, #tpu.memory_space<vmem>>, vector<8x32xf32>,
    %c1_i32_108 = arith.constant 1 : i32
    %c8_i32_109 = arith.constant 8 : i32
    %330 = arith.muli %c1_i32_108, %c8_i32_109 : i32
    %331 = tpu.assume_multiple %330, 8 : i32
    %332 = arith.index_cast %331 : i32 to index
    %c0_110 = arith.constant 0 : index
    %333 = vector.load %arg12[%332, %c0_110] : memref<64x128xf32, #tpu.memory_space<vmem>>, vector<8x128xf32>
    %c0_111 = arith.constant 0 : index
    %c0_112 = arith.constant 0 : index
    %334 = vector.load %arg5[%c0_111, %c0_112] : memref<32x128xf32, #tpu.memory_space<vmem>>, vector<32x128xf32>
    %cst_113 = arith.constant dense<0.000000e+00> : vector<8x128xf32>
    %335 = tpu.matmul %327, %334, %cst_113 {dimension_numbers = #tpu.dot_dimension_numbers<[1], [0], [0], [1], [0, 0, 1, 1], [], []>} : vector<8x32xf32>, vector<32x128xf32>, vector<8x128xf32> -> vector<8x128xf32>
    %336 = arith.addf %333, %335 : vector<8x128xf32>
    %337 = vector.extract_strided_slice %336 {offsets = [0, 0], sizes = [8, 32], strides = [1, 1]} : vector<8x128xf32> to vector<8x32xf32>
    %338 = arith.negf %337 : vector<8x32xf32>
    %339 = math.exp %338 : vector<8x32xf32>
    %cst_114 = arith.constant 1.000000e+00 : f32
    %340 = vector.broadcast %cst_114 : f32 to vector<8x32xf32>
    %341 = arith.addf %340, %339 : vector<8x32xf32>
    %342 = arith.divf %340, %341 : vector<8x32xf32>
    %343 = vector.extract_strided_slice %336 {offsets = [0, 32], sizes = [8, 32], strides = [1, 1]} : vector<8x128xf32> to vector<8x32xf32>
    %344 = arith.negf %343 : vector<8x32xf32>
    %345 = math.exp %344 : vector<8x32xf32>
    %cst_115 = arith.constant 1.000000e+00 : f32
    %346 = vector.broadcast %cst_115 : f32 to vector<8x32xf32>
    %347 = arith.addf %346, %345 : vector<8x32xf32>
    %348 = arith.divf %346, %347 : vector<8x32xf32>
    %349 = vector.extract_strided_slice %336 {offsets = [0, 64], sizes = [8, 32], strides = [1, 1]} : vector<8x128xf32> to vector<8x32xf32>
    %350 = math.tanh %349 : vector<8x32xf32>
    %351 = vector.extract_strided_slice %336 {offsets = [0, 96], sizes = [8, 32], strides = [1, 1]} : vector<8x128xf32> to vector<8x32xf32>
    %352 = arith.negf %351 : vector<8x32xf32>
    %353 = math.exp %352 : vector<8x32xf32>
    %cst_116 = arith.constant 1.000000e+00 : f32
    %354 = vector.broadcast %cst_116 : f32 to vector<8x32xf32>
    %355 = arith.addf %354, %353 : vector<8x32xf32>
    %356 = arith.divf %354, %355 : vector<8x32xf32>
    %357 = arith.mulf %348, %325 : vector<8x32xf32>
    %358 = arith.mulf %342, %350 : vector<8x32xf32>
    %359 = arith.addf %357, %358 : vector<8x32xf32>
    %360 = math.tanh %359 : vector<8x32xf32>
    %361 = arith.mulf %356, %360 : vector<8x32xf32>
    %362 = arith.index_cast %331 : i32 to index
    %c0_117 = arith.constant 0 : index
    %363 = vector.load %arg13[%362, %c0_117] : memref<64x32xf32, #tpu.memory_space<vmem>>, vector<8x32xf32>
    tpu.vector_store %arg13[%362, %c0_117], %361 {strides = array<i32>} : memref<64x32xf32, #tpu.memory_space<vmem>>, vector<8x32xf32>,
    %c2_i32_118 = arith.constant 2 : i32
    %c8_i32_119 = arith.constant 8 : i32
    %364 = arith.muli %c2_i32_118, %c8_i32_119 : i32
    %365 = tpu.assume_multiple %364, 8 : i32
    %366 = arith.index_cast %365 : i32 to index
    %c0_120 = arith.constant 0 : index
    %367 = vector.load %arg12[%366, %c0_120] : memref<64x128xf32, #tpu.memory_space<vmem>>, vector<8x128xf32>
    %c0_121 = arith.constant 0 : index
    %c0_122 = arith.constant 0 : index
    %368 = vector.load %arg5[%c0_121, %c0_122] : memref<32x128xf32, #tpu.memory_space<vmem>>, vector<32x128xf32>
    %cst_123 = arith.constant dense<0.000000e+00> : vector<8x128xf32>
    %369 = tpu.matmul %361, %368, %cst_123 {dimension_numbers = #tpu.dot_dimension_numbers<[1], [0], [0], [1], [0, 0, 1, 1], [], []>} : vector<8x32xf32>, vector<32x128xf32>, vector<8x128xf32> -> vector<8x128xf32>
    %370 = arith.addf %367, %369 : vector<8x128xf32>
    %371 = vector.extract_strided_slice %370 {offsets = [0, 0], sizes = [8, 32], strides = [1, 1]} : vector<8x128xf32> to vector<8x32xf32>
    %372 = arith.negf %371 : vector<8x32xf32>
    %373 = math.exp %372 : vector<8x32xf32>
    %cst_124 = arith.constant 1.000000e+00 : f32
    %374 = vector.broadcast %cst_124 : f32 to vector<8x32xf32>
    %375 = arith.addf %374, %373 : vector<8x32xf32>
    %376 = arith.divf %374, %375 : vector<8x32xf32>
    %377 = vector.extract_strided_slice %370 {offsets = [0, 32], sizes = [8, 32], strides = [1, 1]} : vector<8x128xf32> to vector<8x32xf32>
    %378 = arith.negf %377 : vector<8x32xf32>
    %379 = math.exp %378 : vector<8x32xf32>
    %cst_125 = arith.constant 1.000000e+00 : f32
    %380 = vector.broadcast %cst_125 : f32 to vector<8x32xf32>
    %381 = arith.addf %380, %379 : vector<8x32xf32>
    %382 = arith.divf %380, %381 : vector<8x32xf32>
    %383 = vector.extract_strided_slice %370 {offsets = [0, 64], sizes = [8, 32], strides = [1, 1]} : vector<8x128xf32> to vector<8x32xf32>
    %384 = math.tanh %383 : vector<8x32xf32>
    %385 = vector.extract_strided_slice %370 {offsets = [0, 96], sizes = [8, 32], strides = [1, 1]} : vector<8x128xf32> to vector<8x32xf32>
    %386 = arith.negf %385 : vector<8x32xf32>
    %387 = math.exp %386 : vector<8x32xf32>
    %cst_126 = arith.constant 1.000000e+00 : f32
    %388 = vector.broadcast %cst_126 : f32 to vector<8x32xf32>
    %389 = arith.addf %388, %387 : vector<8x32xf32>
    %390 = arith.divf %388, %389 : vector<8x32xf32>
    %391 = arith.mulf %382, %359 : vector<8x32xf32>
    %392 = arith.mulf %376, %384 : vector<8x32xf32>
    %393 = arith.addf %391, %392 : vector<8x32xf32>
    %394 = math.tanh %393 : vector<8x32xf32>
    %395 = arith.mulf %390, %394 : vector<8x32xf32>
    %396 = arith.index_cast %365 : i32 to index
    %c0_127 = arith.constant 0 : index
    %397 = vector.load %arg13[%396, %c0_127] : memref<64x32xf32, #tpu.memory_space<vmem>>, vector<8x32xf32>
    tpu.vector_store %arg13[%396, %c0_127], %395 {strides = array<i32>} : memref<64x32xf32, #tpu.memory_space<vmem>>, vector<8x32xf32>,
    %c3_i32_128 = arith.constant 3 : i32
    %c8_i32_129 = arith.constant 8 : i32
    %398 = arith.muli %c3_i32_128, %c8_i32_129 : i32
    %399 = tpu.assume_multiple %398, 8 : i32
    %400 = arith.index_cast %399 : i32 to index
    %c0_130 = arith.constant 0 : index
    %401 = vector.load %arg12[%400, %c0_130] : memref<64x128xf32, #tpu.memory_space<vmem>>, vector<8x128xf32>
    %c0_131 = arith.constant 0 : index
    %c0_132 = arith.constant 0 : index
    %402 = vector.load %arg5[%c0_131, %c0_132] : memref<32x128xf32, #tpu.memory_space<vmem>>, vector<32x128xf32>
    %cst_133 = arith.constant dense<0.000000e+00> : vector<8x128xf32>
    %403 = tpu.matmul %395, %402, %cst_133 {dimension_numbers = #tpu.dot_dimension_numbers<[1], [0], [0], [1], [0, 0, 1, 1], [], []>} : vector<8x32xf32>, vector<32x128xf32>, vector<8x128xf32> -> vector<8x128xf32>
    %404 = arith.addf %401, %403 : vector<8x128xf32>
    %405 = vector.extract_strided_slice %404 {offsets = [0, 0], sizes = [8, 32], strides = [1, 1]} : vector<8x128xf32> to vector<8x32xf32>
    %406 = arith.negf %405 : vector<8x32xf32>
    %407 = math.exp %406 : vector<8x32xf32>
    %cst_134 = arith.constant 1.000000e+00 : f32
    %408 = vector.broadcast %cst_134 : f32 to vector<8x32xf32>
    %409 = arith.addf %408, %407 : vector<8x32xf32>
    %410 = arith.divf %408, %409 : vector<8x32xf32>
    %411 = vector.extract_strided_slice %404 {offsets = [0, 32], sizes = [8, 32], strides = [1, 1]} : vector<8x128xf32> to vector<8x32xf32>
    %412 = arith.negf %411 : vector<8x32xf32>
    %413 = math.exp %412 : vector<8x32xf32>
    %cst_135 = arith.constant 1.000000e+00 : f32
    %414 = vector.broadcast %cst_135 : f32 to vector<8x32xf32>
    %415 = arith.addf %414, %413 : vector<8x32xf32>
    %416 = arith.divf %414, %415 : vector<8x32xf32>
    %417 = vector.extract_strided_slice %404 {offsets = [0, 64], sizes = [8, 32], strides = [1, 1]} : vector<8x128xf32> to vector<8x32xf32>
    %418 = math.tanh %417 : vector<8x32xf32>
    %419 = vector.extract_strided_slice %404 {offsets = [0, 96], sizes = [8, 32], strides = [1, 1]} : vector<8x128xf32> to vector<8x32xf32>
    %420 = arith.negf %419 : vector<8x32xf32>
    %421 = math.exp %420 : vector<8x32xf32>
    %cst_136 = arith.constant 1.000000e+00 : f32
    %422 = vector.broadcast %cst_136 : f32 to vector<8x32xf32>
    %423 = arith.addf %422, %421 : vector<8x32xf32>
    %424 = arith.divf %422, %423 : vector<8x32xf32>
    %425 = arith.mulf %416, %393 : vector<8x32xf32>
    %426 = arith.mulf %410, %418 : vector<8x32xf32>
    %427 = arith.addf %425, %426 : vector<8x32xf32>
    %428 = math.tanh %427 : vector<8x32xf32>
    %429 = arith.mulf %424, %428 : vector<8x32xf32>
    %430 = arith.index_cast %399 : i32 to index
    %c0_137 = arith.constant 0 : index
    %431 = vector.load %arg13[%430, %c0_137] : memref<64x32xf32, #tpu.memory_space<vmem>>, vector<8x32xf32>
    tpu.vector_store %arg13[%430, %c0_137], %429 {strides = array<i32>} : memref<64x32xf32, #tpu.memory_space<vmem>>, vector<8x32xf32>,
    %c4_i32_138 = arith.constant 4 : i32
    %c8_i32_139 = arith.constant 8 : i32
    %432 = arith.muli %c4_i32_138, %c8_i32_139 : i32
    %433 = tpu.assume_multiple %432, 8 : i32
    %434 = arith.index_cast %433 : i32 to index
    %c0_140 = arith.constant 0 : index
    %435 = vector.load %arg12[%434, %c0_140] : memref<64x128xf32, #tpu.memory_space<vmem>>, vector<8x128xf32>
    %c0_141 = arith.constant 0 : index
    %c0_142 = arith.constant 0 : index
    %436 = vector.load %arg5[%c0_141, %c0_142] : memref<32x128xf32, #tpu.memory_space<vmem>>, vector<32x128xf32>
    %cst_143 = arith.constant dense<0.000000e+00> : vector<8x128xf32>
    %437 = tpu.matmul %429, %436, %cst_143 {dimension_numbers = #tpu.dot_dimension_numbers<[1], [0], [0], [1], [0, 0, 1, 1], [], []>} : vector<8x32xf32>, vector<32x128xf32>, vector<8x128xf32> -> vector<8x128xf32>
    %438 = arith.addf %435, %437 : vector<8x128xf32>
    %439 = vector.extract_strided_slice %438 {offsets = [0, 0], sizes = [8, 32], strides = [1, 1]} : vector<8x128xf32> to vector<8x32xf32>
    %440 = arith.negf %439 : vector<8x32xf32>
    %441 = math.exp %440 : vector<8x32xf32>
    %cst_144 = arith.constant 1.000000e+00 : f32
    %442 = vector.broadcast %cst_144 : f32 to vector<8x32xf32>
    %443 = arith.addf %442, %441 : vector<8x32xf32>
    %444 = arith.divf %442, %443 : vector<8x32xf32>
    %445 = vector.extract_strided_slice %438 {offsets = [0, 32], sizes = [8, 32], strides = [1, 1]} : vector<8x128xf32> to vector<8x32xf32>
    %446 = arith.negf %445 : vector<8x32xf32>
    %447 = math.exp %446 : vector<8x32xf32>
    %cst_145 = arith.constant 1.000000e+00 : f32
    %448 = vector.broadcast %cst_145 : f32 to vector<8x32xf32>
    %449 = arith.addf %448, %447 : vector<8x32xf32>
    %450 = arith.divf %448, %449 : vector<8x32xf32>
    %451 = vector.extract_strided_slice %438 {offsets = [0, 64], sizes = [8, 32], strides = [1, 1]} : vector<8x128xf32> to vector<8x32xf32>
    %452 = math.tanh %451 : vector<8x32xf32>
    %453 = vector.extract_strided_slice %438 {offsets = [0, 96], sizes = [8, 32], strides = [1, 1]} : vector<8x128xf32> to vector<8x32xf32>
    %454 = arith.negf %453 : vector<8x32xf32>
    %455 = math.exp %454 : vector<8x32xf32>
    %cst_146 = arith.constant 1.000000e+00 : f32
    %456 = vector.broadcast %cst_146 : f32 to vector<8x32xf32>
    %457 = arith.addf %456, %455 : vector<8x32xf32>
    %458 = arith.divf %456, %457 : vector<8x32xf32>
    %459 = arith.mulf %450, %427 : vector<8x32xf32>
    %460 = arith.mulf %444, %452 : vector<8x32xf32>
    %461 = arith.addf %459, %460 : vector<8x32xf32>
    %462 = math.tanh %461 : vector<8x32xf32>
    %463 = arith.mulf %458, %462 : vector<8x32xf32>
    %464 = arith.index_cast %433 : i32 to index
    %c0_147 = arith.constant 0 : index
    %465 = vector.load %arg13[%464, %c0_147] : memref<64x32xf32, #tpu.memory_space<vmem>>, vector<8x32xf32>
    tpu.vector_store %arg13[%464, %c0_147], %463 {strides = array<i32>} : memref<64x32xf32, #tpu.memory_space<vmem>>, vector<8x32xf32>,
    %c5_i32_148 = arith.constant 5 : i32
    %c8_i32_149 = arith.constant 8 : i32
    %466 = arith.muli %c5_i32_148, %c8_i32_149 : i32
    %467 = tpu.assume_multiple %466, 8 : i32
    %468 = arith.index_cast %467 : i32 to index
    %c0_150 = arith.constant 0 : index
    %469 = vector.load %arg12[%468, %c0_150] : memref<64x128xf32, #tpu.memory_space<vmem>>, vector<8x128xf32>
    %c0_151 = arith.constant 0 : index
    %c0_152 = arith.constant 0 : index
    %470 = vector.load %arg5[%c0_151, %c0_152] : memref<32x128xf32, #tpu.memory_space<vmem>>, vector<32x128xf32>
    %cst_153 = arith.constant dense<0.000000e+00> : vector<8x128xf32>
    %471 = tpu.matmul %463, %470, %cst_153 {dimension_numbers = #tpu.dot_dimension_numbers<[1], [0], [0], [1], [0, 0, 1, 1], [], []>} : vector<8x32xf32>, vector<32x128xf32>, vector<8x128xf32> -> vector<8x128xf32>
    %472 = arith.addf %469, %471 : vector<8x128xf32>
    %473 = vector.extract_strided_slice %472 {offsets = [0, 0], sizes = [8, 32], strides = [1, 1]} : vector<8x128xf32> to vector<8x32xf32>
    %474 = arith.negf %473 : vector<8x32xf32>
    %475 = math.exp %474 : vector<8x32xf32>
    %cst_154 = arith.constant 1.000000e+00 : f32
    %476 = vector.broadcast %cst_154 : f32 to vector<8x32xf32>
    %477 = arith.addf %476, %475 : vector<8x32xf32>
    %478 = arith.divf %476, %477 : vector<8x32xf32>
    %479 = vector.extract_strided_slice %472 {offsets = [0, 32], sizes = [8, 32], strides = [1, 1]} : vector<8x128xf32> to vector<8x32xf32>
    %480 = arith.negf %479 : vector<8x32xf32>
    %481 = math.exp %480 : vector<8x32xf32>
    %cst_155 = arith.constant 1.000000e+00 : f32
    %482 = vector.broadcast %cst_155 : f32 to vector<8x32xf32>
    %483 = arith.addf %482, %481 : vector<8x32xf32>
    %484 = arith.divf %482, %483 : vector<8x32xf32>
    %485 = vector.extract_strided_slice %472 {offsets = [0, 64], sizes = [8, 32], strides = [1, 1]} : vector<8x128xf32> to vector<8x32xf32>
    %486 = math.tanh %485 : vector<8x32xf32>
    %487 = vector.extract_strided_slice %472 {offsets = [0, 96], sizes = [8, 32], strides = [1, 1]} : vector<8x128xf32> to vector<8x32xf32>
    %488 = arith.negf %487 : vector<8x32xf32>
    %489 = math.exp %488 : vector<8x32xf32>
    %cst_156 = arith.constant 1.000000e+00 : f32
    %490 = vector.broadcast %cst_156 : f32 to vector<8x32xf32>
    %491 = arith.addf %490, %489 : vector<8x32xf32>
    %492 = arith.divf %490, %491 : vector<8x32xf32>
    %493 = arith.mulf %484, %461 : vector<8x32xf32>
    %494 = arith.mulf %478, %486 : vector<8x32xf32>
    %495 = arith.addf %493, %494 : vector<8x32xf32>
    %496 = math.tanh %495 : vector<8x32xf32>
    %497 = arith.mulf %492, %496 : vector<8x32xf32>
    %498 = arith.index_cast %467 : i32 to index
    %c0_157 = arith.constant 0 : index
    %499 = vector.load %arg13[%498, %c0_157] : memref<64x32xf32, #tpu.memory_space<vmem>>, vector<8x32xf32>
    tpu.vector_store %arg13[%498, %c0_157], %497 {strides = array<i32>} : memref<64x32xf32, #tpu.memory_space<vmem>>, vector<8x32xf32>,
    %c6_i32_158 = arith.constant 6 : i32
    %c8_i32_159 = arith.constant 8 : i32
    %500 = arith.muli %c6_i32_158, %c8_i32_159 : i32
    %501 = tpu.assume_multiple %500, 8 : i32
    %502 = arith.index_cast %501 : i32 to index
    %c0_160 = arith.constant 0 : index
    %503 = vector.load %arg12[%502, %c0_160] : memref<64x128xf32, #tpu.memory_space<vmem>>, vector<8x128xf32>
    %c0_161 = arith.constant 0 : index
    %c0_162 = arith.constant 0 : index
    %504 = vector.load %arg5[%c0_161, %c0_162] : memref<32x128xf32, #tpu.memory_space<vmem>>, vector<32x128xf32>
    %cst_163 = arith.constant dense<0.000000e+00> : vector<8x128xf32>
    %505 = tpu.matmul %497, %504, %cst_163 {dimension_numbers = #tpu.dot_dimension_numbers<[1], [0], [0], [1], [0, 0, 1, 1], [], []>} : vector<8x32xf32>, vector<32x128xf32>, vector<8x128xf32> -> vector<8x128xf32>
    %506 = arith.addf %503, %505 : vector<8x128xf32>
    %507 = vector.extract_strided_slice %506 {offsets = [0, 0], sizes = [8, 32], strides = [1, 1]} : vector<8x128xf32> to vector<8x32xf32>
    %508 = arith.negf %507 : vector<8x32xf32>
    %509 = math.exp %508 : vector<8x32xf32>
    %cst_164 = arith.constant 1.000000e+00 : f32
    %510 = vector.broadcast %cst_164 : f32 to vector<8x32xf32>
    %511 = arith.addf %510, %509 : vector<8x32xf32>
    %512 = arith.divf %510, %511 : vector<8x32xf32>
    %513 = vector.extract_strided_slice %506 {offsets = [0, 32], sizes = [8, 32], strides = [1, 1]} : vector<8x128xf32> to vector<8x32xf32>
    %514 = arith.negf %513 : vector<8x32xf32>
    %515 = math.exp %514 : vector<8x32xf32>
    %cst_165 = arith.constant 1.000000e+00 : f32
    %516 = vector.broadcast %cst_165 : f32 to vector<8x32xf32>
    %517 = arith.addf %516, %515 : vector<8x32xf32>
    %518 = arith.divf %516, %517 : vector<8x32xf32>
    %519 = vector.extract_strided_slice %506 {offsets = [0, 64], sizes = [8, 32], strides = [1, 1]} : vector<8x128xf32> to vector<8x32xf32>
    %520 = math.tanh %519 : vector<8x32xf32>
    %521 = vector.extract_strided_slice %506 {offsets = [0, 96], sizes = [8, 32], strides = [1, 1]} : vector<8x128xf32> to vector<8x32xf32>
    %522 = arith.negf %521 : vector<8x32xf32>
    %523 = math.exp %522 : vector<8x32xf32>
    %cst_166 = arith.constant 1.000000e+00 : f32
    %524 = vector.broadcast %cst_166 : f32 to vector<8x32xf32>
    %525 = arith.addf %524, %523 : vector<8x32xf32>
    %526 = arith.divf %524, %525 : vector<8x32xf32>
    %527 = arith.mulf %518, %495 : vector<8x32xf32>
    %528 = arith.mulf %512, %520 : vector<8x32xf32>
    %529 = arith.addf %527, %528 : vector<8x32xf32>
    %530 = math.tanh %529 : vector<8x32xf32>
    %531 = arith.mulf %526, %530 : vector<8x32xf32>
    %532 = arith.index_cast %501 : i32 to index
    %c0_167 = arith.constant 0 : index
    %533 = vector.load %arg13[%532, %c0_167] : memref<64x32xf32, #tpu.memory_space<vmem>>, vector<8x32xf32>
    tpu.vector_store %arg13[%532, %c0_167], %531 {strides = array<i32>} : memref<64x32xf32, #tpu.memory_space<vmem>>, vector<8x32xf32>,
    %c7_i32_168 = arith.constant 7 : i32
    %c8_i32_169 = arith.constant 8 : i32
    %534 = arith.muli %c7_i32_168, %c8_i32_169 : i32
    %535 = tpu.assume_multiple %534, 8 : i32
    %536 = arith.index_cast %535 : i32 to index
    %c0_170 = arith.constant 0 : index
    %537 = vector.load %arg12[%536, %c0_170] : memref<64x128xf32, #tpu.memory_space<vmem>>, vector<8x128xf32>
    %c0_171 = arith.constant 0 : index
    %c0_172 = arith.constant 0 : index
    %538 = vector.load %arg5[%c0_171, %c0_172] : memref<32x128xf32, #tpu.memory_space<vmem>>, vector<32x128xf32>
    %cst_173 = arith.constant dense<0.000000e+00> : vector<8x128xf32>
    %539 = tpu.matmul %531, %538, %cst_173 {dimension_numbers = #tpu.dot_dimension_numbers<[1], [0], [0], [1], [0, 0, 1, 1], [], []>} : vector<8x32xf32>, vector<32x128xf32>, vector<8x128xf32> -> vector<8x128xf32>
    %540 = arith.addf %537, %539 : vector<8x128xf32>
    %541 = vector.extract_strided_slice %540 {offsets = [0, 0], sizes = [8, 32], strides = [1, 1]} : vector<8x128xf32> to vector<8x32xf32>
    %542 = arith.negf %541 : vector<8x32xf32>
    %543 = math.exp %542 : vector<8x32xf32>
    %cst_174 = arith.constant 1.000000e+00 : f32
    %544 = vector.broadcast %cst_174 : f32 to vector<8x32xf32>
    %545 = arith.addf %544, %543 : vector<8x32xf32>
    %546 = arith.divf %544, %545 : vector<8x32xf32>
    %547 = vector.extract_strided_slice %540 {offsets = [0, 32], sizes = [8, 32], strides = [1, 1]} : vector<8x128xf32> to vector<8x32xf32>
    %548 = arith.negf %547 : vector<8x32xf32>
    %549 = math.exp %548 : vector<8x32xf32>
    %cst_175 = arith.constant 1.000000e+00 : f32
    %550 = vector.broadcast %cst_175 : f32 to vector<8x32xf32>
    %551 = arith.addf %550, %549 : vector<8x32xf32>
    %552 = arith.divf %550, %551 : vector<8x32xf32>
    %553 = vector.extract_strided_slice %540 {offsets = [0, 64], sizes = [8, 32], strides = [1, 1]} : vector<8x128xf32> to vector<8x32xf32>
    %554 = math.tanh %553 : vector<8x32xf32>
    %555 = vector.extract_strided_slice %540 {offsets = [0, 96], sizes = [8, 32], strides = [1, 1]} : vector<8x128xf32> to vector<8x32xf32>
    %556 = arith.negf %555 : vector<8x32xf32>
    %557 = math.exp %556 : vector<8x32xf32>
    %cst_176 = arith.constant 1.000000e+00 : f32
    %558 = vector.broadcast %cst_176 : f32 to vector<8x32xf32>
    %559 = arith.addf %558, %557 : vector<8x32xf32>
    %560 = arith.divf %558, %559 : vector<8x32xf32>
    %561 = arith.mulf %552, %529 : vector<8x32xf32>
    %562 = arith.mulf %546, %554 : vector<8x32xf32>
    %563 = arith.addf %561, %562 : vector<8x32xf32>
    %564 = math.tanh %563 : vector<8x32xf32>
    %565 = arith.mulf %560, %564 : vector<8x32xf32>
    %566 = arith.index_cast %535 : i32 to index
    %c0_177 = arith.constant 0 : index
    %567 = vector.load %arg13[%566, %c0_177] : memref<64x32xf32, #tpu.memory_space<vmem>>, vector<8x32xf32>
    tpu.vector_store %arg13[%566, %c0_177], %565 {strides = array<i32>} : memref<64x32xf32, #tpu.memory_space<vmem>>, vector<8x32xf32>,
    %c8_i32_178 = arith.constant 8 : i32
    %c1 = arith.constant 1 : index
    %c0_179 = arith.constant 0 : index
    %c0_180 = arith.constant 0 : index
    %568 = vector.load %arg10[%c1, %c0_179, %c0_180] : memref<2x8x32xf32, #tpu.memory_space<vmem>>, vector<1x8x32xf32>
    %569 = vector.shape_cast %568 : vector<1x8x32xf32> to vector<8x32xf32>
    %570 = vector.shape_cast %565 : vector<8x32xf32> to vector<1x8x32xf32>
    tpu.vector_store %arg10[%c1, %c0_179, %c0_180], %570 {strides = array<i32>} : memref<2x8x32xf32, #tpu.memory_space<vmem>>, vector<1x8x32xf32>,
    %c1_181 = arith.constant 1 : index
    %c0_182 = arith.constant 0 : index
    %c0_183 = arith.constant 0 : index
    %571 = vector.load %arg11[%c1_181, %c0_182, %c0_183] : memref<2x8x32xf32, #tpu.memory_space<vmem>>, vector<1x8x32xf32>
    %572 = vector.shape_cast %571 : vector<1x8x32xf32> to vector<8x32xf32>
    %573 = vector.shape_cast %563 : vector<8x32xf32> to vector<1x8x32xf32>
    tpu.vector_store %arg11[%c1_181, %c0_182, %c0_183], %573 {strides = array<i32>} : memref<2x8x32xf32, #tpu.memory_space<vmem>>, vector<1x8x32xf32>,
    %c0_184 = arith.constant 0 : index
    %c0_185 = arith.constant 0 : index
    %574 = vector.load %arg13[%c0_184, %c0_185] : memref<64x32xf32, #tpu.memory_space<vmem>>, vector<64x32xf32>
    %c0_186 = arith.constant 0 : index
    %c0_187 = arith.constant 0 : index
    %575 = vector.load %arg7[%c0_186, %c0_187] : memref<32x128xf32, #tpu.memory_space<vmem>>, vector<32x128xf32>
    %cst_188 = arith.constant dense<0.000000e+00> : vector<64x128xf32>
    %576 = tpu.matmul %574, %575, %cst_188 {dimension_numbers = #tpu.dot_dimension_numbers<[1], [0], [0], [1], [0, 0, 1, 1], [], []>} : vector<64x32xf32>, vector<32x128xf32>, vector<64x128xf32> -> vector<64x128xf32>
    %c0_189 = arith.constant 0 : index
    %c0_190 = arith.constant 0 : index
    %577 = vector.load %arg8[%c0_189, %c0_190] : memref<1x128xf32, #tpu.memory_space<vmem>>, vector<1x128xf32>
    %578 = vector.broadcast %577 : vector<1x128xf32> to vector<64x128xf32>
    %579 = arith.addf %576, %578 : vector<64x128xf32>
    %580 = arith.negf %579 : vector<64x128xf32>
    %581 = math.exp %580 : vector<64x128xf32>
    %cst_191 = arith.constant 1.000000e+00 : f32
    %582 = vector.broadcast %cst_191 : f32 to vector<64x128xf32>
    %583 = arith.addf %582, %581 : vector<64x128xf32>
    %584 = arith.divf %582, %583 : vector<64x128xf32>
    %c0_192 = arith.constant 0 : index
    %c0_193 = arith.constant 0 : index
    %585 = vector.load %arg9[%c0_192, %c0_193] : memref<64x128xf32, #tpu.memory_space<vmem>>, vector<64x128xf32>
    tpu.vector_store %arg9[%c0_192, %c0_193], %584 {strides = array<i32>} : memref<64x128xf32, #tpu.memory_space<vmem>>, vector<64x128xf32>,
    return
  }
}

</mosaic_0001>

<llo_original>
// kernel: tpu_custom_call.1
$region0: #{tpu_custom_call.1}
  #allocation0 [shape = 'u32[]', space=smem, size = 0x4, offset = 0x4, fixed_abs, tag = 'smem constant byte address 0x4 - core index']
  #allocation1 [shape = 'u32[144,128]{1,0:T(1,128)}', space=vmem, size = 0x12000, scoped, tag = 'internal scratch']
  #allocation2 [shape = 'f32[64,128]{1,0:T(8,128)}', space=vmem, size = 0x8000, scoped, tag = 'scratch operand']
  #allocation3 [shape = 'f32[64,32]{1,0:T(8,128)}', space=vmem, size = 0x8000, scoped, tag = 'scratch operand']
  %s0 = inlined_call_operand.vmem [shape: f32[64,8], index: 0, kind: input, shape index: {}]
  %s1 = inlined_call_operand.vmem [shape: f32[8,128], index: 1, kind: input, shape index: {}]
  %s2 = inlined_call_operand.vmem [shape: f32[32,128], index: 2, kind: input, shape index: {}]
  %s3 = inlined_call_operand.vmem [shape: f32[1,128], index: 3, kind: input, shape index: {}]
  %s4 = inlined_call_operand.vmem [shape: f32[32,128], index: 4, kind: input, shape index: {}]
  %s5 = inlined_call_operand.hbm [shape: f32[32,128], index: 5, kind: input, shape index: {}]
  %s6 = inlined_call_operand.vmem [shape: f32[1,128], index: 6, kind: input, shape index: {}]
  %s7 = inlined_call_operand.hbm [shape: f32[32,128], index: 7, kind: input, shape index: {}]
  %s8 = inlined_call_operand.vmem [shape: f32[1,128], index: 8, kind: input, shape index: {}]
  %s9 = inlined_call_operand.hbm [shape: f32[64,128], index: 9, kind: output, shape index: {0}]
  %s10 = inlined_call_operand.hbm [shape: f32[2,8,32], index: 10, kind: output, shape index: {1}]
  %s11 = inlined_call_operand.hbm [shape: f32[2,8,32], index: 11, kind: output, shape index: {2}]
  %12 = xla_tuple %s9, %s10, %s11
  %s13 = sld [smem:[#allocation0]]
  $region70: #{tpu_custom_call.1} parent=0
    _
  %s15 = ssub.s32 1, %s13
  %s16 = scalar_select 0, %s15, %s13
  $region1: #{tpu_custom_call.1} parent=0
    #allocation4 [shape = 'u8[16384]{0}', space=vmem, size = 0x4000, scoped, tag = 'input window, operand 5, single buffered']
    #allocation5 [shape = 's32[1]{0}', space=sflag, size = 0x4, scoped, tag = 'scoped memory for tpu_custom_call.1']
    #allocation6 [shape = 's32[1]{0}', space=sflag, size = 0x4, scoped, tag = 'scoped memory for tpu_custom_call.1']
    #allocation7 [shape = 'u8[16384]{0}', space=vmem, size = 0x4000, scoped, tag = 'input window, operand 7, single buffered']
    #allocation8 [shape = 's32[1]{0}', space=sflag, size = 0x4, scoped, tag = 'scoped memory for tpu_custom_call.1']
    #allocation9 [shape = 'u8[32768]{0}', space=vmem, size = 0x8000, scoped, tag = 'output window, operand 0, single buffered']
    #allocation10 [shape = 'u8[8192]{0}', space=vmem, size = 0x2000, scoped, tag = 'output window, operand 1, single buffered']
    #allocation11 [shape = 's32[1]{0}', space=sflag, size = 0x4, scoped, tag = 'scoped memory for tpu_custom_call.1']
    #allocation12 [shape = 'u8[8192]{0}', space=vmem, size = 0x2000, scoped, tag = 'output window, operand 2, single buffered']
    %17 = vsyncpa [#allocation5], 0
    %18 = vsyncpa [#allocation8], 0
    %19 = vsyncpa [#allocation6], 0
    %20 = vsyncpa [#allocation11], 0
    // Predicated region
    $region2: #{tpu_custom_call.1} parent=1 // pred_check
      _
    $region3: #{tpu_custom_call.1} parent=1 // pred_check_branch
      %22 = sbr.rel (0) target = $region5
    $region4: #{tpu_custom_call.1} parent=1 // pred_region
      _
    $region5: #{tpu_custom_call.1} parent=1 // pred_fallthru
      _
    // Predicated region
    $region6: #{tpu_custom_call.1} parent=1 // pred_check
      _
    $region7: #{tpu_custom_call.1} parent=1 // pred_check_branch
      %24 = sbr.rel (0) target = $region9
    $region8: #{tpu_custom_call.1} parent=1 // pred_region
      _
    $region9: #{tpu_custom_call.1} parent=1 // pred_fallthru
      _
    // Predicated region
    $region10: #{tpu_custom_call.1} parent=1 // pred_check
      _
    $region11: #{tpu_custom_call.1} parent=1 // pred_check_branch
      %26 = sbr.rel (0) target = $region13
    $region12: #{tpu_custom_call.1} parent=1 // pred_region
      _
    $region13: #{tpu_custom_call.1} parent=1 // pred_fallthru
      _
    // Predicated region
    $region14: #{tpu_custom_call.1} parent=1 // pred_check
      _
    $region15: #{tpu_custom_call.1} parent=1 // pred_check_branch
      %28 = sbr.rel (0) target = $region17
    $region16: #{tpu_custom_call.1} parent=1 // pred_region
      _
    $region17: #{tpu_custom_call.1} parent=1 // pred_fallthru
      _
    // Predicated region
    $region18: #{tpu_custom_call.1} parent=1 // pred_check
      _
    $region19: #{tpu_custom_call.1} parent=1 // pred_check_branch
      %30 = sbr.rel (0) target = $region21
    $region20: #{tpu_custom_call.1} parent=1 // pred_region
      _
    $region21: #{tpu_custom_call.1} parent=1 // pred_fallthru
      _
    // Predicated region
    $region22: #{tpu_custom_call.1} parent=1 // pred_check
      _
    $region23: #{tpu_custom_call.1} parent=1 // pred_check_branch
      %32 = sbr.rel (0) target = $region25
    $region24: #{tpu_custom_call.1} parent=1 // pred_region
      %s34 = ssub.s32 512, 512
      %35 = vsyncadd [#allocation5], %s34
      %s36 = sshll.u32 [#allocation4], 4
      %s37 = int_to_ptr.vmem [resolvable:$true] %s36
      %42 = dma.hbm_to_vmem [thread:$0]  %s5, 512, %s37, [#allocation5], 128, 128, 8
    $region25: #{tpu_custom_call.1} parent=1 // pred_fallthru
      _
    // Predicated region
    $region26: #{tpu_custom_call.1} parent=1 // pred_check
      _
    $region27: #{tpu_custom_call.1} parent=1 // pred_check_branch
      %44 = sbr.rel (0) target = $region29
    $region28: #{tpu_custom_call.1} parent=1 // pred_region
      _
    $region29: #{tpu_custom_call.1} parent=1 // pred_fallthru
      _
    // Predicated region
    $region30: #{tpu_custom_call.1} parent=1 // pred_check
      _
    $region31: #{tpu_custom_call.1} parent=1 // pred_check_branch
      %46 = sbr.rel (0) target = $region33
    $region32: #{tpu_custom_call.1} parent=1 // pred_region
      %s48 = ssub.s32 512, 512
      %49 = vsyncadd [#allocation8], %s48
      %s50 = sshll.u32 [#allocation7], 4
      %s51 = int_to_ptr.vmem [resolvable:$true] %s50
      %56 = dma.hbm_to_vmem [thread:$0]  %s7, 512, %s51, [#allocation8], 128, 128, 8
    $region33: #{tpu_custom_call.1} parent=1 // pred_fallthru
      _
    // Predicated region
    $region34: #{tpu_custom_call.1} parent=1 // pred_check
      _
    $region35: #{tpu_custom_call.1} parent=1 // pred_check_branch
      %58 = sbr.rel (0) target = $region37
    $region36: #{tpu_custom_call.1} parent=1 // pred_region
      _
    $region37: #{tpu_custom_call.1} parent=1 // pred_fallthru
      _
    // Predicated region
    $region38: #{tpu_custom_call.1} parent=1 // pred_check
      _
    $region39: #{tpu_custom_call.1} parent=1 // pred_check_branch
      %60 = sbr.rel (0) target = $region41
    $region40: #{tpu_custom_call.1} parent=1 // pred_region
      %61 = dma.done [#allocation5], 512
    $region41: #{tpu_custom_call.1} parent=1 // pred_fallthru
      _
    // Predicated region
    $region42: #{tpu_custom_call.1} parent=1 // pred_check
      _
    $region43: #{tpu_custom_call.1} parent=1 // pred_check_branch
      %63 = sbr.rel (0) target = $region45
    $region44: #{tpu_custom_call.1} parent=1 // pred_region
      %64 = dma.done [#allocation8], 512
    $region45: #{tpu_custom_call.1} parent=1 // pred_fallthru
      _
    %v65 = vld [vmem:[%s0] sm:$0xff]
    %v66 = vld [vmem:[%s0 + $0x8] sm:$0xff]
    %v67 = vld [vmem:[%s0 + $0x10] sm:$0xff]
    %v68 = vld [vmem:[%s0 + $0x18] sm:$0xff]
    %v69 = vld [vmem:[%s0 + $0x20] sm:$0xff]
    %v70 = vld [vmem:[%s0 + $0x28] sm:$0xff]
    %v71 = vld [vmem:[%s0 + $0x30] sm:$0xff]
    %v72 = vld [vmem:[%s0 + $0x38] sm:$0xff]
    %v73 = vld [vmem:[%s1] sm:$0xff]
    %v74 = vld [vmem:[%s3] sm:$0x1]
    %v76 = vlaneseq
    %v77 = vshrl.u32 %v76, 7
    %v78 = vsub.s32 0, %v77
    %v79 = vrot.slane %v74, %v78
    %vm81 = vcmask 64512
    %v83 = vsel %vm81, %v65, 0
    %v86 = vsel %vm81, %v66, 0
    %v89 = vsel %vm81, %v67, 0
    %v92 = vsel %vm81, %v68, 0
    %v95 = vsel %vm81, %v69, 0
    %v98 = vsel %vm81, %v70, 0
    %v101 = vsel %vm81, %v71, 0
    %v104 = vsel %vm81, %v72, 0
    %106 = vmatprep.subr.mxu0 0.0
    %107 = vmatpush1.msra.mxu0 0.0
    %108 = vmatprep.subr.mxu0 0.0
    %109 = vmatpush1.msra.mxu0 0.0
    %110 = vmatprep.subr.mxu0 0.0
    %111 = vmatpush1.msra.mxu0 0.0
    %112 = vmatprep.subr.mxu0 0.0
    %113 = vmatpush1.msra.mxu0 0.0
    %114 = vmatprep.subr.mxu0 0.0
    %115 = vmatpush1.msra.mxu0 0.0
    %116 = vmatprep.subr.mxu0 0.0
    %117 = vmatpush1.msra.mxu0 0.0
    %118 = vmatprep.subr.mxu0 0.0
    %119 = vmatpush1.msra.mxu0 0.0
    %120 = vmatprep.subr.mxu0 0.0
    %121 = vmatpush1.msra.mxu0 0.0
    %122 = vmatprep.subr.mxu0 0.0
    %123 = vmatpush1.msra.mxu0 0.0
    %124 = vmatprep.subr.mxu0 0.0
    %125 = vmatpush1.msra.mxu0 0.0
    %126 = vmatprep.subr.mxu0 0.0
    %127 = vmatpush1.msra.mxu0 0.0
    %128 = vmatprep.subr.mxu0 0.0
    %129 = vmatpush1.msra.mxu0 0.0
    %130 = vmatprep.subr.mxu0 0.0
    %131 = vmatpush1.msra.mxu0 0.0
    %132 = vmatprep.subr.mxu0 0.0
    %133 = vmatpush1.msra.mxu0 0.0
    %134 = vmatprep.subr.mxu0 0.0
    %135 = vmatpush1.msra.mxu0 0.0
    %136 = vmatprep.subr.mxu0 0.0
    %137 = vmatpush1.msra.mxu0 %v73
    %138 = vmatprep.subr.mxu0 0.0
    %139 = vmatpush2.msra.mxu0 0.0
    %140 = vmatprep.subr.mxu0 0.0
    %141 = vmatpush2.msra.mxu0 0.0
    %142 = vmatprep.subr.mxu0 0.0
    %143 = vmatpush2.msra.mxu0 0.0
    %144 = vmatprep.subr.mxu0 0.0
    %145 = vmatpush2.msra.mxu0 0.0
    %146 = vmatprep.subr.mxu0 0.0
    %147 = vmatpush2.msra.mxu0 0.0
    %148 = vmatprep.subr.mxu0 0.0
    %149 = vmatpush2.msra.mxu0 0.0
    %150 = vmatprep.subr.mxu0 0.0
    %151 = vmatpush2.msra.mxu0 0.0
    %152 = vmatprep.subr.mxu0 0.0
    %153 = vmatpush2.msra.mxu0 0.0
    %154 = vmatprep.subr.mxu0 0.0
    %155 = vmatpush2.msra.mxu0 0.0
    %156 = vmatprep.subr.mxu0 0.0
    %157 = vmatpush2.msra.mxu0 0.0
    %158 = vmatprep.subr.mxu0 0.0
    %159 = vmatpush2.msra.mxu0 0.0
    %160 = vmatprep.subr.mxu0 0.0
    %161 = vmatpush2.msra.mxu0 0.0
    %162 = vmatprep.subr.mxu0 0.0
    %163 = vmatpush2.msra.mxu0 0.0
    %164 = vmatprep.subr.mxu0 0.0
    %165 = vmatpush2.msra.mxu0 0.0
    %166 = vmatprep.subr.mxu0 0.0
    %167 = vmatpush2.msra.mxu0 0.0
    %168 = vmatprep.subr.mxu0 0.0
    %169 = vmatpush2.msra.mxu0 0.0
    %170 = vmatprep.mubr.f32.mxu0 0.0
    %171 = vmatmul.mubr.f32.gmra.mxu0 %v83
    %v172 = vpop.f32.mrf.mxu0
    %v173 = vadd.f32 %v79, %v172
    %v174 = vpop.f32.mrf.mxu0
    %175 = vmatprep.mubr.f32.mxu0 0.0
    %176 = vmatmul.mubr.f32.gmra.mxu0 %v86
    %v177 = vpop.f32.mrf.mxu0
    %v178 = vadd.f32 %v79, %v177
    %v179 = vpop.f32.mrf.mxu0
    %180 = vmatprep.mubr.f32.mxu0 0.0
    %181 = vmatmul.mubr.f32.gmra.mxu0 %v89
    %v182 = vpop.f32.mrf.mxu0
    %v183 = vadd.f32 %v79, %v182
    %v184 = vpop.f32.mrf.mxu0
    %185 = vmatprep.mubr.f32.mxu0 0.0
    %186 = vmatmul.mubr.f32.gmra.mxu0 %v92
    %v187 = vpop.f32.mrf.mxu0
    %v188 = vadd.f32 %v79, %v187
    %v189 = vpop.f32.mrf.mxu0
    %190 = vmatprep.mubr.f32.mxu0 0.0
    %191 = vmatmul.mubr.f32.gmra.mxu0 %v95
    %v192 = vpop.f32.mrf.mxu0
    %v193 = vadd.f32 %v79, %v192
    %v194 = vpop.f32.mrf.mxu0
    %195 = vmatprep.mubr.f32.mxu0 0.0
    %196 = vmatmul.mubr.f32.gmra.mxu0 %v98
    %v197 = vpop.f32.mrf.mxu0
    %v198 = vadd.f32 %v79, %v197
    %v199 = vpop.f32.mrf.mxu0
    %200 = vmatprep.mubr.f32.mxu0 0.0
    %201 = vmatmul.mubr.f32.gmra.mxu0 %v101
    %v202 = vpop.f32.mrf.mxu0
    %v203 = vadd.f32 %v79, %v202
    %v204 = vpop.f32.mrf.mxu0
    %205 = vmatprep.mubr.f32.mxu0 0.0
    %206 = vmatmul.mubr.f32.gmra.mxu0 %v104
    %v207 = vpop.f32.mrf.mxu0
    %v208 = vadd.f32 %v79, %v207
    %v209 = vpop.f32.mrf.mxu0
    %210 = vdwg.mxu0
    %211 = vst [vmem:[#allocation2] sm:$0xff] %v173
    %212 = vst [vmem:[#allocation2 + $0x8] sm:$0xff] %v178
    %213 = vst [vmem:[#allocation2 + $0x10] sm:$0xff] %v183
    %214 = vst [vmem:[#allocation2 + $0x18] sm:$0xff] %v188
    %215 = vst [vmem:[#allocation2 + $0x20] sm:$0xff] %v193
    %216 = vst [vmem:[#allocation2 + $0x28] sm:$0xff] %v198
    %217 = vst [vmem:[#allocation2 + $0x30] sm:$0xff] %v203
    %218 = vst [vmem:[#allocation2 + $0x38] sm:$0xff] %v208
    %v219 = vld [vmem:[#allocation2] sm:$0xff]
    %v220 = vld [vmem:[%s2] sm:$0xff]
    %v221 = vld [vmem:[%s2 + $0x8] sm:$0xff]
    %v222 = vld [vmem:[%s2 + $0x10] sm:$0xff]
    %v223 = vld [vmem:[%s2 + $0x18] sm:$0xff]
    %vm224 = vcmask 261120
    %v226 = vsel %vm224, 0.0, 0
    %228 = vmatprep.subr.mxu0 0.0
    %229 = vmatpush1.msra.mxu0 0.0
    %230 = vmatprep.subr.mxu0 0.0
    %231 = vmatpush1.msra.mxu0 0.0
    %232 = vmatprep.subr.mxu0 0.0
    %233 = vmatpush1.msra.mxu0 0.0
    %234 = vmatprep.subr.mxu0 0.0
    %235 = vmatpush1.msra.mxu0 0.0
    %236 = vmatprep.subr.mxu0 0.0
    %237 = vmatpush1.msra.mxu0 0.0
    %238 = vmatprep.subr.mxu0 0.0
    %239 = vmatpush1.msra.mxu0 0.0
    %240 = vmatprep.subr.mxu0 0.0
    %241 = vmatpush1.msra.mxu0 0.0
    %242 = vmatprep.subr.mxu0 0.0
    %243 = vmatpush1.msra.mxu0 0.0
    %244 = vmatprep.subr.mxu0 0.0
    %245 = vmatpush1.msra.mxu0 0.0
    %246 = vmatprep.subr.mxu0 0.0
    %247 = vmatpush1.msra.mxu0 0.0
    %248 = vmatprep.subr.mxu0 0.0
    %249 = vmatpush1.msra.mxu0 0.0
    %250 = vmatprep.subr.mxu0 0.0
    %251 = vmatpush1.msra.mxu0 0.0
    %252 = vmatprep.subr.mxu0 0.0
    %253 = vmatpush1.msra.mxu0 %v223
    %254 = vmatprep.subr.mxu0 0.0
    %255 = vmatpush1.msra.mxu0 %v222
    %256 = vmatprep.subr.mxu0 0.0
    %257 = vmatpush1.msra.mxu0 %v221
    %258 = vmatprep.subr.mxu0 0.0
    %259 = vmatpush1.msra.mxu0 %v220
    %260 = vmatprep.subr.mxu0 0.0
    %261 = vmatpush2.msra.mxu0 0.0
    %262 = vmatprep.subr.mxu0 0.0
    %263 = vmatpush2.msra.mxu0 0.0
    %264 = vmatprep.subr.mxu0 0.0
    %265 = vmatpush2.msra.mxu0 0.0
    %266 = vmatprep.subr.mxu0 0.0
    %267 = vmatpush2.msra.mxu0 0.0
    %268 = vmatprep.subr.mxu0 0.0
    %269 = vmatpush2.msra.mxu0 0.0
    %270 = vmatprep.subr.mxu0 0.0
    %271 = vmatpush2.msra.mxu0 0.0
    %272 = vmatprep.subr.mxu0 0.0
    %273 = vmatpush2.msra.mxu0 0.0
    %274 = vmatprep.subr.mxu0 0.0
    %275 = vmatpush2.msra.mxu0 0.0
    %276 = vmatprep.subr.mxu0 0.0
    %277 = vmatpush2.msra.mxu0 0.0
    %278 = vmatprep.subr.mxu0 0.0
    %279 = vmatpush2.msra.mxu0 0.0
    %280 = vmatprep.subr.mxu0 0.0
    %281 = vmatpush2.msra.mxu0 0.0
    %282 = vmatprep.subr.mxu0 0.0
    %283 = vmatpush2.msra.mxu0 0.0
    %284 = vmatprep.subr.mxu0 0.0
    %285 = vmatpush2.msra.mxu0 0.0
    %286 = vmatprep.subr.mxu0 0.0
    %287 = vmatpush2.msra.mxu0 0.0
    %288 = vmatprep.subr.mxu0 0.0
    %289 = vmatpush2.msra.mxu0 0.0
    %290 = vmatprep.subr.mxu0 0.0
    %291 = vmatpush2.msra.mxu0 0.0
    %292 = vmatprep.mubr.f32.mxu0 0.0
    %293 = vmatmul.mubr.f32.gmra.mxu0 %v226
    %v294 = vpop.f32.mrf.mxu0
    %v295 = vadd.f32 0.0, %v294
    %v296 = vpop.f32.mrf.mxu0
    %297 = vdwg.mxu0
    %v298 = vadd.f32 %v219, %v295
    %v299 = vxor.u32 %v298, 2147483648
    %v300 = vmul.f32 %v299, 1.442695
    %v301 = vpow.pop %v300
    %v302 = vadd.f32 %v301, 1.0
    %v303 = vrcp.pop %v302
    %v304 = vmul.f32 1.0, %v303
    %v305 = vtanh.pop %v298
    %v306 = vmul.f32 %v304, 0.0
    %308 = vrot.lane.b32.xlu0 %v305, 64
    %v309 = vpop.permute.xlu0 %308
    %v311 = vmul.f32 %v304, %v309
    %313 = vrot.lane.b32.xlu0 %v311, 32
    %v314 = vpop.permute.xlu0 %313
    %v316 = vadd.f32 %v306, %v314
    %v317 = vtanh.pop %v316
    %319 = vrot.lane.b32.xlu0 %v317, 64
    %v320 = vpop.permute.xlu0 %319
    %v322 = vmul.f32 %v304, %v320
    %324 = vrot.lane.b32.xlu0 %v322, 32
    %v325 = vpop.permute.xlu0 %324
    %327 = vst.msk [vmem:[#allocation3] sm:$0xff] %vm224, %v325
    %s328 = scalar_lea.vmem [#allocation2], 8
    %v329 = vld [vmem:[%s328] sm:$0xff]
    %v330 = vld [vmem:[%s2] sm:$0xff]
    %v331 = vld [vmem:[%s2 + $0x8] sm:$0xff]
    %v332 = vld [vmem:[%s2 + $0x10] sm:$0xff]
    %v333 = vld [vmem:[%s2 + $0x18] sm:$0xff]
    %v334 = vsel %vm224, %v325, 0
    %336 = vmatprep.subr.mxu0 0.0
    %337 = vmatpush1.msra.mxu0 0.0
    %338 = vmatprep.subr.mxu0 0.0
    %339 = vmatpush1.msra.mxu0 0.0
    %340 = vmatprep.subr.mxu0 0.0
    %341 = vmatpush1.msra.mxu0 0.0
    %342 = vmatprep.subr.mxu0 0.0
    %343 = vmatpush1.msra.mxu0 0.0
    %344 = vmatprep.subr.mxu0 0.0
    %345 = vmatpush1.msra.mxu0 0.0
    %346 = vmatprep.subr.mxu0 0.0
    %347 = vmatpush1.msra.mxu0 0.0
    %348 = vmatprep.subr.mxu0 0.0
    %349 = vmatpush1.msra.mxu0 0.0
    %350 = vmatprep.subr.mxu0 0.0
    %351 = vmatpush1.msra.mxu0 0.0
    %352 = vmatprep.subr.mxu0 0.0
    %353 = vmatpush1.msra.mxu0 0.0
    %354 = vmatprep.subr.mxu0 0.0
    %355 = vmatpush1.msra.mxu0 0.0
    %356 = vmatprep.subr.mxu0 0.0
    %357 = vmatpush1.msra.mxu0 0.0
    %358 = vmatprep.subr.mxu0 0.0
    %359 = vmatpush1.msra.mxu0 0.0
    %360 = vmatprep.subr.mxu0 0.0
    %361 = vmatpush1.msra.mxu0 %v333
    %362 = vmatprep.subr.mxu0 0.0
    %363 = vmatpush1.msra.mxu0 %v332
    %364 = vmatprep.subr.mxu0 0.0
    %365 = vmatpush1.msra.mxu0 %v331
    %366 = vmatprep.subr.mxu0 0.0
    %367 = vmatpush1.msra.mxu0 %v330
    %368 = vmatprep.subr.mxu0 0.0
    %369 = vmatpush2.msra.mxu0 0.0
    %370 = vmatprep.subr.mxu0 0.0
    %371 = vmatpush2.msra.mxu0 0.0
    %372 = vmatprep.subr.mxu0 0.0
    %373 = vmatpush2.msra.mxu0 0.0
    %374 = vmatprep.subr.mxu0 0.0
    %375 = vmatpush2.msra.mxu0 0.0
    %376 = vmatprep.subr.mxu0 0.0
    %377 = vmatpush2.msra.mxu0 0.0
    %378 = vmatprep.subr.mxu0 0.0
    %379 = vmatpush2.msra.mxu0 0.0
    %380 = vmatprep.subr.mxu0 0.0
    %381 = vmatpush2.msra.mxu0 0.0
    %382 = vmatprep.subr.mxu0 0.0
    %383 = vmatpush2.msra.mxu0 0.0
    %384 = vmatprep.subr.mxu0 0.0
    %385 = vmatpush2.msra.mxu0 0.0
    %386 = vmatprep.subr.mxu0 0.0
    %387 = vmatpush2.msra.mxu0 0.0
    %388 = vmatprep.subr.mxu0 0.0
    %389 = vmatpush2.msra.mxu0 0.0
    %390 = vmatprep.subr.mxu0 0.0
    %391 = vmatpush2.msra.mxu0 0.0
    %392 = vmatprep.subr.mxu0 0.0
    %393 = vmatpush2.msra.mxu0 0.0
    %394 = vmatprep.subr.mxu0 0.0
    %395 = vmatpush2.msra.mxu0 0.0
    %396 = vmatprep.subr.mxu0 0.0
    %397 = vmatpush2.msra.mxu0 0.0
    %398 = vmatprep.subr.mxu0 0.0
    %399 = vmatpush2.msra.mxu0 0.0
    %400 = vmatprep.mubr.f32.mxu0 0.0
    %401 = vmatmul.mubr.f32.gmra.mxu0 %v334
    %v402 = vpop.f32.mrf.mxu0
    %v403 = vadd.f32 0.0, %v402
    %v404 = vpop.f32.mrf.mxu0
    %405 = vdwg.mxu0
    %v406 = vadd.f32 %v329, %v403
    %v407 = vxor.u32 %v406, 2147483648
    %v408 = vmul.f32 %v407, 1.442695
    %v409 = vpow.pop %v408
    %v410 = vadd.f32 %v409, 1.0
    %v411 = vrcp.pop %v410
    %v412 = vmul.f32 1.0, %v411
    %v413 = vtanh.pop %v406
    %v414 = vmul.f32 %v412, %v316
    %416 = vrot.lane.b32.xlu0 %v413, 64
    %v417 = vpop.permute.xlu0 %416
    %v419 = vmul.f32 %v412, %v417
    %421 = vrot.lane.b32.xlu0 %v419, 32
    %v422 = vpop.permute.xlu0 %421
    %v424 = vadd.f32 %v414, %v422
    %v425 = vtanh.pop %v424
    %427 = vrot.lane.b32.xlu0 %v425, 64
    %v428 = vpop.permute.xlu0 %427
    %v430 = vmul.f32 %v412, %v428
    %432 = vrot.lane.b32.xlu0 %v430, 32
    %v433 = vpop.permute.xlu0 %432
    %s435 = scalar_lea.vmem [#allocation3], 8
    %436 = vst.msk [vmem:[%s435] sm:$0xff] %vm224, %v433
    %s437 = scalar_lea.vmem [#allocation2], 16
    %v438 = vld [vmem:[%s437] sm:$0xff]
    %v439 = vld [vmem:[%s2] sm:$0xff]
    %v440 = vld [vmem:[%s2 + $0x8] sm:$0xff]
    %v441 = vld [vmem:[%s2 + $0x10] sm:$0xff]
    %v442 = vld [vmem:[%s2 + $0x18] sm:$0xff]
    %v443 = vsel %vm224, %v433, 0
    %445 = vmatprep.subr.mxu0 0.0
    %446 = vmatpush1.msra.mxu0 0.0
    %447 = vmatprep.subr.mxu0 0.0
    %448 = vmatpush1.msra.mxu0 0.0
    %449 = vmatprep.subr.mxu0 0.0
    %450 = vmatpush1.msra.mxu0 0.0
    %451 = vmatprep.subr.mxu0 0.0
    %452 = vmatpush1.msra.mxu0 0.0
    %453 = vmatprep.subr.mxu0 0.0
    %454 = vmatpush1.msra.mxu0 0.0
    %455 = vmatprep.subr.mxu0 0.0
    %456 = vmatpush1.msra.mxu0 0.0
    %457 = vmatprep.subr.mxu0 0.0
    %458 = vmatpush1.msra.mxu0 0.0
    %459 = vmatprep.subr.mxu0 0.0
    %460 = vmatpush1.msra.mxu0 0.0
    %461 = vmatprep.subr.mxu0 0.0
    %462 = vmatpush1.msra.mxu0 0.0
    %463 = vmatprep.subr.mxu0 0.0
    %464 = vmatpush1.msra.mxu0 0.0
    %465 = vmatprep.subr.mxu0 0.0
    %466 = vmatpush1.msra.mxu0 0.0
    %467 = vmatprep.subr.mxu0 0.0
    %468 = vmatpush1.msra.mxu0 0.0
    %469 = vmatprep.subr.mxu0 0.0
    %470 = vmatpush1.msra.mxu0 %v442
    %471 = vmatprep.subr.mxu0 0.0
    %472 = vmatpush1.msra.mxu0 %v441
    %473 = vmatprep.subr.mxu0 0.0
    %474 = vmatpush1.msra.mxu0 %v440
    %475 = vmatprep.subr.mxu0 0.0
    %476 = vmatpush1.msra.mxu0 %v439
    %477 = vmatprep.subr.mxu0 0.0
    %478 = vmatpush2.msra.mxu0 0.0
    %479 = vmatprep.subr.mxu0 0.0
    %480 = vmatpush2.msra.mxu0 0.0
    %481 = vmatprep.subr.mxu0 0.0
    %482 = vmatpush2.msra.mxu0 0.0
    %483 = vmatprep.subr.mxu0 0.0
    %484 = vmatpush2.msra.mxu0 0.0
    %485 = vmatprep.subr.mxu0 0.0
    %486 = vmatpush2.msra.mxu0 0.0
    %487 = vmatprep.subr.mxu0 0.0
    %488 = vmatpush2.msra.mxu0 0.0
    %489 = vmatprep.subr.mxu0 0.0
    %490 = vmatpush2.msra.mxu0 0.0
    %491 = vmatprep.subr.mxu0 0.0
    %492 = vmatpush2.msra.mxu0 0.0
    %493 = vmatprep.subr.mxu0 0.0
    %494 = vmatpush2.msra.mxu0 0.0
    %495 = vmatprep.subr.mxu0 0.0
    %496 = vmatpush2.msra.mxu0 0.0
    %497 = vmatprep.subr.mxu0 0.0
    %498 = vmatpush2.msra.mxu0 0.0
    %499 = vmatprep.subr.mxu0 0.0
    %500 = vmatpush2.msra.mxu0 0.0
    %501 = vmatprep.subr.mxu0 0.0
    %502 = vmatpush2.msra.mxu0 0.0
    %503 = vmatprep.subr.mxu0 0.0
    %504 = vmatpush2.msra.mxu0 0.0
    %505 = vmatprep.subr.mxu0 0.0
    %506 = vmatpush2.msra.mxu0 0.0
    %507 = vmatprep.subr.mxu0 0.0
    %508 = vmatpush2.msra.mxu0 0.0
    %509 = vmatprep.mubr.f32.mxu0 0.0
    %510 = vmatmul.mubr.f32.gmra.mxu0 %v443
    %v511 = vpop.f32.mrf.mxu0
    %v512 = vadd.f32 0.0, %v511
    %v513 = vpop.f32.mrf.mxu0
    %514 = vdwg.mxu0
    %v515 = vadd.f32 %v438, %v512
    %v516 = vxor.u32 %v515, 2147483648
    %v517 = vmul.f32 %v516, 1.442695
    %v518 = vpow.pop %v517
    %v519 = vadd.f32 %v518, 1.0
    %v520 = vrcp.pop %v519
    %v521 = vmul.f32 1.0, %v520
    %v522 = vtanh.pop %v515
    %v523 = vmul.f32 %v521, %v424
    %525 = vrot.lane.b32.xlu0 %v522, 64
    %v526 = vpop.permute.xlu0 %525
    %v528 = vmul.f32 %v521, %v526
    %530 = vrot.lane.b32.xlu0 %v528, 32
    %v531 = vpop.permute.xlu0 %530
    %v533 = vadd.f32 %v523, %v531
    %v534 = vtanh.pop %v533
    %536 = vrot.lane.b32.xlu0 %v534, 64
    %v537 = vpop.permute.xlu0 %536
    %v539 = vmul.f32 %v521, %v537
    %541 = vrot.lane.b32.xlu0 %v539, 32
    %v542 = vpop.permute.xlu0 %541
    %s544 = scalar_lea.vmem [#allocation3], 16
    %545 = vst.msk [vmem:[%s544] sm:$0xff] %vm224, %v542
    %s546 = scalar_lea.vmem [#allocation2], 24
    %v547 = vld [vmem:[%s546] sm:$0xff]
    %v548 = vld [vmem:[%s2] sm:$0xff]
    %v549 = vld [vmem:[%s2 + $0x8] sm:$0xff]
    %v550 = vld [vmem:[%s2 + $0x10] sm:$0xff]
    %v551 = vld [vmem:[%s2 + $0x18] sm:$0xff]
    %v552 = vsel %vm224, %v542, 0
    %554 = vmatprep.subr.mxu0 0.0
    %555 = vmatpush1.msra.mxu0 0.0
    %556 = vmatprep.subr.mxu0 0.0
    %557 = vmatpush1.msra.mxu0 0.0
    %558 = vmatprep.subr.mxu0 0.0
    %559 = vmatpush1.msra.mxu0 0.0
    %560 = vmatprep.subr.mxu0 0.0
    %561 = vmatpush1.msra.mxu0 0.0
    %562 = vmatprep.subr.mxu0 0.0
    %563 = vmatpush1.msra.mxu0 0.0
    %564 = vmatprep.subr.mxu0 0.0
    %565 = vmatpush1.msra.mxu0 0.0
    %566 = vmatprep.subr.mxu0 0.0
    %567 = vmatpush1.msra.mxu0 0.0
    %568 = vmatprep.subr.mxu0 0.0
    %569 = vmatpush1.msra.mxu0 0.0
    %570 = vmatprep.subr.mxu0 0.0
    %571 = vmatpush1.msra.mxu0 0.0
    %572 = vmatprep.subr.mxu0 0.0
    %573 = vmatpush1.msra.mxu0 0.0
    %574 = vmatprep.subr.mxu0 0.0
    %575 = vmatpush1.msra.mxu0 0.0
    %576 = vmatprep.subr.mxu0 0.0
    %577 = vmatpush1.msra.mxu0 0.0
    %578 = vmatprep.subr.mxu0 0.0
    %579 = vmatpush1.msra.mxu0 %v551
    %580 = vmatprep.subr.mxu0 0.0
    %581 = vmatpush1.msra.mxu0 %v550
    %582 = vmatprep.subr.mxu0 0.0
    %583 = vmatpush1.msra.mxu0 %v549
    %584 = vmatprep.subr.mxu0 0.0
    %585 = vmatpush1.msra.mxu0 %v548
    %586 = vmatprep.subr.mxu0 0.0
    %587 = vmatpush2.msra.mxu0 0.0
    %588 = vmatprep.subr.mxu0 0.0
    %589 = vmatpush2.msra.mxu0 0.0
    %590 = vmatprep.subr.mxu0 0.0
    %591 = vmatpush2.msra.mxu0 0.0
    %592 = vmatprep.subr.mxu0 0.0
    %593 = vmatpush2.msra.mxu0 0.0
    %594 = vmatprep.subr.mxu0 0.0
    %595 = vmatpush2.msra.mxu0 0.0
    %596 = vmatprep.subr.mxu0 0.0
    %597 = vmatpush2.msra.mxu0 0.0
    %598 = vmatprep.subr.mxu0 0.0
    %599 = vmatpush2.msra.mxu0 0.0
    %600 = vmatprep.subr.mxu0 0.0
    %601 = vmatpush2.msra.mxu0 0.0
    %602 = vmatprep.subr.mxu0 0.0
    %603 = vmatpush2.msra.mxu0 0.0
    %604 = vmatprep.subr.mxu0 0.0
    %605 = vmatpush2.msra.mxu0 0.0
    %606 = vmatprep.subr.mxu0 0.0
    %607 = vmatpush2.msra.mxu0 0.0
    %608 = vmatprep.subr.mxu0 0.0
    %609 = vmatpush2.msra.mxu0 0.0
    %610 = vmatprep.subr.mxu0 0.0
    %611 = vmatpush2.msra.mxu0 0.0
    %612 = vmatprep.subr.mxu0 0.0
    %613 = vmatpush2.msra.mxu0 0.0
    %614 = vmatprep.subr.mxu0 0.0
    %615 = vmatpush2.msra.mxu0 0.0
    %616 = vmatprep.subr.mxu0 0.0
    %617 = vmatpush2.msra.mxu0 0.0
    %618 = vmatprep.mubr.f32.mxu0 0.0
    %619 = vmatmul.mubr.f32.gmra.mxu0 %v552
    %v620 = vpop.f32.mrf.mxu0
    %v621 = vadd.f32 0.0, %v620
    %v622 = vpop.f32.mrf.mxu0
    %623 = vdwg.mxu0
    %v624 = vadd.f32 %v547, %v621
    %v625 = vxor.u32 %v624, 2147483648
    %v626 = vmul.f32 %v625, 1.442695
    %v627 = vpow.pop %v626
    %v628 = vadd.f32 %v627, 1.0
    %v629 = vrcp.pop %v628
    %v630 = vmul.f32 1.0, %v629
    %v631 = vtanh.pop %v624
    %v632 = vmul.f32 %v630, %v533
    %634 = vrot.lane.b32.xlu0 %v631, 64
    %v635 = vpop.permute.xlu0 %634
    %v637 = vmul.f32 %v630, %v635
    %639 = vrot.lane.b32.xlu0 %v637, 32
    %v640 = vpop.permute.xlu0 %639
    %v642 = vadd.f32 %v632, %v640
    %v643 = vtanh.pop %v642
    %645 = vrot.lane.b32.xlu0 %v643, 64
    %v646 = vpop.permute.xlu0 %645
    %v648 = vmul.f32 %v630, %v646
    %650 = vrot.lane.b32.xlu0 %v648, 32
    %v651 = vpop.permute.xlu0 %650
    %s653 = scalar_lea.vmem [#allocation3], 24
    %654 = vst.msk [vmem:[%s653] sm:$0xff] %vm224, %v651
    %s655 = scalar_lea.vmem [#allocation2], 32
    %v656 = vld [vmem:[%s655] sm:$0xff]
    %v657 = vld [vmem:[%s2] sm:$0xff]
    %v658 = vld [vmem:[%s2 + $0x8] sm:$0xff]
    %v659 = vld [vmem:[%s2 + $0x10] sm:$0xff]
    %v660 = vld [vmem:[%s2 + $0x18] sm:$0xff]
    %v661 = vsel %vm224, %v651, 0
    %663 = vmatprep.subr.mxu0 0.0
    %664 = vmatpush1.msra.mxu0 0.0
    %665 = vmatprep.subr.mxu0 0.0
    %666 = vmatpush1.msra.mxu0 0.0
    %667 = vmatprep.subr.mxu0 0.0
    %668 = vmatpush1.msra.mxu0 0.0
    %669 = vmatprep.subr.mxu0 0.0
    %670 = vmatpush1.msra.mxu0 0.0
    %671 = vmatprep.subr.mxu0 0.0
    %672 = vmatpush1.msra.mxu0 0.0
    %673 = vmatprep.subr.mxu0 0.0
    %674 = vmatpush1.msra.mxu0 0.0
    %675 = vmatprep.subr.mxu0 0.0
    %676 = vmatpush1.msra.mxu0 0.0
    %677 = vmatprep.subr.mxu0 0.0
    %678 = vmatpush1.msra.mxu0 0.0
    %679 = vmatprep.subr.mxu0 0.0
    %680 = vmatpush1.msra.mxu0 0.0
    %681 = vmatprep.subr.mxu0 0.0
    %682 = vmatpush1.msra.mxu0 0.0
    %683 = vmatprep.subr.mxu0 0.0
    %684 = vmatpush1.msra.mxu0 0.0
    %685 = vmatprep.subr.mxu0 0.0
    %686 = vmatpush1.msra.mxu0 0.0
    %687 = vmatprep.subr.mxu0 0.0
    %688 = vmatpush1.msra.mxu0 %v660
    %689 = vmatprep.subr.mxu0 0.0
    %690 = vmatpush1.msra.mxu0 %v659
    %691 = vmatprep.subr.mxu0 0.0
    %692 = vmatpush1.msra.mxu0 %v658
    %693 = vmatprep.subr.mxu0 0.0
    %694 = vmatpush1.msra.mxu0 %v657
    %695 = vmatprep.subr.mxu0 0.0
    %696 = vmatpush2.msra.mxu0 0.0
    %697 = vmatprep.subr.mxu0 0.0
    %698 = vmatpush2.msra.mxu0 0.0
    %699 = vmatprep.subr.mxu0 0.0
    %700 = vmatpush2.msra.mxu0 0.0
    %701 = vmatprep.subr.mxu0 0.0
    %702 = vmatpush2.msra.mxu0 0.0
    %703 = vmatprep.subr.mxu0 0.0
    %704 = vmatpush2.msra.mxu0 0.0
    %705 = vmatprep.subr.mxu0 0.0
    %706 = vmatpush2.msra.mxu0 0.0
    %707 = vmatprep.subr.mxu0 0.0
    %708 = vmatpush2.msra.mxu0 0.0
    %709 = vmatprep.subr.mxu0 0.0
    %710 = vmatpush2.msra.mxu0 0.0
    %711 = vmatprep.subr.mxu0 0.0
    %712 = vmatpush2.msra.mxu0 0.0
    %713 = vmatprep.subr.mxu0 0.0
    %714 = vmatpush2.msra.mxu0 0.0
    %715 = vmatprep.subr.mxu0 0.0
    %716 = vmatpush2.msra.mxu0 0.0
    %717 = vmatprep.subr.mxu0 0.0
    %718 = vmatpush2.msra.mxu0 0.0
    %719 = vmatprep.subr.mxu0 0.0
    %720 = vmatpush2.msra.mxu0 0.0
    %721 = vmatprep.subr.mxu0 0.0
    %722 = vmatpush2.msra.mxu0 0.0
    %723 = vmatprep.subr.mxu0 0.0
    %724 = vmatpush2.msra.mxu0 0.0
    %725 = vmatprep.subr.mxu0 0.0
    %726 = vmatpush2.msra.mxu0 0.0
    %727 = vmatprep.mubr.f32.mxu0 0.0
    %728 = vmatmul.mubr.f32.gmra.mxu0 %v661
    %v729 = vpop.f32.mrf.mxu0
    %v730 = vadd.f32 0.0, %v729
    %v731 = vpop.f32.mrf.mxu0
    %732 = vdwg.mxu0
    %v733 = vadd.f32 %v656, %v730
    %v734 = vxor.u32 %v733, 2147483648
    %v735 = vmul.f32 %v734, 1.442695
    %v736 = vpow.pop %v735
    %v737 = vadd.f32 %v736, 1.0
    %v738 = vrcp.pop %v737
    %v739 = vmul.f32 1.0, %v738
    %v740 = vtanh.pop %v733
    %v741 = vmul.f32 %v739, %v642
    %743 = vrot.lane.b32.xlu0 %v740, 64
    %v744 = vpop.permute.xlu0 %743
    %v746 = vmul.f32 %v739, %v744
    %748 = vrot.lane.b32.xlu0 %v746, 32
    %v749 = vpop.permute.xlu0 %748
    %v751 = vadd.f32 %v741, %v749
    %v752 = vtanh.pop %v751
    %754 = vrot.lane.b32.xlu0 %v752, 64
    %v755 = vpop.permute.xlu0 %754
    %v757 = vmul.f32 %v739, %v755
    %759 = vrot.lane.b32.xlu0 %v757, 32
    %v760 = vpop.permute.xlu0 %759
    %s762 = scalar_lea.vmem [#allocation3], 32
    %763 = vst.msk [vmem:[%s762] sm:$0xff] %vm224, %v760
    %s764 = scalar_lea.vmem [#allocation2], 40
    %v765 = vld [vmem:[%s764] sm:$0xff]
    %v766 = vld [vmem:[%s2] sm:$0xff]
    %v767 = vld [vmem:[%s2 + $0x8] sm:$0xff]
    %v768 = vld [vmem:[%s2 + $0x10] sm:$0xff]
    %v769 = vld [vmem:[%s2 + $0x18] sm:$0xff]
    %v770 = vsel %vm224, %v760, 0
    %772 = vmatprep.subr.mxu0 0.0
    %773 = vmatpush1.msra.mxu0 0.0
    %774 = vmatprep.subr.mxu0 0.0
    %775 = vmatpush1.msra.mxu0 0.0
    %776 = vmatprep.subr.mxu0 0.0
    %777 = vmatpush1.msra.mxu0 0.0
    %778 = vmatprep.subr.mxu0 0.0
    %779 = vmatpush1.msra.mxu0 0.0
    %780 = vmatprep.subr.mxu0 0.0
    %781 = vmatpush1.msra.mxu0 0.0
    %782 = vmatprep.subr.mxu0 0.0
    %783 = vmatpush1.msra.mxu0 0.0
    %784 = vmatprep.subr.mxu0 0.0
    %785 = vmatpush1.msra.mxu0 0.0
    %786 = vmatprep.subr.mxu0 0.0
    %787 = vmatpush1.msra.mxu0 0.0
    %788 = vmatprep.subr.mxu0 0.0
    %789 = vmatpush1.msra.mxu0 0.0
    %790 = vmatprep.subr.mxu0 0.0
    %791 = vmatpush1.msra.mxu0 0.0
    %792 = vmatprep.subr.mxu0 0.0
    %793 = vmatpush1.msra.mxu0 0.0
    %794 = vmatprep.subr.mxu0 0.0
    %795 = vmatpush1.msra.mxu0 0.0
    %796 = vmatprep.subr.mxu0 0.0
    %797 = vmatpush1.msra.mxu0 %v769
    %798 = vmatprep.subr.mxu0 0.0
    %799 = vmatpush1.msra.mxu0 %v768
    %800 = vmatprep.subr.mxu0 0.0
    %801 = vmatpush1.msra.mxu0 %v767
    %802 = vmatprep.subr.mxu0 0.0
    %803 = vmatpush1.msra.mxu0 %v766
    %804 = vmatprep.subr.mxu0 0.0
    %805 = vmatpush2.msra.mxu0 0.0
    %806 = vmatprep.subr.mxu0 0.0
    %807 = vmatpush2.msra.mxu0 0.0
    %808 = vmatprep.subr.mxu0 0.0
    %809 = vmatpush2.msra.mxu0 0.0
    %810 = vmatprep.subr.mxu0 0.0
    %811 = vmatpush2.msra.mxu0 0.0
    %812 = vmatprep.subr.mxu0 0.0
    %813 = vmatpush2.msra.mxu0 0.0
    %814 = vmatprep.subr.mxu0 0.0
    %815 = vmatpush2.msra.mxu0 0.0
    %816 = vmatprep.subr.mxu0 0.0
    %817 = vmatpush2.msra.mxu0 0.0
    %818 = vmatprep.subr.mxu0 0.0
    %819 = vmatpush2.msra.mxu0 0.0
    %820 = vmatprep.subr.mxu0 0.0
    %821 = vmatpush2.msra.mxu0 0.0
    %822 = vmatprep.subr.mxu0 0.0
    %823 = vmatpush2.msra.mxu0 0.0
    %824 = vmatprep.subr.mxu0 0.0
    %825 = vmatpush2.msra.mxu0 0.0
    %826 = vmatprep.subr.mxu0 0.0
    %827 = vmatpush2.msra.mxu0 0.0
    %828 = vmatprep.subr.mxu0 0.0
    %829 = vmatpush2.msra.mxu0 0.0
    %830 = vmatprep.subr.mxu0 0.0
    %831 = vmatpush2.msra.mxu0 0.0
    %832 = vmatprep.subr.mxu0 0.0
    %833 = vmatpush2.msra.mxu0 0.0
    %834 = vmatprep.subr.mxu0 0.0
    %835 = vmatpush2.msra.mxu0 0.0
    %836 = vmatprep.mubr.f32.mxu0 0.0
    %837 = vmatmul.mubr.f32.gmra.mxu0 %v770
    %v838 = vpop.f32.mrf.mxu0
    %v839 = vadd.f32 0.0, %v838
    %v840 = vpop.f32.mrf.mxu0
    %841 = vdwg.mxu0
    %v842 = vadd.f32 %v765, %v839
    %v843 = vxor.u32 %v842, 2147483648
    %v844 = vmul.f32 %v843, 1.442695
    %v845 = vpow.pop %v844
    %v846 = vadd.f32 %v845, 1.0
    %v847 = vrcp.pop %v846
    %v848 = vmul.f32 1.0, %v847
    %v849 = vtanh.pop %v842
    %v850 = vmul.f32 %v848, %v751
    %852 = vrot.lane.b32.xlu0 %v849, 64
    %v853 = vpop.permute.xlu0 %852
    %v855 = vmul.f32 %v848, %v853
    %857 = vrot.lane.b32.xlu0 %v855, 32
    %v858 = vpop.permute.xlu0 %857
    %v860 = vadd.f32 %v850, %v858
    %v861 = vtanh.pop %v860
    %863 = vrot.lane.b32.xlu0 %v861, 64
    %v864 = vpop.permute.xlu0 %863
    %v866 = vmul.f32 %v848, %v864
    %868 = vrot.lane.b32.xlu0 %v866, 32
    %v869 = vpop.permute.xlu0 %868
    %s871 = scalar_lea.vmem [#allocation3], 40
    %872 = vst.msk [vmem:[%s871] sm:$0xff] %vm224, %v869
    %s873 = scalar_lea.vmem [#allocation2], 48
    %v874 = vld [vmem:[%s873] sm:$0xff]
    %v875 = vld [vmem:[%s2] sm:$0xff]
    %v876 = vld [vmem:[%s2 + $0x8] sm:$0xff]
    %v877 = vld [vmem:[%s2 + $0x10] sm:$0xff]
    %v878 = vld [vmem:[%s2 + $0x18] sm:$0xff]
    %v879 = vsel %vm224, %v869, 0
    %881 = vmatprep.subr.mxu0 0.0
    %882 = vmatpush1.msra.mxu0 0.0
    %883 = vmatprep.subr.mxu0 0.0
    %884 = vmatpush1.msra.mxu0 0.0
    %885 = vmatprep.subr.mxu0 0.0
    %886 = vmatpush1.msra.mxu0 0.0
    %887 = vmatprep.subr.mxu0 0.0
    %888 = vmatpush1.msra.mxu0 0.0
    %889 = vmatprep.subr.mxu0 0.0
    %890 = vmatpush1.msra.mxu0 0.0
    %891 = vmatprep.subr.mxu0 0.0
    %892 = vmatpush1.msra.mxu0 0.0
    %893 = vmatprep.subr.mxu0 0.0
    %894 = vmatpush1.msra.mxu0 0.0
    %895 = vmatprep.subr.mxu0 0.0
    %896 = vmatpush1.msra.mxu0 0.0
    %897 = vmatprep.subr.mxu0 0.0
    %898 = vmatpush1.msra.mxu0 0.0
    %899 = vmatprep.subr.mxu0 0.0
    %900 = vmatpush1.msra.mxu0 0.0
    %901 = vmatprep.subr.mxu0 0.0
    %902 = vmatpush1.msra.mxu0 0.0
    %903 = vmatprep.subr.mxu0 0.0
    %904 = vmatpush1.msra.mxu0 0.0
    %905 = vmatprep.subr.mxu0 0.0
    %906 = vmatpush1.msra.mxu0 %v878
    %907 = vmatprep.subr.mxu0 0.0
    %908 = vmatpush1.msra.mxu0 %v877
    %909 = vmatprep.subr.mxu0 0.0
    %910 = vmatpush1.msra.mxu0 %v876
    %911 = vmatprep.subr.mxu0 0.0
    %912 = vmatpush1.msra.mxu0 %v875
    %913 = vmatprep.subr.mxu0 0.0
    %914 = vmatpush2.msra.mxu0 0.0
    %915 = vmatprep.subr.mxu0 0.0
    %916 = vmatpush2.msra.mxu0 0.0
    %917 = vmatprep.subr.mxu0 0.0
    %918 = vmatpush2.msra.mxu0 0.0
    %919 = vmatprep.subr.mxu0 0.0
    %920 = vmatpush2.msra.mxu0 0.0
    %921 = vmatprep.subr.mxu0 0.0
    %922 = vmatpush2.msra.mxu0 0.0
    %923 = vmatprep.subr.mxu0 0.0
    %924 = vmatpush2.msra.mxu0 0.0
    %925 = vmatprep.subr.mxu0 0.0
    %926 = vmatpush2.msra.mxu0 0.0
    %927 = vmatprep.subr.mxu0 0.0
    %928 = vmatpush2.msra.mxu0 0.0
    %929 = vmatprep.subr.mxu0 0.0
    %930 = vmatpush2.msra.mxu0 0.0
    %931 = vmatprep.subr.mxu0 0.0
    %932 = vmatpush2.msra.mxu0 0.0
    %933 = vmatprep.subr.mxu0 0.0
    %934 = vmatpush2.msra.mxu0 0.0
    %935 = vmatprep.subr.mxu0 0.0
    %936 = vmatpush2.msra.mxu0 0.0
    %937 = vmatprep.subr.mxu0 0.0
    %938 = vmatpush2.msra.mxu0 0.0
    %939 = vmatprep.subr.mxu0 0.0
    %940 = vmatpush2.msra.mxu0 0.0
    %941 = vmatprep.subr.mxu0 0.0
    %942 = vmatpush2.msra.mxu0 0.0
    %943 = vmatprep.subr.mxu0 0.0
    %944 = vmatpush2.msra.mxu0 0.0
    %945 = vmatprep.mubr.f32.mxu0 0.0
    %946 = vmatmul.mubr.f32.gmra.mxu0 %v879
    %v947 = vpop.f32.mrf.mxu0
    %v948 = vadd.f32 0.0, %v947
    %v949 = vpop.f32.mrf.mxu0
    %950 = vdwg.mxu0
    %v951 = vadd.f32 %v874, %v948
    %v952 = vxor.u32 %v951, 2147483648
    %v953 = vmul.f32 %v952, 1.442695
    %v954 = vpow.pop %v953
    %v955 = vadd.f32 %v954, 1.0
    %v956 = vrcp.pop %v955
    %v957 = vmul.f32 1.0, %v956
    %v958 = vtanh.pop %v951
    %v959 = vmul.f32 %v957, %v860
    %961 = vrot.lane.b32.xlu0 %v958, 64
    %v962 = vpop.permute.xlu0 %961
    %v964 = vmul.f32 %v957, %v962
    %966 = vrot.lane.b32.xlu0 %v964, 32
    %v967 = vpop.permute.xlu0 %966
    %v969 = vadd.f32 %v959, %v967
    %v970 = vtanh.pop %v969
    %972 = vrot.lane.b32.xlu0 %v970, 64
    %v973 = vpop.permute.xlu0 %972
    %v975 = vmul.f32 %v957, %v973
    %977 = vrot.lane.b32.xlu0 %v975, 32
    %v978 = vpop.permute.xlu0 %977
    %s980 = scalar_lea.vmem [#allocation3], 48
    %981 = vst.msk [vmem:[%s980] sm:$0xff] %vm224, %v978
    %s982 = scalar_lea.vmem [#allocation2], 56
    %v983 = vld [vmem:[%s982] sm:$0xff]
    %v984 = vld [vmem:[%s2] sm:$0xff]
    %v985 = vld [vmem:[%s2 + $0x8] sm:$0xff]
    %v986 = vld [vmem:[%s2 + $0x10] sm:$0xff]
    %v987 = vld [vmem:[%s2 + $0x18] sm:$0xff]
    %v988 = vsel %vm224, %v978, 0
    %990 = vmatprep.subr.mxu0 0.0
    %991 = vmatpush1.msra.mxu0 0.0
    %992 = vmatprep.subr.mxu0 0.0
    %993 = vmatpush1.msra.mxu0 0.0
    %994 = vmatprep.subr.mxu0 0.0
    %995 = vmatpush1.msra.mxu0 0.0
    %996 = vmatprep.subr.mxu0 0.0
    %997 = vmatpush1.msra.mxu0 0.0
    %998 = vmatprep.subr.mxu0 0.0
    %999 = vmatpush1.msra.mxu0 0.0
    %1000 = vmatprep.subr.mxu0 0.0
    %1001 = vmatpush1.msra.mxu0 0.0
    %1002 = vmatprep.subr.mxu0 0.0
    %1003 = vmatpush1.msra.mxu0 0.0
    %1004 = vmatprep.subr.mxu0 0.0
    %1005 = vmatpush1.msra.mxu0 0.0
    %1006 = vmatprep.subr.mxu0 0.0
    %1007 = vmatpush1.msra.mxu0 0.0
    %1008 = vmatprep.subr.mxu0 0.0
    %1009 = vmatpush1.msra.mxu0 0.0
    %1010 = vmatprep.subr.mxu0 0.0
    %1011 = vmatpush1.msra.mxu0 0.0
    %1012 = vmatprep.subr.mxu0 0.0
    %1013 = vmatpush1.msra.mxu0 0.0
    %1014 = vmatprep.subr.mxu0 0.0
    %1015 = vmatpush1.msra.mxu0 %v987
    %1016 = vmatprep.subr.mxu0 0.0
    %1017 = vmatpush1.msra.mxu0 %v986
    %1018 = vmatprep.subr.mxu0 0.0
    %1019 = vmatpush1.msra.mxu0 %v985
    %1020 = vmatprep.subr.mxu0 0.0
    %1021 = vmatpush1.msra.mxu0 %v984
    %1022 = vmatprep.subr.mxu0 0.0
    %1023 = vmatpush2.msra.mxu0 0.0
    %1024 = vmatprep.subr.mxu0 0.0
    %1025 = vmatpush2.msra.mxu0 0.0
    %1026 = vmatprep.subr.mxu0 0.0
    %1027 = vmatpush2.msra.mxu0 0.0
    %1028 = vmatprep.subr.mxu0 0.0
    %1029 = vmatpush2.msra.mxu0 0.0
    %1030 = vmatprep.subr.mxu0 0.0
    %1031 = vmatpush2.msra.mxu0 0.0
    %1032 = vmatprep.subr.mxu0 0.0
    %1033 = vmatpush2.msra.mxu0 0.0
    %1034 = vmatprep.subr.mxu0 0.0
    %1035 = vmatpush2.msra.mxu0 0.0
    %1036 = vmatprep.subr.mxu0 0.0
    %1037 = vmatpush2.msra.mxu0 0.0
    %1038 = vmatprep.subr.mxu0 0.0
    %1039 = vmatpush2.msra.mxu0 0.0
    %1040 = vmatprep.subr.mxu0 0.0
    %1041 = vmatpush2.msra.mxu0 0.0
    %1042 = vmatprep.subr.mxu0 0.0
    %1043 = vmatpush2.msra.mxu0 0.0
    %1044 = vmatprep.subr.mxu0 0.0
    %1045 = vmatpush2.msra.mxu0 0.0
    %1046 = vmatprep.subr.mxu0 0.0
    %1047 = vmatpush2.msra.mxu0 0.0
    %1048 = vmatprep.subr.mxu0 0.0
    %1049 = vmatpush2.msra.mxu0 0.0
    %1050 = vmatprep.subr.mxu0 0.0
    %1051 = vmatpush2.msra.mxu0 0.0
    %1052 = vmatprep.subr.mxu0 0.0
    %1053 = vmatpush2.msra.mxu0 0.0
    %1054 = vmatprep.mubr.f32.mxu0 0.0
    %1055 = vmatmul.mubr.f32.gmra.mxu0 %v988
    %v1056 = vpop.f32.mrf.mxu0
    %v1057 = vadd.f32 0.0, %v1056
    %v1058 = vpop.f32.mrf.mxu0
    %1059 = vdwg.mxu0
    %v1060 = vadd.f32 %v983, %v1057
    %v1061 = vxor.u32 %v1060, 2147483648
    %v1062 = vmul.f32 %v1061, 1.442695
    %v1063 = vpow.pop %v1062
    %v1064 = vadd.f32 %v1063, 1.0
    %v1065 = vrcp.pop %v1064
    %v1066 = vmul.f32 1.0, %v1065
    %v1067 = vtanh.pop %v1060
    %v1068 = vmul.f32 %v1066, %v969
    %1070 = vrot.lane.b32.xlu0 %v1067, 64
    %v1071 = vpop.permute.xlu0 %1070
    %v1073 = vmul.f32 %v1066, %v1071
    %1075 = vrot.lane.b32.xlu0 %v1073, 32
    %v1076 = vpop.permute.xlu0 %1075
    %v1078 = vadd.f32 %v1068, %v1076
    %v1079 = vtanh.pop %v1078
    %1081 = vrot.lane.b32.xlu0 %v1079, 64
    %v1082 = vpop.permute.xlu0 %1081
    %v1084 = vmul.f32 %v1066, %v1082
    %1086 = vrot.lane.b32.xlu0 %v1084, 32
    %v1087 = vpop.permute.xlu0 %1086
    %s1089 = scalar_lea.vmem [#allocation3], 56
    %1090 = vst.msk [vmem:[%s1089] sm:$0xff] %vm224, %v1087
    %1091 = vst.msk [vmem:[#allocation10] sm:$0xff] %vm224, %v1087
    %1093 = vrot.lane.b32.xlu0 %v1078, 96
    %v1094 = vpop.permute.xlu0 %1093
    %1096 = vst.msk [vmem:[#allocation12] sm:$0xff] %vm224, %v1094
    %v1097 = vld [vmem:[#allocation3] sm:$0xff]
    %v1098 = vld [vmem:[#allocation3 + $0x8] sm:$0xff]
    %v1099 = vld [vmem:[#allocation3 + $0x10] sm:$0xff]
    %v1100 = vld [vmem:[#allocation3 + $0x18] sm:$0xff]
    %v1101 = vld [vmem:[#allocation3 + $0x20] sm:$0xff]
    %v1102 = vld [vmem:[#allocation3 + $0x28] sm:$0xff]
    %v1103 = vld [vmem:[#allocation3 + $0x30] sm:$0xff]
    %v1104 = vld [vmem:[#allocation3 + $0x38] sm:$0xff]
    %v1105 = vld [vmem:[%s4] sm:$0xff]
    %v1106 = vld [vmem:[%s4 + $0x8] sm:$0xff]
    %v1107 = vld [vmem:[%s4 + $0x10] sm:$0xff]
    %v1108 = vld [vmem:[%s4 + $0x18] sm:$0xff]
    %v1109 = vld [vmem:[%s6] sm:$0x1]
    %v1111 = vlaneseq
    %v1112 = vshrl.u32 %v1111, 7
    %v1113 = vsub.s32 0, %v1112
    %v1114 = vrot.slane %v1109, %v1113
    %v1117 = vsel %vm224, %v1097, 0
    %v1120 = vsel %vm224, %v1098, 0
    %v1123 = vsel %vm224, %v1099, 0
    %v1126 = vsel %vm224, %v1100, 0
    %v1129 = vsel %vm224, %v1101, 0
    %v1132 = vsel %vm224, %v1102, 0
    %v1135 = vsel %vm224, %v1103, 0
    %v1138 = vsel %vm224, %v1104, 0
    %1140 = vmatprep.subr.mxu0 0.0
    %1141 = vmatpush1.msra.mxu0 0.0
    %1142 = vmatprep.subr.mxu0 0.0
    %1143 = vmatpush1.msra.mxu0 0.0
    %1144 = vmatprep.subr.mxu0 0.0
    %1145 = vmatpush1.msra.mxu0 0.0
    %1146 = vmatprep.subr.mxu0 0.0
    %1147 = vmatpush1.msra.mxu0 0.0
    %1148 = vmatprep.subr.mxu0 0.0
    %1149 = vmatpush1.msra.mxu0 0.0
    %1150 = vmatprep.subr.mxu0 0.0
    %1151 = vmatpush1.msra.mxu0 0.0
    %1152 = vmatprep.subr.mxu0 0.0
    %1153 = vmatpush1.msra.mxu0 0.0
    %1154 = vmatprep.subr.mxu0 0.0
    %1155 = vmatpush1.msra.mxu0 0.0
    %1156 = vmatprep.subr.mxu0 0.0
    %1157 = vmatpush1.msra.mxu0 0.0
    %1158 = vmatprep.subr.mxu0 0.0
    %1159 = vmatpush1.msra.mxu0 0.0
    %1160 = vmatprep.subr.mxu0 0.0
    %1161 = vmatpush1.msra.mxu0 0.0
    %1162 = vmatprep.subr.mxu0 0.0
    %1163 = vmatpush1.msra.mxu0 0.0
    %1164 = vmatprep.subr.mxu0 0.0
    %1165 = vmatpush1.msra.mxu0 %v1108
    %1166 = vmatprep.subr.mxu0 0.0
    %1167 = vmatpush1.msra.mxu0 %v1107
    %1168 = vmatprep.subr.mxu0 0.0
    %1169 = vmatpush1.msra.mxu0 %v1106
    %1170 = vmatprep.subr.mxu0 0.0
    %1171 = vmatpush1.msra.mxu0 %v1105
    %1172 = vmatprep.subr.mxu0 0.0
    %1173 = vmatpush2.msra.mxu0 0.0
    %1174 = vmatprep.subr.mxu0 0.0
    %1175 = vmatpush2.msra.mxu0 0.0
    %1176 = vmatprep.subr.mxu0 0.0
    %1177 = vmatpush2.msra.mxu0 0.0
    %1178 = vmatprep.subr.mxu0 0.0
    %1179 = vmatpush2.msra.mxu0 0.0
    %1180 = vmatprep.subr.mxu0 0.0
    %1181 = vmatpush2.msra.mxu0 0.0
    %1182 = vmatprep.subr.mxu0 0.0
    %1183 = vmatpush2.msra.mxu0 0.0
    %1184 = vmatprep.subr.mxu0 0.0
    %1185 = vmatpush2.msra.mxu0 0.0
    %1186 = vmatprep.subr.mxu0 0.0
    %1187 = vmatpush2.msra.mxu0 0.0
    %1188 = vmatprep.subr.mxu0 0.0
    %1189 = vmatpush2.msra.mxu0 0.0
    %1190 = vmatprep.subr.mxu0 0.0
    %1191 = vmatpush2.msra.mxu0 0.0
    %1192 = vmatprep.subr.mxu0 0.0
    %1193 = vmatpush2.msra.mxu0 0.0
    %1194 = vmatprep.subr.mxu0 0.0
    %1195 = vmatpush2.msra.mxu0 0.0
    %1196 = vmatprep.subr.mxu0 0.0
    %1197 = vmatpush2.msra.mxu0 0.0
    %1198 = vmatprep.subr.mxu0 0.0
    %1199 = vmatpush2.msra.mxu0 0.0
    %1200 = vmatprep.subr.mxu0 0.0
    %1201 = vmatpush2.msra.mxu0 0.0
    %1202 = vmatprep.subr.mxu0 0.0
    %1203 = vmatpush2.msra.mxu0 0.0
    %1204 = vmatprep.mubr.f32.mxu0 0.0
    %1205 = vmatmul.mubr.f32.gmra.mxu0 %v1117
    %v1206 = vpop.f32.mrf.mxu0
    %v1207 = vadd.f32 %v1114, %v1206
    %v1208 = vpop.f32.mrf.mxu0
    %1209 = vmatprep.mubr.f32.mxu0 0.0
    %1210 = vmatmul.mubr.f32.gmra.mxu0 %v1120
    %v1211 = vpop.f32.mrf.mxu0
    %v1212 = vadd.f32 %v1114, %v1211
    %v1213 = vpop.f32.mrf.mxu0
    %1214 = vmatprep.mubr.f32.mxu0 0.0
    %1215 = vmatmul.mubr.f32.gmra.mxu0 %v1123
    %v1216 = vpop.f32.mrf.mxu0
    %v1217 = vadd.f32 %v1114, %v1216
    %v1218 = vpop.f32.mrf.mxu0
    %1219 = vmatprep.mubr.f32.mxu0 0.0
    %1220 = vmatmul.mubr.f32.gmra.mxu0 %v1126
    %v1221 = vpop.f32.mrf.mxu0
    %v1222 = vadd.f32 %v1114, %v1221
    %v1223 = vpop.f32.mrf.mxu0
    %1224 = vmatprep.mubr.f32.mxu0 0.0
    %1225 = vmatmul.mubr.f32.gmra.mxu0 %v1129
    %v1226 = vpop.f32.mrf.mxu0
    %v1227 = vadd.f32 %v1114, %v1226
    %v1228 = vpop.f32.mrf.mxu0
    %1229 = vmatprep.mubr.f32.mxu0 0.0
    %1230 = vmatmul.mubr.f32.gmra.mxu0 %v1132
    %v1231 = vpop.f32.mrf.mxu0
    %v1232 = vadd.f32 %v1114, %v1231
    %v1233 = vpop.f32.mrf.mxu0
    %1234 = vmatprep.mubr.f32.mxu0 0.0
    %1235 = vmatmul.mubr.f32.gmra.mxu0 %v1135
    %v1236 = vpop.f32.mrf.mxu0
    %v1237 = vadd.f32 %v1114, %v1236
    %v1238 = vpop.f32.mrf.mxu0
    %1239 = vmatprep.mubr.f32.mxu0 0.0
    %1240 = vmatmul.mubr.f32.gmra.mxu0 %v1138
    %v1241 = vpop.f32.mrf.mxu0
    %v1242 = vadd.f32 %v1114, %v1241
    %v1243 = vpop.f32.mrf.mxu0
    %1244 = vdwg.mxu0
    %1245 = vst [vmem:[#allocation2] sm:$0xff] %v1207
    %1246 = vst [vmem:[#allocation2 + $0x8] sm:$0xff] %v1212
    %1247 = vst [vmem:[#allocation2 + $0x10] sm:$0xff] %v1217
    %1248 = vst [vmem:[#allocation2 + $0x18] sm:$0xff] %v1222
    %1249 = vst [vmem:[#allocation2 + $0x20] sm:$0xff] %v1227
    %1250 = vst [vmem:[#allocation2 + $0x28] sm:$0xff] %v1232
    %1251 = vst [vmem:[#allocation2 + $0x30] sm:$0xff] %v1237
    %1252 = vst [vmem:[#allocation2 + $0x38] sm:$0xff] %v1242
    %v1253 = vld [vmem:[#allocation2] sm:$0xff]
    %v1254 = vld [vmem:[#allocation4] sm:$0xff]
    %v1255 = vld [vmem:[#allocation4 + $0x8] sm:$0xff]
    %v1256 = vld [vmem:[#allocation4 + $0x10] sm:$0xff]
    %v1257 = vld [vmem:[#allocation4 + $0x18] sm:$0xff]
    %1258 = vmatprep.subr.mxu0 0.0
    %1259 = vmatpush1.msra.mxu0 0.0
    %1260 = vmatprep.subr.mxu0 0.0
    %1261 = vmatpush1.msra.mxu0 0.0
    %1262 = vmatprep.subr.mxu0 0.0
    %1263 = vmatpush1.msra.mxu0 0.0
    %1264 = vmatprep.subr.mxu0 0.0
    %1265 = vmatpush1.msra.mxu0 0.0
    %1266 = vmatprep.subr.mxu0 0.0
    %1267 = vmatpush1.msra.mxu0 0.0
    %1268 = vmatprep.subr.mxu0 0.0
    %1269 = vmatpush1.msra.mxu0 0.0
    %1270 = vmatprep.subr.mxu0 0.0
    %1271 = vmatpush1.msra.mxu0 0.0
    %1272 = vmatprep.subr.mxu0 0.0
    %1273 = vmatpush1.msra.mxu0 0.0
    %1274 = vmatprep.subr.mxu0 0.0
    %1275 = vmatpush1.msra.mxu0 0.0
    %1276 = vmatprep.subr.mxu0 0.0
    %1277 = vmatpush1.msra.mxu0 0.0
    %1278 = vmatprep.subr.mxu0 0.0
    %1279 = vmatpush1.msra.mxu0 0.0
    %1280 = vmatprep.subr.mxu0 0.0
    %1281 = vmatpush1.msra.mxu0 0.0
    %1282 = vmatprep.subr.mxu0 0.0
    %1283 = vmatpush1.msra.mxu0 %v1257
    %1284 = vmatprep.subr.mxu0 0.0
    %1285 = vmatpush1.msra.mxu0 %v1256
    %1286 = vmatprep.subr.mxu0 0.0
    %1287 = vmatpush1.msra.mxu0 %v1255
    %1288 = vmatprep.subr.mxu0 0.0
    %1289 = vmatpush1.msra.mxu0 %v1254
    %1290 = vmatprep.subr.mxu0 0.0
    %1291 = vmatpush2.msra.mxu0 0.0
    %1292 = vmatprep.subr.mxu0 0.0
    %1293 = vmatpush2.msra.mxu0 0.0
    %1294 = vmatprep.subr.mxu0 0.0
    %1295 = vmatpush2.msra.mxu0 0.0
    %1296 = vmatprep.subr.mxu0 0.0
    %1297 = vmatpush2.msra.mxu0 0.0
    %1298 = vmatprep.subr.mxu0 0.0
    %1299 = vmatpush2.msra.mxu0 0.0
    %1300 = vmatprep.subr.mxu0 0.0
    %1301 = vmatpush2.msra.mxu0 0.0
    %1302 = vmatprep.subr.mxu0 0.0
    %1303 = vmatpush2.msra.mxu0 0.0
    %1304 = vmatprep.subr.mxu0 0.0
    %1305 = vmatpush2.msra.mxu0 0.0
    %1306 = vmatprep.subr.mxu0 0.0
    %1307 = vmatpush2.msra.mxu0 0.0
    %1308 = vmatprep.subr.mxu0 0.0
    %1309 = vmatpush2.msra.mxu0 0.0
    %1310 = vmatprep.subr.mxu0 0.0
    %1311 = vmatpush2.msra.mxu0 0.0
    %1312 = vmatprep.subr.mxu0 0.0
    %1313 = vmatpush2.msra.mxu0 0.0
    %1314 = vmatprep.subr.mxu0 0.0
    %1315 = vmatpush2.msra.mxu0 0.0
    %1316 = vmatprep.subr.mxu0 0.0
    %1317 = vmatpush2.msra.mxu0 0.0
    %1318 = vmatprep.subr.mxu0 0.0
    %1319 = vmatpush2.msra.mxu0 0.0
    %1320 = vmatprep.subr.mxu0 0.0
    %1321 = vmatpush2.msra.mxu0 0.0
    %1322 = vmatprep.mubr.f32.mxu0 0.0
    %1323 = vmatmul.mubr.f32.gmra.mxu0 %v226
    %v1324 = vpop.f32.mrf.mxu0
    %v1325 = vadd.f32 0.0, %v1324
    %v1326 = vpop.f32.mrf.mxu0
    %1327 = vdwg.mxu0
    %v1328 = vadd.f32 %v1253, %v1325
    %v1329 = vxor.u32 %v1328, 2147483648
    %v1330 = vmul.f32 %v1329, 1.442695
    %v1331 = vpow.pop %v1330
    %v1332 = vadd.f32 %v1331, 1.0
    %v1333 = vrcp.pop %v1332
    %v1334 = vmul.f32 1.0, %v1333
    %v1335 = vtanh.pop %v1328
    %v1336 = vmul.f32 %v1334, 0.0
    %1338 = vrot.lane.b32.xlu0 %v1335, 64
    %v1339 = vpop.permute.xlu0 %1338
    %v1341 = vmul.f32 %v1334, %v1339
    %1343 = vrot.lane.b32.xlu0 %v1341, 32
    %v1344 = vpop.permute.xlu0 %1343
    %v1346 = vadd.f32 %v1336, %v1344
    %v1347 = vtanh.pop %v1346
    %1349 = vrot.lane.b32.xlu0 %v1347, 64
    %v1350 = vpop.permute.xlu0 %1349
    %v1352 = vmul.f32 %v1334, %v1350
    %1354 = vrot.lane.b32.xlu0 %v1352, 32
    %v1355 = vpop.permute.xlu0 %1354
    %1357 = vst.msk [vmem:[#allocation3] sm:$0xff] %vm224, %v1355
    %v1358 = vld [vmem:[%s328] sm:$0xff]
    %v1359 = vld [vmem:[#allocation4] sm:$0xff]
    %v1360 = vld [vmem:[#allocation4 + $0x8] sm:$0xff]
    %v1361 = vld [vmem:[#allocation4 + $0x10] sm:$0xff]
    %v1362 = vld [vmem:[#allocation4 + $0x18] sm:$0xff]
    %v1363 = vsel %vm224, %v1355, 0
    %1365 = vmatprep.subr.mxu0 0.0
    %1366 = vmatpush1.msra.mxu0 0.0
    %1367 = vmatprep.subr.mxu0 0.0
    %1368 = vmatpush1.msra.mxu0 0.0
    %1369 = vmatprep.subr.mxu0 0.0
    %1370 = vmatpush1.msra.mxu0 0.0
    %1371 = vmatprep.subr.mxu0 0.0
    %1372 = vmatpush1.msra.mxu0 0.0
    %1373 = vmatprep.subr.mxu0 0.0
    %1374 = vmatpush1.msra.mxu0 0.0
    %1375 = vmatprep.subr.mxu0 0.0
    %1376 = vmatpush1.msra.mxu0 0.0
    %1377 = vmatprep.subr.mxu0 0.0
    %1378 = vmatpush1.msra.mxu0 0.0
    %1379 = vmatprep.subr.mxu0 0.0
    %1380 = vmatpush1.msra.mxu0 0.0
    %1381 = vmatprep.subr.mxu0 0.0
    %1382 = vmatpush1.msra.mxu0 0.0
    %1383 = vmatprep.subr.mxu0 0.0
    %1384 = vmatpush1.msra.mxu0 0.0
    %1385 = vmatprep.subr.mxu0 0.0
    %1386 = vmatpush1.msra.mxu0 0.0
    %1387 = vmatprep.subr.mxu0 0.0
    %1388 = vmatpush1.msra.mxu0 0.0
    %1389 = vmatprep.subr.mxu0 0.0
    %1390 = vmatpush1.msra.mxu0 %v1362
    %1391 = vmatprep.subr.mxu0 0.0
    %1392 = vmatpush1.msra.mxu0 %v1361
    %1393 = vmatprep.subr.mxu0 0.0
    %1394 = vmatpush1.msra.mxu0 %v1360
    %1395 = vmatprep.subr.mxu0 0.0
    %1396 = vmatpush1.msra.mxu0 %v1359
    %1397 = vmatprep.subr.mxu0 0.0
    %1398 = vmatpush2.msra.mxu0 0.0
    %1399 = vmatprep.subr.mxu0 0.0
    %1400 = vmatpush2.msra.mxu0 0.0
    %1401 = vmatprep.subr.mxu0 0.0
    %1402 = vmatpush2.msra.mxu0 0.0
    %1403 = vmatprep.subr.mxu0 0.0
    %1404 = vmatpush2.msra.mxu0 0.0
    %1405 = vmatprep.subr.mxu0 0.0
    %1406 = vmatpush2.msra.mxu0 0.0
    %1407 = vmatprep.subr.mxu0 0.0
    %1408 = vmatpush2.msra.mxu0 0.0
    %1409 = vmatprep.subr.mxu0 0.0
    %1410 = vmatpush2.msra.mxu0 0.0
    %1411 = vmatprep.subr.mxu0 0.0
    %1412 = vmatpush2.msra.mxu0 0.0
    %1413 = vmatprep.subr.mxu0 0.0
    %1414 = vmatpush2.msra.mxu0 0.0
    %1415 = vmatprep.subr.mxu0 0.0
    %1416 = vmatpush2.msra.mxu0 0.0
    %1417 = vmatprep.subr.mxu0 0.0
    %1418 = vmatpush2.msra.mxu0 0.0
    %1419 = vmatprep.subr.mxu0 0.0
    %1420 = vmatpush2.msra.mxu0 0.0
    %1421 = vmatprep.subr.mxu0 0.0
    %1422 = vmatpush2.msra.mxu0 0.0
    %1423 = vmatprep.subr.mxu0 0.0
    %1424 = vmatpush2.msra.mxu0 0.0
    %1425 = vmatprep.subr.mxu0 0.0
    %1426 = vmatpush2.msra.mxu0 0.0
    %1427 = vmatprep.subr.mxu0 0.0
    %1428 = vmatpush2.msra.mxu0 0.0
    %1429 = vmatprep.mubr.f32.mxu0 0.0
    %1430 = vmatmul.mubr.f32.gmra.mxu0 %v1363
    %v1431 = vpop.f32.mrf.mxu0
    %v1432 = vadd.f32 0.0, %v1431
    %v1433 = vpop.f32.mrf.mxu0
    %1434 = vdwg.mxu0
    %v1435 = vadd.f32 %v1358, %v1432
    %v1436 = vxor.u32 %v1435, 2147483648
    %v1437 = vmul.f32 %v1436, 1.442695
    %v1438 = vpow.pop %v1437
    %v1439 = vadd.f32 %v1438, 1.0
    %v1440 = vrcp.pop %v1439
    %v1441 = vmul.f32 1.0, %v1440
    %v1442 = vtanh.pop %v1435
    %v1443 = vmul.f32 %v1441, %v1346
    %1445 = vrot.lane.b32.xlu0 %v1442, 64
    %v1446 = vpop.permute.xlu0 %1445
    %v1448 = vmul.f32 %v1441, %v1446
    %1450 = vrot.lane.b32.xlu0 %v1448, 32
    %v1451 = vpop.permute.xlu0 %1450
    %v1453 = vadd.f32 %v1443, %v1451
    %v1454 = vtanh.pop %v1453
    %1456 = vrot.lane.b32.xlu0 %v1454, 64
    %v1457 = vpop.permute.xlu0 %1456
    %v1459 = vmul.f32 %v1441, %v1457
    %1461 = vrot.lane.b32.xlu0 %v1459, 32
    %v1462 = vpop.permute.xlu0 %1461
    %1464 = vst.msk [vmem:[%s435] sm:$0xff] %vm224, %v1462
    %v1465 = vld [vmem:[%s437] sm:$0xff]
    %v1466 = vld [vmem:[#allocation4] sm:$0xff]
    %v1467 = vld [vmem:[#allocation4 + $0x8] sm:$0xff]
    %v1468 = vld [vmem:[#allocation4 + $0x10] sm:$0xff]
    %v1469 = vld [vmem:[#allocation4 + $0x18] sm:$0xff]
    %v1470 = vsel %vm224, %v1462, 0
    %1472 = vmatprep.subr.mxu0 0.0
    %1473 = vmatpush1.msra.mxu0 0.0
    %1474 = vmatprep.subr.mxu0 0.0
    %1475 = vmatpush1.msra.mxu0 0.0
    %1476 = vmatprep.subr.mxu0 0.0
    %1477 = vmatpush1.msra.mxu0 0.0
    %1478 = vmatprep.subr.mxu0 0.0
    %1479 = vmatpush1.msra.mxu0 0.0
    %1480 = vmatprep.subr.mxu0 0.0
    %1481 = vmatpush1.msra.mxu0 0.0
    %1482 = vmatprep.subr.mxu0 0.0
    %1483 = vmatpush1.msra.mxu0 0.0
    %1484 = vmatprep.subr.mxu0 0.0
    %1485 = vmatpush1.msra.mxu0 0.0
    %1486 = vmatprep.subr.mxu0 0.0
    %1487 = vmatpush1.msra.mxu0 0.0
    %1488 = vmatprep.subr.mxu0 0.0
    %1489 = vmatpush1.msra.mxu0 0.0
    %1490 = vmatprep.subr.mxu0 0.0
    %1491 = vmatpush1.msra.mxu0 0.0
    %1492 = vmatprep.subr.mxu0 0.0
    %1493 = vmatpush1.msra.mxu0 0.0
    %1494 = vmatprep.subr.mxu0 0.0
    %1495 = vmatpush1.msra.mxu0 0.0
    %1496 = vmatprep.subr.mxu0 0.0
    %1497 = vmatpush1.msra.mxu0 %v1469
    %1498 = vmatprep.subr.mxu0 0.0
    %1499 = vmatpush1.msra.mxu0 %v1468
    %1500 = vmatprep.subr.mxu0 0.0
    %1501 = vmatpush1.msra.mxu0 %v1467
    %1502 = vmatprep.subr.mxu0 0.0
    %1503 = vmatpush1.msra.mxu0 %v1466
    %1504 = vmatprep.subr.mxu0 0.0
    %1505 = vmatpush2.msra.mxu0 0.0
    %1506 = vmatprep.subr.mxu0 0.0
    %1507 = vmatpush2.msra.mxu0 0.0
    %1508 = vmatprep.subr.mxu0 0.0
    %1509 = vmatpush2.msra.mxu0 0.0
    %1510 = vmatprep.subr.mxu0 0.0
    %1511 = vmatpush2.msra.mxu0 0.0
    %1512 = vmatprep.subr.mxu0 0.0
    %1513 = vmatpush2.msra.mxu0 0.0
    %1514 = vmatprep.subr.mxu0 0.0
    %1515 = vmatpush2.msra.mxu0 0.0
    %1516 = vmatprep.subr.mxu0 0.0
    %1517 = vmatpush2.msra.mxu0 0.0
    %1518 = vmatprep.subr.mxu0 0.0
    %1519 = vmatpush2.msra.mxu0 0.0
    %1520 = vmatprep.subr.mxu0 0.0
    %1521 = vmatpush2.msra.mxu0 0.0
    %1522 = vmatprep.subr.mxu0 0.0
    %1523 = vmatpush2.msra.mxu0 0.0
    %1524 = vmatprep.subr.mxu0 0.0
    %1525 = vmatpush2.msra.mxu0 0.0
    %1526 = vmatprep.subr.mxu0 0.0
    %1527 = vmatpush2.msra.mxu0 0.0
    %1528 = vmatprep.subr.mxu0 0.0
    %1529 = vmatpush2.msra.mxu0 0.0
    %1530 = vmatprep.subr.mxu0 0.0
    %1531 = vmatpush2.msra.mxu0 0.0
    %1532 = vmatprep.subr.mxu0 0.0
    %1533 = vmatpush2.msra.mxu0 0.0
    %1534 = vmatprep.subr.mxu0 0.0
    %1535 = vmatpush2.msra.mxu0 0.0
    %1536 = vmatprep.mubr.f32.mxu0 0.0
    %1537 = vmatmul.mubr.f32.gmra.mxu0 %v1470
    %v1538 = vpop.f32.mrf.mxu0
    %v1539 = vadd.f32 0.0, %v1538
    %v1540 = vpop.f32.mrf.mxu0
    %1541 = vdwg.mxu0
    %v1542 = vadd.f32 %v1465, %v1539
    %v1543 = vxor.u32 %v1542, 2147483648
    %v1544 = vmul.f32 %v1543, 1.442695
    %v1545 = vpow.pop %v1544
    %v1546 = vadd.f32 %v1545, 1.0
    %v1547 = vrcp.pop %v1546
    %v1548 = vmul.f32 1.0, %v1547
    %v1549 = vtanh.pop %v1542
    %v1550 = vmul.f32 %v1548, %v1453
    %1552 = vrot.lane.b32.xlu0 %v1549, 64
    %v1553 = vpop.permute.xlu0 %1552
    %v1555 = vmul.f32 %v1548, %v1553
    %1557 = vrot.lane.b32.xlu0 %v1555, 32
    %v1558 = vpop.permute.xlu0 %1557
    %v1560 = vadd.f32 %v1550, %v1558
    %v1561 = vtanh.pop %v1560
    %1563 = vrot.lane.b32.xlu0 %v1561, 64
    %v1564 = vpop.permute.xlu0 %1563
    %v1566 = vmul.f32 %v1548, %v1564
    %1568 = vrot.lane.b32.xlu0 %v1566, 32
    %v1569 = vpop.permute.xlu0 %1568
    %1571 = vst.msk [vmem:[%s544] sm:$0xff] %vm224, %v1569
    %v1572 = vld [vmem:[%s546] sm:$0xff]
    %v1573 = vld [vmem:[#allocation4] sm:$0xff]
    %v1574 = vld [vmem:[#allocation4 + $0x8] sm:$0xff]
    %v1575 = vld [vmem:[#allocation4 + $0x10] sm:$0xff]
    %v1576 = vld [vmem:[#allocation4 + $0x18] sm:$0xff]
    %v1577 = vsel %vm224, %v1569, 0
    %1579 = vmatprep.subr.mxu0 0.0
    %1580 = vmatpush1.msra.mxu0 0.0
    %1581 = vmatprep.subr.mxu0 0.0
    %1582 = vmatpush1.msra.mxu0 0.0
    %1583 = vmatprep.subr.mxu0 0.0
    %1584 = vmatpush1.msra.mxu0 0.0
    %1585 = vmatprep.subr.mxu0 0.0
    %1586 = vmatpush1.msra.mxu0 0.0
    %1587 = vmatprep.subr.mxu0 0.0
    %1588 = vmatpush1.msra.mxu0 0.0
    %1589 = vmatprep.subr.mxu0 0.0
    %1590 = vmatpush1.msra.mxu0 0.0
    %1591 = vmatprep.subr.mxu0 0.0
    %1592 = vmatpush1.msra.mxu0 0.0
    %1593 = vmatprep.subr.mxu0 0.0
    %1594 = vmatpush1.msra.mxu0 0.0
    %1595 = vmatprep.subr.mxu0 0.0
    %1596 = vmatpush1.msra.mxu0 0.0
    %1597 = vmatprep.subr.mxu0 0.0
    %1598 = vmatpush1.msra.mxu0 0.0
    %1599 = vmatprep.subr.mxu0 0.0
    %1600 = vmatpush1.msra.mxu0 0.0
    %1601 = vmatprep.subr.mxu0 0.0
    %1602 = vmatpush1.msra.mxu0 0.0
    %1603 = vmatprep.subr.mxu0 0.0
    %1604 = vmatpush1.msra.mxu0 %v1576
    %1605 = vmatprep.subr.mxu0 0.0
    %1606 = vmatpush1.msra.mxu0 %v1575
    %1607 = vmatprep.subr.mxu0 0.0
    %1608 = vmatpush1.msra.mxu0 %v1574
    %1609 = vmatprep.subr.mxu0 0.0
    %1610 = vmatpush1.msra.mxu0 %v1573
    %1611 = vmatprep.subr.mxu0 0.0
    %1612 = vmatpush2.msra.mxu0 0.0
    %1613 = vmatprep.subr.mxu0 0.0
    %1614 = vmatpush2.msra.mxu0 0.0
    %1615 = vmatprep.subr.mxu0 0.0
    %1616 = vmatpush2.msra.mxu0 0.0
    %1617 = vmatprep.subr.mxu0 0.0
    %1618 = vmatpush2.msra.mxu0 0.0
    %1619 = vmatprep.subr.mxu0 0.0
    %1620 = vmatpush2.msra.mxu0 0.0
    %1621 = vmatprep.subr.mxu0 0.0
    %1622 = vmatpush2.msra.mxu0 0.0
    %1623 = vmatprep.subr.mxu0 0.0
    %1624 = vmatpush2.msra.mxu0 0.0
    %1625 = vmatprep.subr.mxu0 0.0
    %1626 = vmatpush2.msra.mxu0 0.0
    %1627 = vmatprep.subr.mxu0 0.0
    %1628 = vmatpush2.msra.mxu0 0.0
    %1629 = vmatprep.subr.mxu0 0.0
    %1630 = vmatpush2.msra.mxu0 0.0
    %1631 = vmatprep.subr.mxu0 0.0
    %1632 = vmatpush2.msra.mxu0 0.0
    %1633 = vmatprep.subr.mxu0 0.0
    %1634 = vmatpush2.msra.mxu0 0.0
    %1635 = vmatprep.subr.mxu0 0.0
    %1636 = vmatpush2.msra.mxu0 0.0
    %1637 = vmatprep.subr.mxu0 0.0
    %1638 = vmatpush2.msra.mxu0 0.0
    %1639 = vmatprep.subr.mxu0 0.0
    %1640 = vmatpush2.msra.mxu0 0.0
    %1641 = vmatprep.subr.mxu0 0.0
    %1642 = vmatpush2.msra.mxu0 0.0
    %1643 = vmatprep.mubr.f32.mxu0 0.0
    %1644 = vmatmul.mubr.f32.gmra.mxu0 %v1577
    %v1645 = vpop.f32.mrf.mxu0
    %v1646 = vadd.f32 0.0, %v1645
    %v1647 = vpop.f32.mrf.mxu0
    %1648 = vdwg.mxu0
    %v1649 = vadd.f32 %v1572, %v1646
    %v1650 = vxor.u32 %v1649, 2147483648
    %v1651 = vmul.f32 %v1650, 1.442695
    %v1652 = vpow.pop %v1651
    %v1653 = vadd.f32 %v1652, 1.0
    %v1654 = vrcp.pop %v1653
    %v1655 = vmul.f32 1.0, %v1654
    %v1656 = vtanh.pop %v1649
    %v1657 = vmul.f32 %v1655, %v1560
    %1659 = vrot.lane.b32.xlu0 %v1656, 64
    %v1660 = vpop.permute.xlu0 %1659
    %v1662 = vmul.f32 %v1655, %v1660
    %1664 = vrot.lane.b32.xlu0 %v1662, 32
    %v1665 = vpop.permute.xlu0 %1664
    %v1667 = vadd.f32 %v1657, %v1665
    %v1668 = vtanh.pop %v1667
    %1670 = vrot.lane.b32.xlu0 %v1668, 64
    %v1671 = vpop.permute.xlu0 %1670
    %v1673 = vmul.f32 %v1655, %v1671
    %1675 = vrot.lane.b32.xlu0 %v1673, 32
    %v1676 = vpop.permute.xlu0 %1675
    %1678 = vst.msk [vmem:[%s653] sm:$0xff] %vm224, %v1676
    %v1679 = vld [vmem:[%s655] sm:$0xff]
    %v1680 = vld [vmem:[#allocation4] sm:$0xff]
    %v1681 = vld [vmem:[#allocation4 + $0x8] sm:$0xff]
    %v1682 = vld [vmem:[#allocation4 + $0x10] sm:$0xff]
    %v1683 = vld [vmem:[#allocation4 + $0x18] sm:$0xff]
    %v1684 = vsel %vm224, %v1676, 0
    %1686 = vmatprep.subr.mxu0 0.0
    %1687 = vmatpush1.msra.mxu0 0.0
    %1688 = vmatprep.subr.mxu0 0.0
    %1689 = vmatpush1.msra.mxu0 0.0
    %1690 = vmatprep.subr.mxu0 0.0
    %1691 = vmatpush1.msra.mxu0 0.0
    %1692 = vmatprep.subr.mxu0 0.0
    %1693 = vmatpush1.msra.mxu0 0.0
    %1694 = vmatprep.subr.mxu0 0.0
    %1695 = vmatpush1.msra.mxu0 0.0
    %1696 = vmatprep.subr.mxu0 0.0
    %1697 = vmatpush1.msra.mxu0 0.0
    %1698 = vmatprep.subr.mxu0 0.0
    %1699 = vmatpush1.msra.mxu0 0.0
    %1700 = vmatprep.subr.mxu0 0.0
    %1701 = vmatpush1.msra.mxu0 0.0
    %1702 = vmatprep.subr.mxu0 0.0
    %1703 = vmatpush1.msra.mxu0 0.0
    %1704 = vmatprep.subr.mxu0 0.0
    %1705 = vmatpush1.msra.mxu0 0.0
    %1706 = vmatprep.subr.mxu0 0.0
    %1707 = vmatpush1.msra.mxu0 0.0
    %1708 = vmatprep.subr.mxu0 0.0
    %1709 = vmatpush1.msra.mxu0 0.0
    %1710 = vmatprep.subr.mxu0 0.0
    %1711 = vmatpush1.msra.mxu0 %v1683
    %1712 = vmatprep.subr.mxu0 0.0
    %1713 = vmatpush1.msra.mxu0 %v1682
    %1714 = vmatprep.subr.mxu0 0.0
    %1715 = vmatpush1.msra.mxu0 %v1681
    %1716 = vmatprep.subr.mxu0 0.0
    %1717 = vmatpush1.msra.mxu0 %v1680
    %1718 = vmatprep.subr.mxu0 0.0
    %1719 = vmatpush2.msra.mxu0 0.0
    %1720 = vmatprep.subr.mxu0 0.0
    %1721 = vmatpush2.msra.mxu0 0.0
    %1722 = vmatprep.subr.mxu0 0.0
    %1723 = vmatpush2.msra.mxu0 0.0
    %1724 = vmatprep.subr.mxu0 0.0
    %1725 = vmatpush2.msra.mxu0 0.0
    %1726 = vmatprep.subr.mxu0 0.0
    %1727 = vmatpush2.msra.mxu0 0.0
    %1728 = vmatprep.subr.mxu0 0.0
    %1729 = vmatpush2.msra.mxu0 0.0
    %1730 = vmatprep.subr.mxu0 0.0
    %1731 = vmatpush2.msra.mxu0 0.0
    %1732 = vmatprep.subr.mxu0 0.0
    %1733 = vmatpush2.msra.mxu0 0.0
    %1734 = vmatprep.subr.mxu0 0.0
    %1735 = vmatpush2.msra.mxu0 0.0
    %1736 = vmatprep.subr.mxu0 0.0
    %1737 = vmatpush2.msra.mxu0 0.0
    %1738 = vmatprep.subr.mxu0 0.0
    %1739 = vmatpush2.msra.mxu0 0.0
    %1740 = vmatprep.subr.mxu0 0.0
    %1741 = vmatpush2.msra.mxu0 0.0
    %1742 = vmatprep.subr.mxu0 0.0
    %1743 = vmatpush2.msra.mxu0 0.0
    %1744 = vmatprep.subr.mxu0 0.0
    %1745 = vmatpush2.msra.mxu0 0.0
    %1746 = vmatprep.subr.mxu0 0.0
    %1747 = vmatpush2.msra.mxu0 0.0
    %1748 = vmatprep.subr.mxu0 0.0
    %1749 = vmatpush2.msra.mxu0 0.0
    %1750 = vmatprep.mubr.f32.mxu0 0.0
    %1751 = vmatmul.mubr.f32.gmra.mxu0 %v1684
    %v1752 = vpop.f32.mrf.mxu0
    %v1753 = vadd.f32 0.0, %v1752
    %v1754 = vpop.f32.mrf.mxu0
    %1755 = vdwg.mxu0
    %v1756 = vadd.f32 %v1679, %v1753
    %v1757 = vxor.u32 %v1756, 2147483648
    %v1758 = vmul.f32 %v1757, 1.442695
    %v1759 = vpow.pop %v1758
    %v1760 = vadd.f32 %v1759, 1.0
    %v1761 = vrcp.pop %v1760
    %v1762 = vmul.f32 1.0, %v1761
    %v1763 = vtanh.pop %v1756
    %v1764 = vmul.f32 %v1762, %v1667
    %1766 = vrot.lane.b32.xlu0 %v1763, 64
    %v1767 = vpop.permute.xlu0 %1766
    %v1769 = vmul.f32 %v1762, %v1767
    %1771 = vrot.lane.b32.xlu0 %v1769, 32
    %v1772 = vpop.permute.xlu0 %1771
    %v1774 = vadd.f32 %v1764, %v1772
    %v1775 = vtanh.pop %v1774
    %1777 = vrot.lane.b32.xlu0 %v1775, 64
    %v1778 = vpop.permute.xlu0 %1777
    %v1780 = vmul.f32 %v1762, %v1778
    %1782 = vrot.lane.b32.xlu0 %v1780, 32
    %v1783 = vpop.permute.xlu0 %1782
    %1785 = vst.msk [vmem:[%s762] sm:$0xff] %vm224, %v1783
    %v1786 = vld [vmem:[%s764] sm:$0xff]
    %v1787 = vld [vmem:[#allocation4] sm:$0xff]
    %v1788 = vld [vmem:[#allocation4 + $0x8] sm:$0xff]
    %v1789 = vld [vmem:[#allocation4 + $0x10] sm:$0xff]
    %v1790 = vld [vmem:[#allocation4 + $0x18] sm:$0xff]
    %v1791 = vsel %vm224, %v1783, 0
    %1793 = vmatprep.subr.mxu0 0.0
    %1794 = vmatpush1.msra.mxu0 0.0
    %1795 = vmatprep.subr.mxu0 0.0
    %1796 = vmatpush1.msra.mxu0 0.0
    %1797 = vmatprep.subr.mxu0 0.0
    %1798 = vmatpush1.msra.mxu0 0.0
    %1799 = vmatprep.subr.mxu0 0.0
    %1800 = vmatpush1.msra.mxu0 0.0
    %1801 = vmatprep.subr.mxu0 0.0
    %1802 = vmatpush1.msra.mxu0 0.0
    %1803 = vmatprep.subr.mxu0 0.0
    %1804 = vmatpush1.msra.mxu0 0.0
    %1805 = vmatprep.subr.mxu0 0.0
    %1806 = vmatpush1.msra.mxu0 0.0
    %1807 = vmatprep.subr.mxu0 0.0
    %1808 = vmatpush1.msra.mxu0 0.0
    %1809 = vmatprep.subr.mxu0 0.0
    %1810 = vmatpush1.msra.mxu0 0.0
    %1811 = vmatprep.subr.mxu0 0.0
    %1812 = vmatpush1.msra.mxu0 0.0
    %1813 = vmatprep.subr.mxu0 0.0
    %1814 = vmatpush1.msra.mxu0 0.0
    %1815 = vmatprep.subr.mxu0 0.0
    %1816 = vmatpush1.msra.mxu0 0.0
    %1817 = vmatprep.subr.mxu0 0.0
    %1818 = vmatpush1.msra.mxu0 %v1790
    %1819 = vmatprep.subr.mxu0 0.0
    %1820 = vmatpush1.msra.mxu0 %v1789
    %1821 = vmatprep.subr.mxu0 0.0
    %1822 = vmatpush1.msra.mxu0 %v1788
    %1823 = vmatprep.subr.mxu0 0.0
    %1824 = vmatpush1.msra.mxu0 %v1787
    %1825 = vmatprep.subr.mxu0 0.0
    %1826 = vmatpush2.msra.mxu0 0.0
    %1827 = vmatprep.subr.mxu0 0.0
    %1828 = vmatpush2.msra.mxu0 0.0
    %1829 = vmatprep.subr.mxu0 0.0
    %1830 = vmatpush2.msra.mxu0 0.0
    %1831 = vmatprep.subr.mxu0 0.0
    %1832 = vmatpush2.msra.mxu0 0.0
    %1833 = vmatprep.subr.mxu0 0.0
    %1834 = vmatpush2.msra.mxu0 0.0
    %1835 = vmatprep.subr.mxu0 0.0
    %1836 = vmatpush2.msra.mxu0 0.0
    %1837 = vmatprep.subr.mxu0 0.0
    %1838 = vmatpush2.msra.mxu0 0.0
    %1839 = vmatprep.subr.mxu0 0.0
    %1840 = vmatpush2.msra.mxu0 0.0
    %1841 = vmatprep.subr.mxu0 0.0
    %1842 = vmatpush2.msra.mxu0 0.0
    %1843 = vmatprep.subr.mxu0 0.0
    %1844 = vmatpush2.msra.mxu0 0.0
    %1845 = vmatprep.subr.mxu0 0.0
    %1846 = vmatpush2.msra.mxu0 0.0
    %1847 = vmatprep.subr.mxu0 0.0
    %1848 = vmatpush2.msra.mxu0 0.0
    %1849 = vmatprep.subr.mxu0 0.0
    %1850 = vmatpush2.msra.mxu0 0.0
    %1851 = vmatprep.subr.mxu0 0.0
    %1852 = vmatpush2.msra.mxu0 0.0
    %1853 = vmatprep.subr.mxu0 0.0
    %1854 = vmatpush2.msra.mxu0 0.0
    %1855 = vmatprep.subr.mxu0 0.0
    %1856 = vmatpush2.msra.mxu0 0.0
    %1857 = vmatprep.mubr.f32.mxu0 0.0
    %1858 = vmatmul.mubr.f32.gmra.mxu0 %v1791
    %v1859 = vpop.f32.mrf.mxu0
    %v1860 = vadd.f32 0.0, %v1859
    %v1861 = vpop.f32.mrf.mxu0
    %1862 = vdwg.mxu0
    %v1863 = vadd.f32 %v1786, %v1860
    %v1864 = vxor.u32 %v1863, 2147483648
    %v1865 = vmul.f32 %v1864, 1.442695
    %v1866 = vpow.pop %v1865
    %v1867 = vadd.f32 %v1866, 1.0
    %v1868 = vrcp.pop %v1867
    %v1869 = vmul.f32 1.0, %v1868
    %v1870 = vtanh.pop %v1863
    %v1871 = vmul.f32 %v1869, %v1774
    %1873 = vrot.lane.b32.xlu0 %v1870, 64
    %v1874 = vpop.permute.xlu0 %1873
    %v1876 = vmul.f32 %v1869, %v1874
    %1878 = vrot.lane.b32.xlu0 %v1876, 32
    %v1879 = vpop.permute.xlu0 %1878
    %v1881 = vadd.f32 %v1871, %v1879
    %v1882 = vtanh.pop %v1881
    %1884 = vrot.lane.b32.xlu0 %v1882, 64
    %v1885 = vpop.permute.xlu0 %1884
    %v1887 = vmul.f32 %v1869, %v1885
    %1889 = vrot.lane.b32.xlu0 %v1887, 32
    %v1890 = vpop.permute.xlu0 %1889
    %1892 = vst.msk [vmem:[%s871] sm:$0xff] %vm224, %v1890
    %v1893 = vld [vmem:[%s873] sm:$0xff]
    %v1894 = vld [vmem:[#allocation4] sm:$0xff]
    %v1895 = vld [vmem:[#allocation4 + $0x8] sm:$0xff]
    %v1896 = vld [vmem:[#allocation4 + $0x10] sm:$0xff]
    %v1897 = vld [vmem:[#allocation4 + $0x18] sm:$0xff]
    %v1898 = vsel %vm224, %v1890, 0
    %1900 = vmatprep.subr.mxu0 0.0
    %1901 = vmatpush1.msra.mxu0 0.0
    %1902 = vmatprep.subr.mxu0 0.0
    %1903 = vmatpush1.msra.mxu0 0.0
    %1904 = vmatprep.subr.mxu0 0.0
    %1905 = vmatpush1.msra.mxu0 0.0
    %1906 = vmatprep.subr.mxu0 0.0
    %1907 = vmatpush1.msra.mxu0 0.0
    %1908 = vmatprep.subr.mxu0 0.0
    %1909 = vmatpush1.msra.mxu0 0.0
    %1910 = vmatprep.subr.mxu0 0.0
    %1911 = vmatpush1.msra.mxu0 0.0
    %1912 = vmatprep.subr.mxu0 0.0
    %1913 = vmatpush1.msra.mxu0 0.0
    %1914 = vmatprep.subr.mxu0 0.0
    %1915 = vmatpush1.msra.mxu0 0.0
    %1916 = vmatprep.subr.mxu0 0.0
    %1917 = vmatpush1.msra.mxu0 0.0
    %1918 = vmatprep.subr.mxu0 0.0
    %1919 = vmatpush1.msra.mxu0 0.0
    %1920 = vmatprep.subr.mxu0 0.0
    %1921 = vmatpush1.msra.mxu0 0.0
    %1922 = vmatprep.subr.mxu0 0.0
    %1923 = vmatpush1.msra.mxu0 0.0
    %1924 = vmatprep.subr.mxu0 0.0
    %1925 = vmatpush1.msra.mxu0 %v1897
    %1926 = vmatprep.subr.mxu0 0.0
    %1927 = vmatpush1.msra.mxu0 %v1896
    %1928 = vmatprep.subr.mxu0 0.0
    %1929 = vmatpush1.msra.mxu0 %v1895
    %1930 = vmatprep.subr.mxu0 0.0
    %1931 = vmatpush1.msra.mxu0 %v1894
    %1932 = vmatprep.subr.mxu0 0.0
    %1933 = vmatpush2.msra.mxu0 0.0
    %1934 = vmatprep.subr.mxu0 0.0
    %1935 = vmatpush2.msra.mxu0 0.0
    %1936 = vmatprep.subr.mxu0 0.0
    %1937 = vmatpush2.msra.mxu0 0.0
    %1938 = vmatprep.subr.mxu0 0.0
    %1939 = vmatpush2.msra.mxu0 0.0
    %1940 = vmatprep.subr.mxu0 0.0
    %1941 = vmatpush2.msra.mxu0 0.0
    %1942 = vmatprep.subr.mxu0 0.0
    %1943 = vmatpush2.msra.mxu0 0.0
    %1944 = vmatprep.subr.mxu0 0.0
    %1945 = vmatpush2.msra.mxu0 0.0
    %1946 = vmatprep.subr.mxu0 0.0
    %1947 = vmatpush2.msra.mxu0 0.0
    %1948 = vmatprep.subr.mxu0 0.0
    %1949 = vmatpush2.msra.mxu0 0.0
    %1950 = vmatprep.subr.mxu0 0.0
    %1951 = vmatpush2.msra.mxu0 0.0
    %1952 = vmatprep.subr.mxu0 0.0
    %1953 = vmatpush2.msra.mxu0 0.0
    %1954 = vmatprep.subr.mxu0 0.0
    %1955 = vmatpush2.msra.mxu0 0.0
    %1956 = vmatprep.subr.mxu0 0.0
    %1957 = vmatpush2.msra.mxu0 0.0
    %1958 = vmatprep.subr.mxu0 0.0
    %1959 = vmatpush2.msra.mxu0 0.0
    %1960 = vmatprep.subr.mxu0 0.0
    %1961 = vmatpush2.msra.mxu0 0.0
    %1962 = vmatprep.subr.mxu0 0.0
    %1963 = vmatpush2.msra.mxu0 0.0
    %1964 = vmatprep.mubr.f32.mxu0 0.0
    %1965 = vmatmul.mubr.f32.gmra.mxu0 %v1898
    %v1966 = vpop.f32.mrf.mxu0
    %v1967 = vadd.f32 0.0, %v1966
    %v1968 = vpop.f32.mrf.mxu0
    %1969 = vdwg.mxu0
    %v1970 = vadd.f32 %v1893, %v1967
    %v1971 = vxor.u32 %v1970, 2147483648
    %v1972 = vmul.f32 %v1971, 1.442695
    %v1973 = vpow.pop %v1972
    %v1974 = vadd.f32 %v1973, 1.0
    %v1975 = vrcp.pop %v1974
    %v1976 = vmul.f32 1.0, %v1975
    %v1977 = vtanh.pop %v1970
    %v1978 = vmul.f32 %v1976, %v1881
    %1980 = vrot.lane.b32.xlu0 %v1977, 64
    %v1981 = vpop.permute.xlu0 %1980
    %v1983 = vmul.f32 %v1976, %v1981
    %1985 = vrot.lane.b32.xlu0 %v1983, 32
    %v1986 = vpop.permute.xlu0 %1985
    %v1988 = vadd.f32 %v1978, %v1986
    %v1989 = vtanh.pop %v1988
    %1991 = vrot.lane.b32.xlu0 %v1989, 64
    %v1992 = vpop.permute.xlu0 %1991
    %v1994 = vmul.f32 %v1976, %v1992
    %1996 = vrot.lane.b32.xlu0 %v1994, 32
    %v1997 = vpop.permute.xlu0 %1996
    %1999 = vst.msk [vmem:[%s980] sm:$0xff] %vm224, %v1997
    %v2000 = vld [vmem:[%s982] sm:$0xff]
    %v2001 = vld [vmem:[#allocation4] sm:$0xff]
    %v2002 = vld [vmem:[#allocation4 + $0x8] sm:$0xff]
    %v2003 = vld [vmem:[#allocation4 + $0x10] sm:$0xff]
    %v2004 = vld [vmem:[#allocation4 + $0x18] sm:$0xff]
    %v2005 = vsel %vm224, %v1997, 0
    %2007 = vmatprep.subr.mxu0 0.0
    %2008 = vmatpush1.msra.mxu0 0.0
    %2009 = vmatprep.subr.mxu0 0.0
    %2010 = vmatpush1.msra.mxu0 0.0
    %2011 = vmatprep.subr.mxu0 0.0
    %2012 = vmatpush1.msra.mxu0 0.0
    %2013 = vmatprep.subr.mxu0 0.0
    %2014 = vmatpush1.msra.mxu0 0.0
    %2015 = vmatprep.subr.mxu0 0.0
    %2016 = vmatpush1.msra.mxu0 0.0
    %2017 = vmatprep.subr.mxu0 0.0
    %2018 = vmatpush1.msra.mxu0 0.0
    %2019 = vmatprep.subr.mxu0 0.0
    %2020 = vmatpush1.msra.mxu0 0.0
    %2021 = vmatprep.subr.mxu0 0.0
    %2022 = vmatpush1.msra.mxu0 0.0
    %2023 = vmatprep.subr.mxu0 0.0
    %2024 = vmatpush1.msra.mxu0 0.0
    %2025 = vmatprep.subr.mxu0 0.0
    %2026 = vmatpush1.msra.mxu0 0.0
    %2027 = vmatprep.subr.mxu0 0.0
    %2028 = vmatpush1.msra.mxu0 0.0
    %2029 = vmatprep.subr.mxu0 0.0
    %2030 = vmatpush1.msra.mxu0 0.0
    %2031 = vmatprep.subr.mxu0 0.0
    %2032 = vmatpush1.msra.mxu0 %v2004
    %2033 = vmatprep.subr.mxu0 0.0
    %2034 = vmatpush1.msra.mxu0 %v2003
    %2035 = vmatprep.subr.mxu0 0.0
    %2036 = vmatpush1.msra.mxu0 %v2002
    %2037 = vmatprep.subr.mxu0 0.0
    %2038 = vmatpush1.msra.mxu0 %v2001
    %2039 = vmatprep.subr.mxu0 0.0
    %2040 = vmatpush2.msra.mxu0 0.0
    %2041 = vmatprep.subr.mxu0 0.0
    %2042 = vmatpush2.msra.mxu0 0.0
    %2043 = vmatprep.subr.mxu0 0.0
    %2044 = vmatpush2.msra.mxu0 0.0
    %2045 = vmatprep.subr.mxu0 0.0
    %2046 = vmatpush2.msra.mxu0 0.0
    %2047 = vmatprep.subr.mxu0 0.0
    %2048 = vmatpush2.msra.mxu0 0.0
    %2049 = vmatprep.subr.mxu0 0.0
    %2050 = vmatpush2.msra.mxu0 0.0
    %2051 = vmatprep.subr.mxu0 0.0
    %2052 = vmatpush2.msra.mxu0 0.0
    %2053 = vmatprep.subr.mxu0 0.0
    %2054 = vmatpush2.msra.mxu0 0.0
    %2055 = vmatprep.subr.mxu0 0.0
    %2056 = vmatpush2.msra.mxu0 0.0
    %2057 = vmatprep.subr.mxu0 0.0
    %2058 = vmatpush2.msra.mxu0 0.0
    %2059 = vmatprep.subr.mxu0 0.0
    %2060 = vmatpush2.msra.mxu0 0.0
    %2061 = vmatprep.subr.mxu0 0.0
    %2062 = vmatpush2.msra.mxu0 0.0
    %2063 = vmatprep.subr.mxu0 0.0
    %2064 = vmatpush2.msra.mxu0 0.0
    %2065 = vmatprep.subr.mxu0 0.0
    %2066 = vmatpush2.msra.mxu0 0.0
    %2067 = vmatprep.subr.mxu0 0.0
    %2068 = vmatpush2.msra.mxu0 0.0
    %2069 = vmatprep.subr.mxu0 0.0
    %2070 = vmatpush2.msra.mxu0 0.0
    %2071 = vmatprep.mubr.f32.mxu0 0.0
    %2072 = vmatmul.mubr.f32.gmra.mxu0 %v2005
    %v2073 = vpop.f32.mrf.mxu0
    %v2074 = vadd.f32 0.0, %v2073
    %v2075 = vpop.f32.mrf.mxu0
    %2076 = vdwg.mxu0
    %v2077 = vadd.f32 %v2000, %v2074
    %v2078 = vxor.u32 %v2077, 2147483648
    %v2079 = vmul.f32 %v2078, 1.442695
    %v2080 = vpow.pop %v2079
    %v2081 = vadd.f32 %v2080, 1.0
    %v2082 = vrcp.pop %v2081
    %v2083 = vmul.f32 1.0, %v2082
    %v2084 = vtanh.pop %v2077
    %v2085 = vmul.f32 %v2083, %v1988
    %2087 = vrot.lane.b32.xlu0 %v2084, 64
    %v2088 = vpop.permute.xlu0 %2087
    %v2090 = vmul.f32 %v2083, %v2088
    %2092 = vrot.lane.b32.xlu0 %v2090, 32
    %v2093 = vpop.permute.xlu0 %2092
    %v2095 = vadd.f32 %v2085, %v2093
    %v2096 = vtanh.pop %v2095
    %2098 = vrot.lane.b32.xlu0 %v2096, 64
    %v2099 = vpop.permute.xlu0 %2098
    %v2101 = vmul.f32 %v2083, %v2099
    %2103 = vrot.lane.b32.xlu0 %v2101, 32
    %v2104 = vpop.permute.xlu0 %2103
    %2106 = vst.msk [vmem:[%s1089] sm:$0xff] %vm224, %v2104
    %s2107 = scalar_lea.vmem [#allocation10], 8
    %2108 = vst.msk [vmem:[%s2107] sm:$0xff] %vm224, %v2104
    %2110 = vrot.lane.b32.xlu0 %v2095, 96
    %v2111 = vpop.permute.xlu0 %2110
    %s2113 = scalar_lea.vmem [#allocation12], 8
    %2114 = vst.msk [vmem:[%s2113] sm:$0xff] %vm224, %v2111
    %v2115 = vld [vmem:[#allocation3] sm:$0xff]
    %v2116 = vld [vmem:[#allocation3 + $0x8] sm:$0xff]
    %v2117 = vld [vmem:[#allocation3 + $0x10] sm:$0xff]
    %v2118 = vld [vmem:[#allocation3 + $0x18] sm:$0xff]
    %v2119 = vld [vmem:[#allocation3 + $0x20] sm:$0xff]
    %v2120 = vld [vmem:[#allocation3 + $0x28] sm:$0xff]
    %v2121 = vld [vmem:[#allocation3 + $0x30] sm:$0xff]
    %v2122 = vld [vmem:[#allocation3 + $0x38] sm:$0xff]
    %v2123 = vld [vmem:[#allocation7] sm:$0xff]
    %v2124 = vld [vmem:[#allocation7 + $0x8] sm:$0xff]
    %v2125 = vld [vmem:[#allocation7 + $0x10] sm:$0xff]
    %v2126 = vld [vmem:[#allocation7 + $0x18] sm:$0xff]
    %v2127 = vld [vmem:[%s8] sm:$0x1]
    %v2129 = vlaneseq
    %v2130 = vshrl.u32 %v2129, 7
    %v2131 = vsub.s32 0, %v2130
    %v2132 = vrot.slane %v2127, %v2131
    %v2135 = vsel %vm224, %v2115, 0
    %v2138 = vsel %vm224, %v2116, 0
    %v2141 = vsel %vm224, %v2117, 0
    %v2144 = vsel %vm224, %v2118, 0
    %v2147 = vsel %vm224, %v2119, 0
    %v2150 = vsel %vm224, %v2120, 0
    %v2153 = vsel %vm224, %v2121, 0
    %v2156 = vsel %vm224, %v2122, 0
    %2158 = vmatprep.subr.mxu0 0.0
    %2159 = vmatpush1.msra.mxu0 0.0
    %2160 = vmatprep.subr.mxu0 0.0
    %2161 = vmatpush1.msra.mxu0 0.0
    %2162 = vmatprep.subr.mxu0 0.0
    %2163 = vmatpush1.msra.mxu0 0.0
    %2164 = vmatprep.subr.mxu0 0.0
    %2165 = vmatpush1.msra.mxu0 0.0
    %2166 = vmatprep.subr.mxu0 0.0
    %2167 = vmatpush1.msra.mxu0 0.0
    %2168 = vmatprep.subr.mxu0 0.0
    %2169 = vmatpush1.msra.mxu0 0.0
    %2170 = vmatprep.subr.mxu0 0.0
    %2171 = vmatpush1.msra.mxu0 0.0
    %2172 = vmatprep.subr.mxu0 0.0
    %2173 = vmatpush1.msra.mxu0 0.0
    %2174 = vmatprep.subr.mxu0 0.0
    %2175 = vmatpush1.msra.mxu0 0.0
    %2176 = vmatprep.subr.mxu0 0.0
    %2177 = vmatpush1.msra.mxu0 0.0
    %2178 = vmatprep.subr.mxu0 0.0
    %2179 = vmatpush1.msra.mxu0 0.0
    %2180 = vmatprep.subr.mxu0 0.0
    %2181 = vmatpush1.msra.mxu0 0.0
    %2182 = vmatprep.subr.mxu0 0.0
    %2183 = vmatpush1.msra.mxu0 %v2126
    %2184 = vmatprep.subr.mxu0 0.0
    %2185 = vmatpush1.msra.mxu0 %v2125
    %2186 = vmatprep.subr.mxu0 0.0
    %2187 = vmatpush1.msra.mxu0 %v2124
    %2188 = vmatprep.subr.mxu0 0.0
    %2189 = vmatpush1.msra.mxu0 %v2123
    %2190 = vmatprep.subr.mxu0 0.0
    %2191 = vmatpush2.msra.mxu0 0.0
    %2192 = vmatprep.subr.mxu0 0.0
    %2193 = vmatpush2.msra.mxu0 0.0
    %2194 = vmatprep.subr.mxu0 0.0
    %2195 = vmatpush2.msra.mxu0 0.0
    %2196 = vmatprep.subr.mxu0 0.0
    %2197 = vmatpush2.msra.mxu0 0.0
    %2198 = vmatprep.subr.mxu0 0.0
    %2199 = vmatpush2.msra.mxu0 0.0
    %2200 = vmatprep.subr.mxu0 0.0
    %2201 = vmatpush2.msra.mxu0 0.0
    %2202 = vmatprep.subr.mxu0 0.0
    %2203 = vmatpush2.msra.mxu0 0.0
    %2204 = vmatprep.subr.mxu0 0.0
    %2205 = vmatpush2.msra.mxu0 0.0
    %2206 = vmatprep.subr.mxu0 0.0
    %2207 = vmatpush2.msra.mxu0 0.0
    %2208 = vmatprep.subr.mxu0 0.0
    %2209 = vmatpush2.msra.mxu0 0.0
    %2210 = vmatprep.subr.mxu0 0.0
    %2211 = vmatpush2.msra.mxu0 0.0
    %2212 = vmatprep.subr.mxu0 0.0
    %2213 = vmatpush2.msra.mxu0 0.0
    %2214 = vmatprep.subr.mxu0 0.0
    %2215 = vmatpush2.msra.mxu0 0.0
    %2216 = vmatprep.subr.mxu0 0.0
    %2217 = vmatpush2.msra.mxu0 0.0
    %2218 = vmatprep.subr.mxu0 0.0
    %2219 = vmatpush2.msra.mxu0 0.0
    %2220 = vmatprep.subr.mxu0 0.0
    %2221 = vmatpush2.msra.mxu0 0.0
    %2222 = vmatprep.mubr.f32.mxu0 0.0
    %2223 = vmatmul.mubr.f32.gmra.mxu0 %v2135
    %v2224 = vpop.f32.mrf.mxu0
    %v2225 = vadd.f32 %v2132, %v2224
    %v2226 = vpop.f32.mrf.mxu0
    %2227 = vmatprep.mubr.f32.mxu0 0.0
    %2228 = vmatmul.mubr.f32.gmra.mxu0 %v2138
    %v2229 = vpop.f32.mrf.mxu0
    %v2230 = vadd.f32 %v2132, %v2229
    %v2231 = vpop.f32.mrf.mxu0
    %2232 = vmatprep.mubr.f32.mxu0 0.0
    %2233 = vmatmul.mubr.f32.gmra.mxu0 %v2141
    %v2234 = vpop.f32.mrf.mxu0
    %v2235 = vadd.f32 %v2132, %v2234
    %v2236 = vpop.f32.mrf.mxu0
    %2237 = vmatprep.mubr.f32.mxu0 0.0
    %2238 = vmatmul.mubr.f32.gmra.mxu0 %v2144
    %v2239 = vpop.f32.mrf.mxu0
    %v2240 = vadd.f32 %v2132, %v2239
    %v2241 = vpop.f32.mrf.mxu0
    %2242 = vmatprep.mubr.f32.mxu0 0.0
    %2243 = vmatmul.mubr.f32.gmra.mxu0 %v2147
    %v2244 = vpop.f32.mrf.mxu0
    %v2245 = vadd.f32 %v2132, %v2244
    %v2246 = vpop.f32.mrf.mxu0
    %2247 = vmatprep.mubr.f32.mxu0 0.0
    %2248 = vmatmul.mubr.f32.gmra.mxu0 %v2150
    %v2249 = vpop.f32.mrf.mxu0
    %v2250 = vadd.f32 %v2132, %v2249
    %v2251 = vpop.f32.mrf.mxu0
    %2252 = vmatprep.mubr.f32.mxu0 0.0
    %2253 = vmatmul.mubr.f32.gmra.mxu0 %v2153
    %v2254 = vpop.f32.mrf.mxu0
    %v2255 = vadd.f32 %v2132, %v2254
    %v2256 = vpop.f32.mrf.mxu0
    %2257 = vmatprep.mubr.f32.mxu0 0.0
    %2258 = vmatmul.mubr.f32.gmra.mxu0 %v2156
    %v2259 = vpop.f32.mrf.mxu0
    %v2260 = vadd.f32 %v2132, %v2259
    %v2261 = vpop.f32.mrf.mxu0
    %2262 = vdwg.mxu0
    %v2263 = vxor.u32 %v2225, 2147483648
    %v2264 = vxor.u32 %v2230, 2147483648
    %v2265 = vxor.u32 %v2235, 2147483648
    %v2266 = vxor.u32 %v2240, 2147483648
    %v2267 = vxor.u32 %v2245, 2147483648
    %v2268 = vxor.u32 %v2250, 2147483648
    %v2269 = vxor.u32 %v2255, 2147483648
    %v2270 = vxor.u32 %v2260, 2147483648
    %v2271 = vmul.f32 %v2263, 1.442695
    %v2272 = vpow.pop %v2271
    %v2273 = vmul.f32 %v2264, 1.442695
    %v2274 = vpow.pop %v2273
    %v2275 = vmul.f32 %v2265, 1.442695
    %v2276 = vpow.pop %v2275
    %v2277 = vmul.f32 %v2266, 1.442695
    %v2278 = vpow.pop %v2277
    %v2279 = vmul.f32 %v2267, 1.442695
    %v2280 = vpow.pop %v2279
    %v2281 = vmul.f32 %v2268, 1.442695
    %v2282 = vpow.pop %v2281
    %v2283 = vmul.f32 %v2269, 1.442695
    %v2284 = vpow.pop %v2283
    %v2285 = vmul.f32 %v2270, 1.442695
    %v2286 = vpow.pop %v2285
    %v2287 = vadd.f32 %v2272, 1.0
    %v2288 = vadd.f32 %v2274, 1.0
    %v2289 = vadd.f32 %v2276, 1.0
    %v2290 = vadd.f32 %v2278, 1.0
    %v2291 = vadd.f32 %v2280, 1.0
    %v2292 = vadd.f32 %v2282, 1.0
    %v2293 = vadd.f32 %v2284, 1.0
    %v2294 = vadd.f32 %v2286, 1.0
    %v2295 = vrcp.pop %v2287
    %v2296 = vmul.f32 1.0, %v2295
    %v2297 = vrcp.pop %v2288
    %v2298 = vmul.f32 1.0, %v2297
    %v2299 = vrcp.pop %v2289
    %v2300 = vmul.f32 1.0, %v2299
    %v2301 = vrcp.pop %v2290
    %v2302 = vmul.f32 1.0, %v2301
    %v2303 = vrcp.pop %v2291
    %v2304 = vmul.f32 1.0, %v2303
    %v2305 = vrcp.pop %v2292
    %v2306 = vmul.f32 1.0, %v2305
    %v2307 = vrcp.pop %v2293
    %v2308 = vmul.f32 1.0, %v2307
    %v2309 = vrcp.pop %v2294
    %v2310 = vmul.f32 1.0, %v2309
    %2311 = vst [vmem:[#allocation9] sm:$0xff] %v2296
    %2312 = vst [vmem:[#allocation9 + $0x8] sm:$0xff] %v2298
    %2313 = vst [vmem:[#allocation9 + $0x10] sm:$0xff] %v2300
    %2314 = vst [vmem:[#allocation9 + $0x18] sm:$0xff] %v2302
    %2315 = vst [vmem:[#allocation9 + $0x20] sm:$0xff] %v2304
    %2316 = vst [vmem:[#allocation9 + $0x28] sm:$0xff] %v2306
    %2317 = vst [vmem:[#allocation9 + $0x30] sm:$0xff] %v2308
    %2318 = vst [vmem:[#allocation9 + $0x38] sm:$0xff] %v2310
    // Predicated region
    $region46: #{tpu_custom_call.1} parent=1 // pred_check
      _
    $region47: #{tpu_custom_call.1} parent=1 // pred_check_branch
      %2320 = sbr.rel (0) target = $region49
    $region48: #{tpu_custom_call.1} parent=1 // pred_region
      %s2322 = ssub.s32 1024, 1024
      %2323 = vsyncadd [#allocation6], %s2322
      %s2324 = sshll.u32 [#allocation9], 4
      %s2325 = int_to_ptr.vmem [resolvable:$true] %s2324
      %2330 = dma.vmem_to_hbm [thread:$0]  %s2325, 1024, %s9, [#allocation6], 128, 128, 8
    $region49: #{tpu_custom_call.1} parent=1 // pred_fallthru
      _
    // Predicated region
    $region50: #{tpu_custom_call.1} parent=1 // pred_check
      _
    $region51: #{tpu_custom_call.1} parent=1 // pred_check_branch
      %2332 = sbr.rel (0) target = $region53
    $region52: #{tpu_custom_call.1} parent=1 // pred_region
      %s2334 = ssub.s32 256, 256
      %2335 = vsyncadd [#allocation11], %s2334
      %s2336 = sshll.u32 [#allocation10], 4
      %s2337 = int_to_ptr.vmem [resolvable:$true] %s2336
      %2342 = dma.vmem_to_hbm [thread:$0]  %s2337, 256, %s10, [#allocation11], 128, 128, 8
    $region53: #{tpu_custom_call.1} parent=1 // pred_fallthru
      _
    // Predicated region
    $region54: #{tpu_custom_call.1} parent=1 // pred_check
      _
    $region55: #{tpu_custom_call.1} parent=1 // pred_check_branch
      %2344 = sbr.rel (0) target = $region57
    $region56: #{tpu_custom_call.1} parent=1 // pred_region
      %s2346 = ssub.s32 256, 256
      %2347 = vsyncadd [#allocation11], %s2346
      %s2348 = sshll.u32 [#allocation12], 4
      %s2349 = int_to_ptr.vmem [resolvable:$true] %s2348
      %2354 = dma.vmem_to_hbm [thread:$0]  %s2349, 256, %s11, [#allocation11], 128, 128, 8
    $region57: #{tpu_custom_call.1} parent=1 // pred_fallthru
      _
    // Predicated region
    $region58: #{tpu_custom_call.1} parent=1 // pred_check
      _
    $region59: #{tpu_custom_call.1} parent=1 // pred_check_branch
      %2356 = sbr.rel (0) target = $region61
    $region60: #{tpu_custom_call.1} parent=1 // pred_region
      %2357 = dma.done [#allocation6], 1024
    $region61: #{tpu_custom_call.1} parent=1 // pred_fallthru
      _
    // Predicated region
    $region62: #{tpu_custom_call.1} parent=1 // pred_check
      _
    $region63: #{tpu_custom_call.1} parent=1 // pred_check_branch
      %2359 = sbr.rel (0) target = $region65
    $region64: #{tpu_custom_call.1} parent=1 // pred_region
      %2360 = dma.done [#allocation11], 256
    $region65: #{tpu_custom_call.1} parent=1 // pred_fallthru
      _
    // Predicated region
    $region66: #{tpu_custom_call.1} parent=1 // pred_check
      _
    $region67: #{tpu_custom_call.1} parent=1 // pred_check_branch
      %2362 = sbr.rel (0) target = $region69
    $region68: #{tpu_custom_call.1} parent=1 // pred_region
      %2363 = dma.done [#allocation11], 256
    $region69: #{tpu_custom_call.1} parent=1 // pred_fallthru
      _
    %2364 = vsyncpa [#allocation5], 1
    %2365 = vsyncpa [#allocation8], 1
    %2366 = vsyncpa [#allocation6], 1
    %2367 = vsyncpa [#allocation11], 1

</llo_original>
